<compile_context>
chip_gen: v6e
topology: v6e:2x2x1
jax: 0.10.0
libtpu: 0.0.40
codegen_flags: <defaults>
</compile_context>

<pallas_src>
import functools

import jax
import jax.numpy as jnp
from jax.experimental import pallas as pl
from jax.experimental.pallas import tpu as pltpu

LN_EPS = 1e-12   # BERT layernorm eps
LANE = 128       # lane-dense logits slab width


def _layer_norm(x, gamma, beta):
    mu = jnp.mean(x, axis=-1, keepdims=True)
    var = jnp.mean((x - mu) ** 2, axis=-1, keepdims=True)
    return (x - mu) * jax.lax.rsqrt(var + LN_EPS) * gamma + beta


# ----------------------------- fused kernel ----------------------------------

def fused_classifier_kernel(emb_ref, neg_ref, eg_ref, eb_ref,
                            wqkvh_ref, bqkvh_ref,
                            woh_ref, bo_ref, ln1g_ref, ln1b_ref,
                            w1_ref, b1_ref, w2_ref, b2_ref, ln2g_ref, ln2b_ref,
                            wp_ref, bp_ref, wc_ref, bc_ref,
                            o_ref, *, num_layers, num_heads):
    """Whole classifier forward for one batch element (grid axis = batch)."""
    S, H = emb_ref.shape[1], emb_ref.shape[2]
    nh3 = 3 * num_heads

    # Embedding LayerNorm.
    x = _layer_norm(emb_ref[0], eg_ref[...], eb_ref[...])   # [S, H] f32
    neg = neg_ref[0]                                        # [1, S] additive key mask

    for l in range(num_layers):                             # static unroll over layers
        # --- multi-head self-attention ---
        # Fused QKV: one head-batched matmul over [3*heads, H, hd] weights.
        xb = jnp.broadcast_to(x.astype(jnp.bfloat16)[None], (nh3, S, H))
        qkv = jnp.einsum('nsk,nkd->nsd', xb, wqkvh_ref[l],
                         preferred_element_type=jnp.float32) + bqkvh_ref[l]
        qh = qkv[:num_heads]                  # leading-axis slices: no lane movement
        kh = qkv[num_heads:2 * num_heads]
        vh = qkv[2 * num_heads:]

        # scores: 1/sqrt(hd) already folded into q weights/bias at init
        s = jnp.einsum('hqd,hkd->hqk', qh.astype(jnp.bfloat16),
                       kh.astype(jnp.bfloat16),
                       preferred_element_type=jnp.float32)
        s = s + neg[None]                                   # mask padded keys
        s = s - jnp.max(s, axis=-1, keepdims=True)          # stable softmax (f32)
        p = jnp.exp(s)
        p = p * pl.reciprocal(jnp.sum(p, axis=-1, keepdims=True), approx=True)

        ctx = jnp.einsum('hqk,hkd->hqd', p.astype(jnp.bfloat16),
                         vh.astype(jnp.bfloat16),
                         preferred_element_type=jnp.float32)

        # output projection: per-head matmul then sum over heads (no concat)
        attn = jnp.sum(
            jnp.einsum('hsd,hdo->hso', ctx.astype(jnp.bfloat16), woh_ref[l],
                       preferred_element_type=jnp.float32),
            axis=0) + bo_ref[l]
        x = _layer_norm(x + attn, ln1g_ref[l], ln1b_ref[l])

        # --- feed-forward ---
        h1 = jnp.dot(x.astype(jnp.bfloat16), w1_ref[l],
                     preferred_element_type=jnp.float32) + b1_ref[l]
        # TODO(synk): HF BERT default is exact erf GELU; tanh approximation used here.
        h1 = jax.nn.gelu(h1, approximate=True)
        h2 = jnp.dot(h1.astype(jnp.bfloat16), w2_ref[l],
                     preferred_element_type=jnp.float32) + b2_ref[l]
        x = _layer_norm(x + h2, ln2g_ref[l], ln2b_ref[l])

    # --- pooler ([CLS] -> dense -> tanh) + classification head ---
    cls = x[0:1, :]                                         # [1, H]
    pooled = jnp.tanh(jnp.dot(cls.astype(jnp.bfloat16), wp_ref[...],
                              preferred_element_type=jnp.float32) + bp_ref[...])
    # lane-dense (128-wide) logits slab; real labels occupy the first columns
    o_ref[0] = (jnp.dot(pooled.astype(jnp.bfloat16), wc_ref[...],
                        preferred_element_type=jnp.float32) + bc_ref[...])


# ----------------------------- wrapper ----------------------------------------

def auto_classifier_forward(params, input_ids, attention_mask):
    """Equivalent of AutoClassifier.forward on already-tokenized inputs: returns logits."""
    B, S = input_ids.shape
    H = params["wp"].shape[0]

    # Embedding gather (glue; table lookup, not the hot path).
    emb = (params["word_emb"][input_ids]
           + params["pos_emb"][:S][None]
           + params["type_emb"][0][None, None]).astype(jnp.float32)
    # Additive key mask, computed once for all layers.
    neg = ((1.0 - attention_mask.astype(jnp.float32)) * (-1e9)).reshape(B, 1, S)

    def rep(arr):  # replicated (layer/weight) input: constant block index
        nd = arr.ndim
        return pl.BlockSpec(arr.shape, lambda *_: (0,) * nd)

    w = params
    weight_args = (w["emb_ln_g"], w["emb_ln_b"],
                   w["wqkvh"], w["bqkvh"],
                   w["woh"], w["bo"], w["ln1_g"], w["ln1_b"],
                   w["w1"], w["b1"], w["w2"], w["b2"], w["ln2_g"], w["ln2_b"],
                   w["wp"], w["bp"], w["wc_pad"], w["bc_pad"])

    in_specs = ([pl.BlockSpec((1, S, H), lambda b: (b, 0, 0)),   # embeddings
                 pl.BlockSpec((1, 1, S), lambda b: (b, 0, 0))]   # additive mask
                + [rep(a) for a in weight_args])

    logits_pad = pl.pallas_call(
        functools.partial(fused_classifier_kernel,
                          num_layers=params["num_layers"],
                          num_heads=params["num_heads"]),
        out_shape=jax.ShapeDtypeStruct((B, 1, LANE), jnp.float32),
        grid=(B,),
        in_specs=in_specs,
        out_specs=pl.BlockSpec((1, 1, LANE), lambda b: (b, 0, 0)),
        compiler_params=pltpu.CompilerParams(
            dimension_semantics=("parallel",)),        # batch axis -> both TCs on v7x
    )(emb, neg, *weight_args)

    return logits_pad[:, 0, :params["num_labels"]]


# --------------------------- pure-JAX reference --------------------------------

def auto_classifier_reference(params, input_ids, attention_mask):
    """Mirror of the kernel math in plain JAX (same bf16 matmul casts)."""
    B, S = input_ids.shape
    nh = params["num_heads"]
    emb = (params["word_emb"][input_ids] + params["pos_emb"][:S][None]
           + params["type_emb"][0][None, None]).astype(jnp.float32)
    neg = ((1.0 - attention_mask.astype(jnp.float32)) * (-1e9)).reshape(B, 1, 1, S)

    def ln(x, g, b):
        mu = jnp.mean(x, -1, keepdims=True)
        var = jnp.mean((x - mu) ** 2, -1, keepdims=True)
        return (x - mu) * jax.lax.rsqrt(var + LN_EPS) * g + b

    x = ln(emb, params["emb_ln_g"], params["emb_ln_b"])          # [B,S,H]
    for l in range(params["num_layers"]):
        xb = x.astype(jnp.bfloat16)
        qkv = jnp.einsum('bsk,nkd->bnsd', xb, params["wqkvh"][l],
                         preferred_element_type=jnp.float32) + params["bqkvh"][l][None]
        qh, kh, vh = qkv[:, :nh], qkv[:, nh:2 * nh], qkv[:, 2 * nh:]
        s = jnp.einsum('bhqd,bhkd->bhqk', qh.astype(jnp.bfloat16),
                       kh.astype(jnp.bfloat16),
                       preferred_element_type=jnp.float32) + neg
        s = s - jnp.max(s, -1, keepdims=True)
        p = jnp.exp(s)
        p = p / jnp.sum(p, -1, keepdims=True)
        ctx = jnp.einsum('bhqk,bhkd->bhqd', p.astype(jnp.bfloat16),
                         vh.astype(jnp.bfloat16),
                         preferred_element_type=jnp.float32)
        attn = jnp.einsum('bhsd,hdo->bso', ctx.astype(jnp.bfloat16), params["woh"][l],
                          preferred_element_type=jnp.float32) + params["bo"][l][None]
        x = ln(x + attn, params["ln1_g"][l], params["ln1_b"][l])
        h1 = jnp.einsum('bsk,kf->bsf', x.astype(jnp.bfloat16), params["w1"][l],
                        preferred_element_type=jnp.float32) + params["b1"][l][None]
        h1 = jax.nn.gelu(h1, approximate=True)
        h2 = jnp.einsum('bsf,fk->bsk', h1.astype(jnp.bfloat16), params["w2"][l],
                        preferred_element_type=jnp.float32) + params["b2"][l][None]
        x = ln(x + h2, params["ln2_g"][l], params["ln2_b"][l])

    cls = x[:, 0, :]
    pooled = jnp.tanh(jnp.dot(cls.astype(jnp.bfloat16), params["wp"],
                              preferred_element_type=jnp.float32) + params["bp"])
    logits = jnp.dot(pooled.astype(jnp.bfloat16), params["wc_pad"],
                     preferred_element_type=jnp.float32) + params["bc_pad"]
    return logits[:, :params["num_labels"]]


# ----------------------------- param init ------------------------------------

def init_params(key, *, vocab=100, max_pos=16, hidden=32, intermediate=64,
                num_layers=2, num_heads=2, num_labels=3):
    hd = hidden // num_heads
    scale = 1.0 / float(hd) ** 0.5
    keys = iter(jax.random.split(key, 64))
    std = 0.02

    def dense(shape):
        return (std * jax.random.normal(next(keys), shape)).astype(jnp.float32)

    def head_major(wmat):  # [H, H] -> [num_heads, H, hd]
        return wmat.reshape(hidden, num_heads, hd).transpose(1, 0, 2)

    # Per-layer weights (stored [in_features, out_features]); scale folded into q.
    wq = [dense((hidden, hidden)) * scale for _ in range(num_layers)]
    wk = [dense((hidden, hidden)) for _ in range(num_layers)]
    wv = [dense((hidden, hidden)) for _ in range(num_layers)]
    wo = [dense((hidden, hidden)) for _ in range(num_layers)]
    w1 = [dense((hidden, intermediate)) for _ in range(num_layers)]
    w2 = [dense((intermediate, hidden)) for _ in range(num_layers)]

    # Fused, head-major QKV slab: [L, 3*heads, H, hd] (q heads, k heads, v heads).
    wqkvh = jnp.stack([
        jnp.concatenate([head_major(wq[l]), head_major(wk[l]), head_major(wv[l])],
                        axis=0)
        for l in range(num_layers)])
    bq = [dense((num_heads, 1, hd)) * scale for _ in range(num_layers)]
    bk = [dense((num_heads, 1, hd)) for _ in range(num_layers)]
    bv = [dense((num_heads, 1, hd)) for _ in range(num_layers)]
    bqkvh = jnp.stack([jnp.concatenate([bq[l], bk[l], bv[l]], axis=0)
                       for l in range(num_layers)])

    wc = dense((hidden, num_labels))
    bc = dense((1, num_labels))
    wc_pad = jnp.zeros((hidden, LANE), jnp.float32).at[:, :num_labels].set(wc)
    bc_pad = jnp.zeros((1, LANE), jnp.float32).at[:, :num_labels].set(bc)

    params = {
        "num_heads": num_heads,
        "num_layers": num_layers,
        "num_labels": num_labels,
        # embeddings (gather done in wrapper)
        "word_emb": dense((vocab, hidden)),
        "pos_emb": dense((max_pos, hidden)),
        "type_emb": dense((2, hidden)),
        "emb_ln_g": jnp.ones((1, hidden), jnp.float32),
        "emb_ln_b": jnp.zeros((1, hidden), jnp.float32),
        # stacked, head-major, bf16 MXU weights
        "wqkvh": wqkvh.astype(jnp.bfloat16),
        "bqkvh": bqkvh.astype(jnp.float32),
        "woh": jnp.stack([wo[l].reshape(num_heads, hd, hidden)
                          for l in range(num_layers)]).astype(jnp.bfloat16),
        "bo": jnp.stack([dense((1, hidden)) for _ in range(num_layers)]),
        "ln1_g": jnp.ones((num_layers, 1, hidden), jnp.float32),
        "ln1_b": jnp.zeros((num_layers, 1, hidden), jnp.float32),
        "w1": jnp.stack(w1).astype(jnp.bfloat16),
        "b1": jnp.stack([dense((1, intermediate)) for _ in range(num_layers)]),
        "w2": jnp.stack(w2).astype(jnp.bfloat16),
        "b2": jnp.stack([dense((1, hidden)) for _ in range(num_layers)]),
        "ln2_g": jnp.ones((num_layers, 1, hidden), jnp.float32),
        "ln2_b": jnp.zeros((num_layers, 1, hidden), jnp.float32),
        # pooler + lane-padded classifier head
        "wp": dense((hidden, hidden)).astype(jnp.bfloat16),
        "bp": dense((1, hidden)),
        "wc_pad": wc_pad.astype(jnp.bfloat16),
        "bc_pad": bc_pad,
    }
    return params


# ------------------------------- main -----------------------------------------

if __name__ == "__main__":
    key = jax.random.PRNGKey(0)
    pkey, ikey = jax.random.split(key)

    B, S = 2, 8
    NUM_LABELS = 3
    params = init_params(pkey, vocab=100, max_pos=16, hidden=32, intermediate=64,
                         num_layers=2, num_heads=2, num_labels=NUM_LABELS)

    # Deterministic "tokenized" inputs: ids in [1, 99], second example padded.
    input_ids = jax.random.randint(ikey, (B, S), 1, 100, dtype=jnp.int32)
    attention_mask = jnp.ones((B, S), jnp.int32).at[1, S - 2:].set(0)  # pad last 2 tokens
    input_ids = input_ids * attention_mask                             # pad id = 0

    logits = jax.block_until_ready(
        auto_classifier_forward(params, input_ids, attention_mask))
    ref = jax.block_until_ready(
        auto_classifier_reference(params, input_ids, attention_mask))

    assert logits.shape == (B, NUM_LABELS), logits.shape
    assert bool(jnp.all(jnp.isfinite(logits)))
    assert bool(jnp.max(jnp.abs(logits - ref)) < 1e-2), (logits, ref)
    print("KERNEL_OK")
</pallas_src>

<mosaic_0001>
module attributes {stable_mosaic.version = 11 : i64} {
  func.func @fused_classifier_kernel(%arg0: i32, %arg1: memref<1x8x32xf32, #tpu.memory_space<vmem>>, %arg2: memref<1x1x8xf32, #tpu.memory_space<vmem>>, %arg3: memref<1x32xf32, #tpu.memory_space<vmem>>, %arg4: memref<1x32xf32, #tpu.memory_space<vmem>>, %arg5: memref<2x6x32x16xbf16, #tpu.memory_space<vmem>>, %arg6: memref<2x6x1x16xf32, #tpu.memory_space<vmem>>, %arg7: memref<2x2x16x32xbf16, #tpu.memory_space<vmem>>, %arg8: memref<2x1x32xf32, #tpu.memory_space<vmem>>, %arg9: memref<2x1x32xf32, #tpu.memory_space<vmem>>, %arg10: memref<2x1x32xf32, #tpu.memory_space<vmem>>, %arg11: memref<2x32x64xbf16, #tpu.memory_space<vmem>>, %arg12: memref<2x1x64xf32, #tpu.memory_space<vmem>>, %arg13: memref<2x64x32xbf16, #tpu.memory_space<vmem>>, %arg14: memref<2x1x32xf32, #tpu.memory_space<vmem>>, %arg15: memref<2x1x32xf32, #tpu.memory_space<vmem>>, %arg16: memref<2x1x32xf32, #tpu.memory_space<vmem>>, %arg17: memref<32x32xbf16, #tpu.memory_space<vmem>>, %arg18: memref<1x32xf32, #tpu.memory_space<vmem>>, %arg19: memref<32x128xbf16, #tpu.memory_space<vmem>>, %arg20: memref<1x128xf32, #tpu.memory_space<vmem>>, %arg21: memref<1x1x128xf32, #tpu.memory_space<vmem>>) attributes {dimension_semantics = [#tpu.dimension_semantics<parallel>], iteration_bounds = array<i64: 2>, scalar_prefetch = 0 : i64, scratch_operands = 0 : i64, tpu.core_type = #tpu.core_type<tc>, window_params = [{transform_indices = @transform_0, window_bounds = array<i64: 1, 8, 32>}, {transform_indices = @transform_1, window_bounds = array<i64: 1, 1, 8>}, {pipeline_mode = #tpu.pipeline_mode<synchronous>, transform_indices = @transform_2, window_bounds = array<i64: 1, 32>}, {pipeline_mode = #tpu.pipeline_mode<synchronous>, transform_indices = @transform_3, window_bounds = array<i64: 1, 32>}, {pipeline_mode = #tpu.pipeline_mode<synchronous>, transform_indices = @transform_4, window_bounds = array<i64: 2, 6, 32, 16>}, {pipeline_mode = #tpu.pipeline_mode<synchronous>, transform_indices = @transform_5, window_bounds = array<i64: 2, 6, 1, 16>}, {pipeline_mode = #tpu.pipeline_mode<synchronous>, transform_indices = @transform_6, window_bounds = array<i64: 2, 2, 16, 32>}, {pipeline_mode = #tpu.pipeline_mode<synchronous>, transform_indices = @transform_7, window_bounds = array<i64: 2, 1, 32>}, {pipeline_mode = #tpu.pipeline_mode<synchronous>, transform_indices = @transform_8, window_bounds = array<i64: 2, 1, 32>}, {pipeline_mode = #tpu.pipeline_mode<synchronous>, transform_indices = @transform_9, window_bounds = array<i64: 2, 1, 32>}, {pipeline_mode = #tpu.pipeline_mode<synchronous>, transform_indices = @transform_10, window_bounds = array<i64: 2, 32, 64>}, {pipeline_mode = #tpu.pipeline_mode<synchronous>, transform_indices = @transform_11, window_bounds = array<i64: 2, 1, 64>}, {pipeline_mode = #tpu.pipeline_mode<synchronous>, transform_indices = @transform_12, window_bounds = array<i64: 2, 64, 32>}, {pipeline_mode = #tpu.pipeline_mode<synchronous>, transform_indices = @transform_13, window_bounds = array<i64: 2, 1, 32>}, {pipeline_mode = #tpu.pipeline_mode<synchronous>, transform_indices = @transform_14, window_bounds = array<i64: 2, 1, 32>}, {pipeline_mode = #tpu.pipeline_mode<synchronous>, transform_indices = @transform_15, window_bounds = array<i64: 2, 1, 32>}, {pipeline_mode = #tpu.pipeline_mode<synchronous>, transform_indices = @transform_16, window_bounds = array<i64: 32, 32>}, {pipeline_mode = #tpu.pipeline_mode<synchronous>, transform_indices = @transform_17, window_bounds = array<i64: 1, 32>}, {pipeline_mode = #tpu.pipeline_mode<synchronous>, transform_indices = @transform_18, window_bounds = array<i64: 32, 128>}, {pipeline_mode = #tpu.pipeline_mode<synchronous>, transform_indices = @transform_19, window_bounds = array<i64: 1, 128>}, {transform_indices = @transform_20, window_bounds = array<i64: 1, 1, 128>}]} {
    %c0 = arith.constant 0 : index
    %c0_0 = arith.constant 0 : index
    %c0_1 = arith.constant 0 : index
    %0 = vector.load %arg1[%c0, %c0_0, %c0_1] : memref<1x8x32xf32, #tpu.memory_space<vmem>>, vector<1x8x32xf32>
    %1 = vector.shape_cast %0 : vector<1x8x32xf32> to vector<8x32xf32>
    %c0_2 = arith.constant 0 : index
    %c0_3 = arith.constant 0 : index
    %2 = vector.load %arg3[%c0_2, %c0_3] : memref<1x32xf32, #tpu.memory_space<vmem>>, vector<1x32xf32>
    %c0_4 = arith.constant 0 : index
    %c0_5 = arith.constant 0 : index
    %3 = vector.load %arg4[%c0_4, %c0_5] : memref<1x32xf32, #tpu.memory_space<vmem>>, vector<1x32xf32>
    %cst = arith.constant dense<0.000000e+00> : vector<8xf32>
    %4 = vector.multi_reduction <add>, %1, %cst [1] : vector<8x32xf32> to vector<8xf32>
    %5 = vector.shape_cast %4 : vector<8xf32> to vector<8x1xf32>
    %cst_6 = arith.constant 3.200000e+01 : f32
    %6 = vector.broadcast %cst_6 : f32 to vector<8x1xf32>
    %7 = arith.divf %5, %6 : vector<8x1xf32>
    %8 = vector.broadcast %7 : vector<8x1xf32> to vector<8x32xf32>
    %9 = arith.subf %1, %8 : vector<8x32xf32>
    %10 = arith.mulf %9, %9 : vector<8x32xf32>
    %cst_7 = arith.constant dense<0.000000e+00> : vector<8xf32>
    %11 = vector.multi_reduction <add>, %10, %cst_7 [1] : vector<8x32xf32> to vector<8xf32>
    %12 = vector.shape_cast %11 : vector<8xf32> to vector<8x1xf32>
    %cst_8 = arith.constant 3.200000e+01 : f32
    %13 = vector.broadcast %cst_8 : f32 to vector<8x1xf32>
    %14 = arith.divf %12, %13 : vector<8x1xf32>
    %15 = vector.broadcast %7 : vector<8x1xf32> to vector<8x32xf32>
    %16 = arith.subf %1, %15 : vector<8x32xf32>
    %cst_9 = arith.constant 9.99999996E-13 : f32
    %17 = vector.broadcast %cst_9 : f32 to vector<8x1xf32>
    %18 = arith.addf %14, %17 : vector<8x1xf32>
    %19 = math.rsqrt %18 : vector<8x1xf32>
    %20 = vector.broadcast %19 : vector<8x1xf32> to vector<8x32xf32>
    %21 = arith.mulf %16, %20 : vector<8x32xf32>
    %22 = vector.broadcast %2 : vector<1x32xf32> to vector<8x32xf32>
    %23 = arith.mulf %21, %22 : vector<8x32xf32>
    %24 = vector.broadcast %3 : vector<1x32xf32> to vector<8x32xf32>
    %25 = arith.addf %23, %24 : vector<8x32xf32>
    %c0_10 = arith.constant 0 : index
    %c0_11 = arith.constant 0 : index
    %c0_12 = arith.constant 0 : index
    %26 = vector.load %arg2[%c0_10, %c0_11, %c0_12] : memref<1x1x8xf32, #tpu.memory_space<vmem>>, vector<1x1x8xf32>
    %27 = vector.shape_cast %26 : vector<1x1x8xf32> to vector<1x8xf32>
    %28 = arith.truncf %25 : vector<8x32xf32> to vector<8x32xbf16>
    %29 = vector.shape_cast %28 : vector<8x32xbf16> to vector<1x8x32xbf16>
    %30 = vector.shape_cast %29 : vector<1x8x32xbf16> to vector<1x8x32xbf16>
    %31 = vector.broadcast %30 : vector<1x8x32xbf16> to vector<6x8x32xbf16>
    %c0_13 = arith.constant 0 : index
    %c0_14 = arith.constant 0 : index
    %c0_15 = arith.constant 0 : index
    %c0_16 = arith.constant 0 : index
    %32 = vector.load %arg5[%c0_13, %c0_14, %c0_15, %c0_16] : memref<2x6x32x16xbf16, #tpu.memory_space<vmem>>, vector<1x6x32x16xbf16>
    %33 = vector.shape_cast %32 : vector<1x6x32x16xbf16> to vector<6x32x16xbf16>
    "tpu.trace_start"() <{level = 10 : i32, message = "nsk,nkd->nsd"}> : () -> ()
    %cst_17 = arith.constant dense<0.000000e+00> : vector<6x8x16xf32>
    %34 = tpu.matmul %31, %33, %cst_17 {dimension_numbers = #tpu.dot_dimension_numbers<[2], [1], [1], [2], [0, 0, 0, 1, 1, 2], [0], [0]>} : vector<6x8x32xbf16>, vector<6x32x16xbf16>, vector<6x8x16xf32> -> vector<6x8x16xf32>
    "tpu.trace_stop"() : () -> ()
    %c0_18 = arith.constant 0 : index
    %c0_19 = arith.constant 0 : index
    %c0_20 = arith.constant 0 : index
    %c0_21 = arith.constant 0 : index
    %35 = vector.load %arg6[%c0_18, %c0_19, %c0_20, %c0_21] : memref<2x6x1x16xf32, #tpu.memory_space<vmem>>, vector<1x6x1x16xf32>
    %36 = vector.shape_cast %35 : vector<1x6x1x16xf32> to vector<6x1x16xf32>
    %37 = vector.broadcast %36 : vector<6x1x16xf32> to vector<6x8x16xf32>
    %38 = arith.addf %34, %37 : vector<6x8x16xf32>
    %39 = vector.extract_strided_slice %38 {offsets = [0, 0, 0], sizes = [2, 8, 16], strides = [1, 1, 1]} : vector<6x8x16xf32> to vector<2x8x16xf32>
    %40 = vector.extract_strided_slice %38 {offsets = [2, 0, 0], sizes = [2, 8, 16], strides = [1, 1, 1]} : vector<6x8x16xf32> to vector<2x8x16xf32>
    %41 = vector.extract_strided_slice %38 {offsets = [4, 0, 0], sizes = [2, 8, 16], strides = [1, 1, 1]} : vector<6x8x16xf32> to vector<2x8x16xf32>
    %42 = arith.truncf %39 : vector<2x8x16xf32> to vector<2x8x16xbf16>
    %43 = arith.truncf %40 : vector<2x8x16xf32> to vector<2x8x16xbf16>
    "tpu.trace_start"() <{level = 10 : i32, message = "hqd,hkd->hqk"}> : () -> ()
    %cst_22 = arith.constant dense<0.000000e+00> : vector<2x8x8xf32>
    %44 = tpu.matmul %42, %43, %cst_22 {dimension_numbers = #tpu.dot_dimension_numbers<[2], [2], [1], [1], [0, 0, 0, 1, 1, 1], [0], [0]>} : vector<2x8x16xbf16>, vector<2x8x16xbf16>, vector<2x8x8xf32> -> vector<2x8x8xf32>
    "tpu.trace_stop"() : () -> ()
    %45 = vector.shape_cast %27 : vector<1x8xf32> to vector<1x1x8xf32>
    %46 = vector.broadcast %45 : vector<1x1x8xf32> to vector<2x8x8xf32>
    %47 = arith.addf %44, %46 : vector<2x8x8xf32>
    %cst_23 = arith.constant dense<0xFF800000> : vector<2x8xf32>
    %48 = vector.multi_reduction <maximumf>, %47, %cst_23 [2] : vector<2x8x8xf32> to vector<2x8xf32>
    %49 = vector.shape_cast %48 : vector<2x8xf32> to vector<2x8x1xf32>
    %50 = vector.broadcast %49 : vector<2x8x1xf32> to vector<2x8x8xf32>
    %51 = arith.subf %47, %50 : vector<2x8x8xf32>
    %52 = math.exp %51 : vector<2x8x8xf32>
    %cst_24 = arith.constant dense<0.000000e+00> : vector<2x8xf32>
    %53 = vector.multi_reduction <add>, %52, %cst_24 [2] : vector<2x8x8xf32> to vector<2x8xf32>
    %54 = vector.shape_cast %53 : vector<2x8xf32> to vector<2x8x1xf32>
    %55 = tpu.reciprocal %54 {approx = true} : vector<2x8x1xf32> -> vector<2x8x1xf32>
    %56 = vector.broadcast %55 : vector<2x8x1xf32> to vector<2x8x8xf32>
    %57 = arith.mulf %52, %56 : vector<2x8x8xf32>
    %58 = arith.truncf %57 : vector<2x8x8xf32> to vector<2x8x8xbf16>
    %59 = arith.truncf %41 : vector<2x8x16xf32> to vector<2x8x16xbf16>
    "tpu.trace_start"() <{level = 10 : i32, message = "hqk,hkd->hqd"}> : () -> ()
    %cst_25 = arith.constant dense<0.000000e+00> : vector<2x8x16xf32>
    %60 = tpu.matmul %58, %59, %cst_25 {dimension_numbers = #tpu.dot_dimension_numbers<[2], [1], [1], [2], [0, 0, 0, 1, 1, 2], [0], [0]>} : vector<2x8x8xbf16>, vector<2x8x16xbf16>, vector<2x8x16xf32> -> vector<2x8x16xf32>
    "tpu.trace_stop"() : () -> ()
    %61 = arith.truncf %60 : vector<2x8x16xf32> to vector<2x8x16xbf16>
    %c0_26 = arith.constant 0 : index
    %c0_27 = arith.constant 0 : index
    %c0_28 = arith.constant 0 : index
    %c0_29 = arith.constant 0 : index
    %62 = vector.load %arg7[%c0_26, %c0_27, %c0_28, %c0_29] : memref<2x2x16x32xbf16, #tpu.memory_space<vmem>>, vector<1x2x16x32xbf16>
    %63 = vector.shape_cast %62 : vector<1x2x16x32xbf16> to vector<2x16x32xbf16>
    "tpu.trace_start"() <{level = 10 : i32, message = "hsd,hdo->hso"}> : () -> ()
    %cst_30 = arith.constant dense<0.000000e+00> : vector<2x8x32xf32>
    %64 = tpu.matmul %61, %63, %cst_30 {dimension_numbers = #tpu.dot_dimension_numbers<[2], [1], [1], [2], [0, 0, 0, 1, 1, 2], [0], [0]>} : vector<2x8x16xbf16>, vector<2x16x32xbf16>, vector<2x8x32xf32> -> vector<2x8x32xf32>
    "tpu.trace_stop"() : () -> ()
    %cst_31 = arith.constant dense<0.000000e+00> : vector<8x32xf32>
    %65 = vector.multi_reduction <add>, %64, %cst_31 [0] : vector<2x8x32xf32> to vector<8x32xf32>
    %c0_32 = arith.constant 0 : index
    %c0_33 = arith.constant 0 : index
    %c0_34 = arith.constant 0 : index
    %66 = vector.load %arg8[%c0_32, %c0_33, %c0_34] : memref<2x1x32xf32, #tpu.memory_space<vmem>>, vector<1x1x32xf32>
    %67 = vector.shape_cast %66 : vector<1x1x32xf32> to vector<1x32xf32>
    %68 = vector.broadcast %67 : vector<1x32xf32> to vector<8x32xf32>
    %69 = arith.addf %65, %68 : vector<8x32xf32>
    %70 = arith.addf %25, %69 : vector<8x32xf32>
    %c0_35 = arith.constant 0 : index
    %c0_36 = arith.constant 0 : index
    %c0_37 = arith.constant 0 : index
    %71 = vector.load %arg9[%c0_35, %c0_36, %c0_37] : memref<2x1x32xf32, #tpu.memory_space<vmem>>, vector<1x1x32xf32>
    %72 = vector.shape_cast %71 : vector<1x1x32xf32> to vector<1x32xf32>
    %c0_38 = arith.constant 0 : index
    %c0_39 = arith.constant 0 : index
    %c0_40 = arith.constant 0 : index
    %73 = vector.load %arg10[%c0_38, %c0_39, %c0_40] : memref<2x1x32xf32, #tpu.memory_space<vmem>>, vector<1x1x32xf32>
    %74 = vector.shape_cast %73 : vector<1x1x32xf32> to vector<1x32xf32>
    %cst_41 = arith.constant dense<0.000000e+00> : vector<8xf32>
    %75 = vector.multi_reduction <add>, %70, %cst_41 [1] : vector<8x32xf32> to vector<8xf32>
    %76 = vector.shape_cast %75 : vector<8xf32> to vector<8x1xf32>
    %cst_42 = arith.constant 3.200000e+01 : f32
    %77 = vector.broadcast %cst_42 : f32 to vector<8x1xf32>
    %78 = arith.divf %76, %77 : vector<8x1xf32>
    %79 = vector.broadcast %78 : vector<8x1xf32> to vector<8x32xf32>
    %80 = arith.subf %70, %79 : vector<8x32xf32>
    %81 = arith.mulf %80, %80 : vector<8x32xf32>
    %cst_43 = arith.constant dense<0.000000e+00> : vector<8xf32>
    %82 = vector.multi_reduction <add>, %81, %cst_43 [1] : vector<8x32xf32> to vector<8xf32>
    %83 = vector.shape_cast %82 : vector<8xf32> to vector<8x1xf32>
    %cst_44 = arith.constant 3.200000e+01 : f32
    %84 = vector.broadcast %cst_44 : f32 to vector<8x1xf32>
    %85 = arith.divf %83, %84 : vector<8x1xf32>
    %86 = vector.broadcast %78 : vector<8x1xf32> to vector<8x32xf32>
    %87 = arith.subf %70, %86 : vector<8x32xf32>
    %cst_45 = arith.constant 9.99999996E-13 : f32
    %88 = vector.broadcast %cst_45 : f32 to vector<8x1xf32>
    %89 = arith.addf %85, %88 : vector<8x1xf32>
    %90 = math.rsqrt %89 : vector<8x1xf32>
    %91 = vector.broadcast %90 : vector<8x1xf32> to vector<8x32xf32>
    %92 = arith.mulf %87, %91 : vector<8x32xf32>
    %93 = vector.broadcast %72 : vector<1x32xf32> to vector<8x32xf32>
    %94 = arith.mulf %92, %93 : vector<8x32xf32>
    %95 = vector.broadcast %74 : vector<1x32xf32> to vector<8x32xf32>
    %96 = arith.addf %94, %95 : vector<8x32xf32>
    %97 = arith.truncf %96 : vector<8x32xf32> to vector<8x32xbf16>
    %c0_46 = arith.constant 0 : index
    %c0_47 = arith.constant 0 : index
    %c0_48 = arith.constant 0 : index
    %98 = vector.load %arg11[%c0_46, %c0_47, %c0_48] : memref<2x32x64xbf16, #tpu.memory_space<vmem>>, vector<1x32x64xbf16>
    %99 = vector.shape_cast %98 : vector<1x32x64xbf16> to vector<32x64xbf16>
    %cst_49 = arith.constant dense<0.000000e+00> : vector<8x64xf32>
    %100 = tpu.matmul %97, %99, %cst_49 {dimension_numbers = #tpu.dot_dimension_numbers<[1], [0], [0], [1], [0, 0, 1, 1], [], []>} : vector<8x32xbf16>, vector<32x64xbf16>, vector<8x64xf32> -> vector<8x64xf32>
    %c0_50 = arith.constant 0 : index
    %c0_51 = arith.constant 0 : index
    %c0_52 = arith.constant 0 : index
    %101 = vector.load %arg12[%c0_50, %c0_51, %c0_52] : memref<2x1x64xf32, #tpu.memory_space<vmem>>, vector<1x1x64xf32>
    %102 = vector.shape_cast %101 : vector<1x1x64xf32> to vector<1x64xf32>
    %103 = vector.broadcast %102 : vector<1x64xf32> to vector<8x64xf32>
    %104 = arith.addf %100, %103 : vector<8x64xf32>
    %105 = arith.mulf %104, %104 : vector<8x64xf32>
    %106 = arith.mulf %104, %105 : vector<8x64xf32>
    %cst_53 = arith.constant 4.471500e-02 : f32
    %107 = vector.broadcast %cst_53 : f32 to vector<8x64xf32>
    %108 = arith.mulf %107, %106 : vector<8x64xf32>
    %109 = arith.addf %104, %108 : vector<8x64xf32>
    %cst_54 = arith.constant 0.797884583 : f32
    %110 = vector.broadcast %cst_54 : f32 to vector<8x64xf32>
    %111 = arith.mulf %110, %109 : vector<8x64xf32>
    %112 = math.tanh %111 : vector<8x64xf32>
    %cst_55 = arith.constant 1.000000e+00 : f32
    %113 = vector.broadcast %cst_55 : f32 to vector<8x64xf32>
    %114 = arith.addf %113, %112 : vector<8x64xf32>
    %cst_56 = arith.constant 5.000000e-01 : f32
    %115 = vector.broadcast %cst_56 : f32 to vector<8x64xf32>
    %116 = arith.mulf %115, %114 : vector<8x64xf32>
    %117 = arith.mulf %104, %116 : vector<8x64xf32>
    %118 = arith.truncf %117 : vector<8x64xf32> to vector<8x64xbf16>
    %c0_57 = arith.constant 0 : index
    %c0_58 = arith.constant 0 : index
    %c0_59 = arith.constant 0 : index
    %119 = vector.load %arg13[%c0_57, %c0_58, %c0_59] : memref<2x64x32xbf16, #tpu.memory_space<vmem>>, vector<1x64x32xbf16>
    %120 = vector.shape_cast %119 : vector<1x64x32xbf16> to vector<64x32xbf16>
    %cst_60 = arith.constant dense<0.000000e+00> : vector<8x32xf32>
    %121 = tpu.matmul %118, %120, %cst_60 {dimension_numbers = #tpu.dot_dimension_numbers<[1], [0], [0], [1], [0, 0, 1, 1], [], []>} : vector<8x64xbf16>, vector<64x32xbf16>, vector<8x32xf32> -> vector<8x32xf32>
    %c0_61 = arith.constant 0 : index
    %c0_62 = arith.constant 0 : index
    %c0_63 = arith.constant 0 : index
    %122 = vector.load %arg14[%c0_61, %c0_62, %c0_63] : memref<2x1x32xf32, #tpu.memory_space<vmem>>, vector<1x1x32xf32>
    %123 = vector.shape_cast %122 : vector<1x1x32xf32> to vector<1x32xf32>
    %124 = vector.broadcast %123 : vector<1x32xf32> to vector<8x32xf32>
    %125 = arith.addf %121, %124 : vector<8x32xf32>
    %126 = arith.addf %96, %125 : vector<8x32xf32>
    %c0_64 = arith.constant 0 : index
    %c0_65 = arith.constant 0 : index
    %c0_66 = arith.constant 0 : index
    %127 = vector.load %arg15[%c0_64, %c0_65, %c0_66] : memref<2x1x32xf32, #tpu.memory_space<vmem>>, vector<1x1x32xf32>
    %128 = vector.shape_cast %127 : vector<1x1x32xf32> to vector<1x32xf32>
    %c0_67 = arith.constant 0 : index
    %c0_68 = arith.constant 0 : index
    %c0_69 = arith.constant 0 : index
    %129 = vector.load %arg16[%c0_67, %c0_68, %c0_69] : memref<2x1x32xf32, #tpu.memory_space<vmem>>, vector<1x1x32xf32>
    %130 = vector.shape_cast %129 : vector<1x1x32xf32> to vector<1x32xf32>
    %cst_70 = arith.constant dense<0.000000e+00> : vector<8xf32>
    %131 = vector.multi_reduction <add>, %126, %cst_70 [1] : vector<8x32xf32> to vector<8xf32>
    %132 = vector.shape_cast %131 : vector<8xf32> to vector<8x1xf32>
    %cst_71 = arith.constant 3.200000e+01 : f32
    %133 = vector.broadcast %cst_71 : f32 to vector<8x1xf32>
    %134 = arith.divf %132, %133 : vector<8x1xf32>
    %135 = vector.broadcast %134 : vector<8x1xf32> to vector<8x32xf32>
    %136 = arith.subf %126, %135 : vector<8x32xf32>
    %137 = arith.mulf %136, %136 : vector<8x32xf32>
    %cst_72 = arith.constant dense<0.000000e+00> : vector<8xf32>
    %138 = vector.multi_reduction <add>, %137, %cst_72 [1] : vector<8x32xf32> to vector<8xf32>
    %139 = vector.shape_cast %138 : vector<8xf32> to vector<8x1xf32>
    %cst_73 = arith.constant 3.200000e+01 : f32
    %140 = vector.broadcast %cst_73 : f32 to vector<8x1xf32>
    %141 = arith.divf %139, %140 : vector<8x1xf32>
    %142 = vector.broadcast %134 : vector<8x1xf32> to vector<8x32xf32>
    %143 = arith.subf %126, %142 : vector<8x32xf32>
    %cst_74 = arith.constant 9.99999996E-13 : f32
    %144 = vector.broadcast %cst_74 : f32 to vector<8x1xf32>
    %145 = arith.addf %141, %144 : vector<8x1xf32>
    %146 = math.rsqrt %145 : vector<8x1xf32>
    %147 = vector.broadcast %146 : vector<8x1xf32> to vector<8x32xf32>
    %148 = arith.mulf %143, %147 : vector<8x32xf32>
    %149 = vector.broadcast %128 : vector<1x32xf32> to vector<8x32xf32>
    %150 = arith.mulf %148, %149 : vector<8x32xf32>
    %151 = vector.broadcast %130 : vector<1x32xf32> to vector<8x32xf32>
    %152 = arith.addf %150, %151 : vector<8x32xf32>
    %153 = arith.truncf %152 : vector<8x32xf32> to vector<8x32xbf16>
    %154 = vector.shape_cast %153 : vector<8x32xbf16> to vector<1x8x32xbf16>
    %155 = vector.shape_cast %154 : vector<1x8x32xbf16> to vector<1x8x32xbf16>
    %156 = vector.broadcast %155 : vector<1x8x32xbf16> to vector<6x8x32xbf16>
    %c1 = arith.constant 1 : index
    %c0_75 = arith.constant 0 : index
    %c0_76 = arith.constant 0 : index
    %c0_77 = arith.constant 0 : index
    %157 = vector.load %arg5[%c1, %c0_75, %c0_76, %c0_77] : memref<2x6x32x16xbf16, #tpu.memory_space<vmem>>, vector<1x6x32x16xbf16>
    %158 = vector.shape_cast %157 : vector<1x6x32x16xbf16> to vector<6x32x16xbf16>
    "tpu.trace_start"() <{level = 10 : i32, message = "nsk,nkd->nsd"}> : () -> ()
    %cst_78 = arith.constant dense<0.000000e+00> : vector<6x8x16xf32>
    %159 = tpu.matmul %156, %158, %cst_78 {dimension_numbers = #tpu.dot_dimension_numbers<[2], [1], [1], [2], [0, 0, 0, 1, 1, 2], [0], [0]>} : vector<6x8x32xbf16>, vector<6x32x16xbf16>, vector<6x8x16xf32> -> vector<6x8x16xf32>
    "tpu.trace_stop"() : () -> ()
    %c1_79 = arith.constant 1 : index
    %c0_80 = arith.constant 0 : index
    %c0_81 = arith.constant 0 : index
    %c0_82 = arith.constant 0 : index
    %160 = vector.load %arg6[%c1_79, %c0_80, %c0_81, %c0_82] : memref<2x6x1x16xf32, #tpu.memory_space<vmem>>, vector<1x6x1x16xf32>
    %161 = vector.shape_cast %160 : vector<1x6x1x16xf32> to vector<6x1x16xf32>
    %162 = vector.broadcast %161 : vector<6x1x16xf32> to vector<6x8x16xf32>
    %163 = arith.addf %159, %162 : vector<6x8x16xf32>
    %164 = vector.extract_strided_slice %163 {offsets = [0, 0, 0], sizes = [2, 8, 16], strides = [1, 1, 1]} : vector<6x8x16xf32> to vector<2x8x16xf32>
    %165 = vector.extract_strided_slice %163 {offsets = [2, 0, 0], sizes = [2, 8, 16], strides = [1, 1, 1]} : vector<6x8x16xf32> to vector<2x8x16xf32>
    %166 = vector.extract_strided_slice %163 {offsets = [4, 0, 0], sizes = [2, 8, 16], strides = [1, 1, 1]} : vector<6x8x16xf32> to vector<2x8x16xf32>
    %167 = arith.truncf %164 : vector<2x8x16xf32> to vector<2x8x16xbf16>
    %168 = arith.truncf %165 : vector<2x8x16xf32> to vector<2x8x16xbf16>
    "tpu.trace_start"() <{level = 10 : i32, message = "hqd,hkd->hqk"}> : () -> ()
    %cst_83 = arith.constant dense<0.000000e+00> : vector<2x8x8xf32>
    %169 = tpu.matmul %167, %168, %cst_83 {dimension_numbers = #tpu.dot_dimension_numbers<[2], [2], [1], [1], [0, 0, 0, 1, 1, 1], [0], [0]>} : vector<2x8x16xbf16>, vector<2x8x16xbf16>, vector<2x8x8xf32> -> vector<2x8x8xf32>
    "tpu.trace_stop"() : () -> ()
    %170 = vector.shape_cast %27 : vector<1x8xf32> to vector<1x1x8xf32>
    %171 = vector.broadcast %170 : vector<1x1x8xf32> to vector<2x8x8xf32>
    %172 = arith.addf %169, %171 : vector<2x8x8xf32>
    %cst_84 = arith.constant dense<0xFF800000> : vector<2x8xf32>
    %173 = vector.multi_reduction <maximumf>, %172, %cst_84 [2] : vector<2x8x8xf32> to vector<2x8xf32>
    %174 = vector.shape_cast %173 : vector<2x8xf32> to vector<2x8x1xf32>
    %175 = vector.broadcast %174 : vector<2x8x1xf32> to vector<2x8x8xf32>
    %176 = arith.subf %172, %175 : vector<2x8x8xf32>
    %177 = math.exp %176 : vector<2x8x8xf32>
    %cst_85 = arith.constant dense<0.000000e+00> : vector<2x8xf32>
    %178 = vector.multi_reduction <add>, %177, %cst_85 [2] : vector<2x8x8xf32> to vector<2x8xf32>
    %179 = vector.shape_cast %178 : vector<2x8xf32> to vector<2x8x1xf32>
    %180 = tpu.reciprocal %179 {approx = true} : vector<2x8x1xf32> -> vector<2x8x1xf32>
    %181 = vector.broadcast %180 : vector<2x8x1xf32> to vector<2x8x8xf32>
    %182 = arith.mulf %177, %181 : vector<2x8x8xf32>
    %183 = arith.truncf %182 : vector<2x8x8xf32> to vector<2x8x8xbf16>
    %184 = arith.truncf %166 : vector<2x8x16xf32> to vector<2x8x16xbf16>
    "tpu.trace_start"() <{level = 10 : i32, message = "hqk,hkd->hqd"}> : () -> ()
    %cst_86 = arith.constant dense<0.000000e+00> : vector<2x8x16xf32>
    %185 = tpu.matmul %183, %184, %cst_86 {dimension_numbers = #tpu.dot_dimension_numbers<[2], [1], [1], [2], [0, 0, 0, 1, 1, 2], [0], [0]>} : vector<2x8x8xbf16>, vector<2x8x16xbf16>, vector<2x8x16xf32> -> vector<2x8x16xf32>
    "tpu.trace_stop"() : () -> ()
    %186 = arith.truncf %185 : vector<2x8x16xf32> to vector<2x8x16xbf16>
    %c1_87 = arith.constant 1 : index
    %c0_88 = arith.constant 0 : index
    %c0_89 = arith.constant 0 : index
    %c0_90 = arith.constant 0 : index
    %187 = vector.load %arg7[%c1_87, %c0_88, %c0_89, %c0_90] : memref<2x2x16x32xbf16, #tpu.memory_space<vmem>>, vector<1x2x16x32xbf16>
    %188 = vector.shape_cast %187 : vector<1x2x16x32xbf16> to vector<2x16x32xbf16>
    "tpu.trace_start"() <{level = 10 : i32, message = "hsd,hdo->hso"}> : () -> ()
    %cst_91 = arith.constant dense<0.000000e+00> : vector<2x8x32xf32>
    %189 = tpu.matmul %186, %188, %cst_91 {dimension_numbers = #tpu.dot_dimension_numbers<[2], [1], [1], [2], [0, 0, 0, 1, 1, 2], [0], [0]>} : vector<2x8x16xbf16>, vector<2x16x32xbf16>, vector<2x8x32xf32> -> vector<2x8x32xf32>
    "tpu.trace_stop"() : () -> ()
    %cst_92 = arith.constant dense<0.000000e+00> : vector<8x32xf32>
    %190 = vector.multi_reduction <add>, %189, %cst_92 [0] : vector<2x8x32xf32> to vector<8x32xf32>
    %c1_93 = arith.constant 1 : index
    %c0_94 = arith.constant 0 : index
    %c0_95 = arith.constant 0 : index
    %191 = vector.load %arg8[%c1_93, %c0_94, %c0_95] : memref<2x1x32xf32, #tpu.memory_space<vmem>>, vector<1x1x32xf32>
    %192 = vector.shape_cast %191 : vector<1x1x32xf32> to vector<1x32xf32>
    %193 = vector.broadcast %192 : vector<1x32xf32> to vector<8x32xf32>
    %194 = arith.addf %190, %193 : vector<8x32xf32>
    %195 = arith.addf %152, %194 : vector<8x32xf32>
    %c1_96 = arith.constant 1 : index
    %c0_97 = arith.constant 0 : index
    %c0_98 = arith.constant 0 : index
    %196 = vector.load %arg9[%c1_96, %c0_97, %c0_98] : memref<2x1x32xf32, #tpu.memory_space<vmem>>, vector<1x1x32xf32>
    %197 = vector.shape_cast %196 : vector<1x1x32xf32> to vector<1x32xf32>
    %c1_99 = arith.constant 1 : index
    %c0_100 = arith.constant 0 : index
    %c0_101 = arith.constant 0 : index
    %198 = vector.load %arg10[%c1_99, %c0_100, %c0_101] : memref<2x1x32xf32, #tpu.memory_space<vmem>>, vector<1x1x32xf32>
    %199 = vector.shape_cast %198 : vector<1x1x32xf32> to vector<1x32xf32>
    %cst_102 = arith.constant dense<0.000000e+00> : vector<8xf32>
    %200 = vector.multi_reduction <add>, %195, %cst_102 [1] : vector<8x32xf32> to vector<8xf32>
    %201 = vector.shape_cast %200 : vector<8xf32> to vector<8x1xf32>
    %cst_103 = arith.constant 3.200000e+01 : f32
    %202 = vector.broadcast %cst_103 : f32 to vector<8x1xf32>
    %203 = arith.divf %201, %202 : vector<8x1xf32>
    %204 = vector.broadcast %203 : vector<8x1xf32> to vector<8x32xf32>
    %205 = arith.subf %195, %204 : vector<8x32xf32>
    %206 = arith.mulf %205, %205 : vector<8x32xf32>
    %cst_104 = arith.constant dense<0.000000e+00> : vector<8xf32>
    %207 = vector.multi_reduction <add>, %206, %cst_104 [1] : vector<8x32xf32> to vector<8xf32>
    %208 = vector.shape_cast %207 : vector<8xf32> to vector<8x1xf32>
    %cst_105 = arith.constant 3.200000e+01 : f32
    %209 = vector.broadcast %cst_105 : f32 to vector<8x1xf32>
    %210 = arith.divf %208, %209 : vector<8x1xf32>
    %211 = vector.broadcast %203 : vector<8x1xf32> to vector<8x32xf32>
    %212 = arith.subf %195, %211 : vector<8x32xf32>
    %cst_106 = arith.constant 9.99999996E-13 : f32
    %213 = vector.broadcast %cst_106 : f32 to vector<8x1xf32>
    %214 = arith.addf %210, %213 : vector<8x1xf32>
    %215 = math.rsqrt %214 : vector<8x1xf32>
    %216 = vector.broadcast %215 : vector<8x1xf32> to vector<8x32xf32>
    %217 = arith.mulf %212, %216 : vector<8x32xf32>
    %218 = vector.broadcast %197 : vector<1x32xf32> to vector<8x32xf32>
    %219 = arith.mulf %217, %218 : vector<8x32xf32>
    %220 = vector.broadcast %199 : vector<1x32xf32> to vector<8x32xf32>
    %221 = arith.addf %219, %220 : vector<8x32xf32>
    %222 = arith.truncf %221 : vector<8x32xf32> to vector<8x32xbf16>
    %c1_107 = arith.constant 1 : index
    %c0_108 = arith.constant 0 : index
    %c0_109 = arith.constant 0 : index
    %223 = vector.load %arg11[%c1_107, %c0_108, %c0_109] : memref<2x32x64xbf16, #tpu.memory_space<vmem>>, vector<1x32x64xbf16>
    %224 = vector.shape_cast %223 : vector<1x32x64xbf16> to vector<32x64xbf16>
    %cst_110 = arith.constant dense<0.000000e+00> : vector<8x64xf32>
    %225 = tpu.matmul %222, %224, %cst_110 {dimension_numbers = #tpu.dot_dimension_numbers<[1], [0], [0], [1], [0, 0, 1, 1], [], []>} : vector<8x32xbf16>, vector<32x64xbf16>, vector<8x64xf32> -> vector<8x64xf32>
    %c1_111 = arith.constant 1 : index
    %c0_112 = arith.constant 0 : index
    %c0_113 = arith.constant 0 : index
    %226 = vector.load %arg12[%c1_111, %c0_112, %c0_113] : memref<2x1x64xf32, #tpu.memory_space<vmem>>, vector<1x1x64xf32>
    %227 = vector.shape_cast %226 : vector<1x1x64xf32> to vector<1x64xf32>
    %228 = vector.broadcast %227 : vector<1x64xf32> to vector<8x64xf32>
    %229 = arith.addf %225, %228 : vector<8x64xf32>
    %230 = arith.mulf %229, %229 : vector<8x64xf32>
    %231 = arith.mulf %229, %230 : vector<8x64xf32>
    %cst_114 = arith.constant 4.471500e-02 : f32
    %232 = vector.broadcast %cst_114 : f32 to vector<8x64xf32>
    %233 = arith.mulf %232, %231 : vector<8x64xf32>
    %234 = arith.addf %229, %233 : vector<8x64xf32>
    %cst_115 = arith.constant 0.797884583 : f32
    %235 = vector.broadcast %cst_115 : f32 to vector<8x64xf32>
    %236 = arith.mulf %235, %234 : vector<8x64xf32>
    %237 = math.tanh %236 : vector<8x64xf32>
    %cst_116 = arith.constant 1.000000e+00 : f32
    %238 = vector.broadcast %cst_116 : f32 to vector<8x64xf32>
    %239 = arith.addf %238, %237 : vector<8x64xf32>
    %cst_117 = arith.constant 5.000000e-01 : f32
    %240 = vector.broadcast %cst_117 : f32 to vector<8x64xf32>
    %241 = arith.mulf %240, %239 : vector<8x64xf32>
    %242 = arith.mulf %229, %241 : vector<8x64xf32>
    %243 = arith.truncf %242 : vector<8x64xf32> to vector<8x64xbf16>
    %c1_118 = arith.constant 1 : index
    %c0_119 = arith.constant 0 : index
    %c0_120 = arith.constant 0 : index
    %244 = vector.load %arg13[%c1_118, %c0_119, %c0_120] : memref<2x64x32xbf16, #tpu.memory_space<vmem>>, vector<1x64x32xbf16>
    %245 = vector.shape_cast %244 : vector<1x64x32xbf16> to vector<64x32xbf16>
    %cst_121 = arith.constant dense<0.000000e+00> : vector<8x32xf32>
    %246 = tpu.matmul %243, %245, %cst_121 {dimension_numbers = #tpu.dot_dimension_numbers<[1], [0], [0], [1], [0, 0, 1, 1], [], []>} : vector<8x64xbf16>, vector<64x32xbf16>, vector<8x32xf32> -> vector<8x32xf32>
    %c1_122 = arith.constant 1 : index
    %c0_123 = arith.constant 0 : index
    %c0_124 = arith.constant 0 : index
    %247 = vector.load %arg14[%c1_122, %c0_123, %c0_124] : memref<2x1x32xf32, #tpu.memory_space<vmem>>, vector<1x1x32xf32>
    %248 = vector.shape_cast %247 : vector<1x1x32xf32> to vector<1x32xf32>
    %249 = vector.broadcast %248 : vector<1x32xf32> to vector<8x32xf32>
    %250 = arith.addf %246, %249 : vector<8x32xf32>
    %251 = arith.addf %221, %250 : vector<8x32xf32>
    %c1_125 = arith.constant 1 : index
    %c0_126 = arith.constant 0 : index
    %c0_127 = arith.constant 0 : index
    %252 = vector.load %arg15[%c1_125, %c0_126, %c0_127] : memref<2x1x32xf32, #tpu.memory_space<vmem>>, vector<1x1x32xf32>
    %253 = vector.shape_cast %252 : vector<1x1x32xf32> to vector<1x32xf32>
    %c1_128 = arith.constant 1 : index
    %c0_129 = arith.constant 0 : index
    %c0_130 = arith.constant 0 : index
    %254 = vector.load %arg16[%c1_128, %c0_129, %c0_130] : memref<2x1x32xf32, #tpu.memory_space<vmem>>, vector<1x1x32xf32>
    %255 = vector.shape_cast %254 : vector<1x1x32xf32> to vector<1x32xf32>
    %cst_131 = arith.constant dense<0.000000e+00> : vector<8xf32>
    %256 = vector.multi_reduction <add>, %251, %cst_131 [1] : vector<8x32xf32> to vector<8xf32>
    %257 = vector.shape_cast %256 : vector<8xf32> to vector<8x1xf32>
    %cst_132 = arith.constant 3.200000e+01 : f32
    %258 = vector.broadcast %cst_132 : f32 to vector<8x1xf32>
    %259 = arith.divf %257, %258 : vector<8x1xf32>
    %260 = vector.broadcast %259 : vector<8x1xf32> to vector<8x32xf32>
    %261 = arith.subf %251, %260 : vector<8x32xf32>
    %262 = arith.mulf %261, %261 : vector<8x32xf32>
    %cst_133 = arith.constant dense<0.000000e+00> : vector<8xf32>
    %263 = vector.multi_reduction <add>, %262, %cst_133 [1] : vector<8x32xf32> to vector<8xf32>
    %264 = vector.shape_cast %263 : vector<8xf32> to vector<8x1xf32>
    %cst_134 = arith.constant 3.200000e+01 : f32
    %265 = vector.broadcast %cst_134 : f32 to vector<8x1xf32>
    %266 = arith.divf %264, %265 : vector<8x1xf32>
    %267 = vector.broadcast %259 : vector<8x1xf32> to vector<8x32xf32>
    %268 = arith.subf %251, %267 : vector<8x32xf32>
    %cst_135 = arith.constant 9.99999996E-13 : f32
    %269 = vector.broadcast %cst_135 : f32 to vector<8x1xf32>
    %270 = arith.addf %266, %269 : vector<8x1xf32>
    %271 = math.rsqrt %270 : vector<8x1xf32>
    %272 = vector.broadcast %271 : vector<8x1xf32> to vector<8x32xf32>
    %273 = arith.mulf %268, %272 : vector<8x32xf32>
    %274 = vector.broadcast %253 : vector<1x32xf32> to vector<8x32xf32>
    %275 = arith.mulf %273, %274 : vector<8x32xf32>
    %276 = vector.broadcast %255 : vector<1x32xf32> to vector<8x32xf32>
    %277 = arith.addf %275, %276 : vector<8x32xf32>
    %278 = vector.extract_strided_slice %277 {offsets = [0, 0], sizes = [1, 32], strides = [1, 1]} : vector<8x32xf32> to vector<1x32xf32>
    %279 = arith.truncf %278 : vector<1x32xf32> to vector<1x32xbf16>
    %c0_136 = arith.constant 0 : index
    %c0_137 = arith.constant 0 : index
    %280 = vector.load %arg17[%c0_136, %c0_137] : memref<32x32xbf16, #tpu.memory_space<vmem>>, vector<32x32xbf16>
    %cst_138 = arith.constant dense<0.000000e+00> : vector<1x32xf32>
    %281 = tpu.matmul %279, %280, %cst_138 {dimension_numbers = #tpu.dot_dimension_numbers<[1], [0], [0], [1], [0, 0, 1, 1], [], []>} : vector<1x32xbf16>, vector<32x32xbf16>, vector<1x32xf32> -> vector<1x32xf32>
    %c0_139 = arith.constant 0 : index
    %c0_140 = arith.constant 0 : index
    %282 = vector.load %arg18[%c0_139, %c0_140] : memref<1x32xf32, #tpu.memory_space<vmem>>, vector<1x32xf32>
    %283 = arith.addf %281, %282 : vector<1x32xf32>
    %284 = math.tanh %283 : vector<1x32xf32>
    %285 = arith.truncf %284 : vector<1x32xf32> to vector<1x32xbf16>
    %c0_141 = arith.constant 0 : index
    %c0_142 = arith.constant 0 : index
    %286 = vector.load %arg19[%c0_141, %c0_142] : memref<32x128xbf16, #tpu.memory_space<vmem>>, vector<32x128xbf16>
    %cst_143 = arith.constant dense<0.000000e+00> : vector<1x128xf32>
    %287 = tpu.matmul %285, %286, %cst_143 {dimension_numbers = #tpu.dot_dimension_numbers<[1], [0], [0], [1], [0, 0, 1, 1], [], []>} : vector<1x32xbf16>, vector<32x128xbf16>, vector<1x128xf32> -> vector<1x128xf32>
    %c0_144 = arith.constant 0 : index
    %c0_145 = arith.constant 0 : index
    %288 = vector.load %arg20[%c0_144, %c0_145] : memref<1x128xf32, #tpu.memory_space<vmem>>, vector<1x128xf32>
    %289 = arith.addf %287, %288 : vector<1x128xf32>
    %c0_146 = arith.constant 0 : index
    %c0_147 = arith.constant 0 : index
    %c0_148 = arith.constant 0 : index
    %290 = vector.load %arg21[%c0_146, %c0_147, %c0_148] : memref<1x1x128xf32, #tpu.memory_space<vmem>>, vector<1x1x128xf32>
    %291 = vector.shape_cast %290 : vector<1x1x128xf32> to vector<1x128xf32>
    %292 = vector.shape_cast %289 : vector<1x128xf32> to vector<1x1x128xf32>
    tpu.vector_store %arg21[%c0_146, %c0_147, %c0_148], %292 {strides = array<i32>} : memref<1x1x128xf32, #tpu.memory_space<vmem>>, vector<1x1x128xf32>,
    return
  }
  func.func @transform_0(%arg0: i32) -> (i32, i32, i32) {
    %c0_i32 = arith.constant 0 : i32
    %c0_i32_0 = arith.constant 0 : i32
    %c0_i32_1 = arith.constant 0 : i32
    return %arg0, %c0_i32, %c0_i32_0 : i32, i32, i32
  }
  func.func @transform_1(%arg0: i32) -> (i32, i32, i32) {
    %c0_i32 = arith.constant 0 : i32
    %c0_i32_0 = arith.constant 0 : i32
    %c0_i32_1 = arith.constant 0 : i32
    return %arg0, %c0_i32, %c0_i32_0 : i32, i32, i32
  }
  func.func @transform_2(%arg0: i32) -> (i32, i32) {
    %c0_i32 = arith.constant 0 : i32
    %c0_i32_0 = arith.constant 0 : i32
    %c0_i32_1 = arith.constant 0 : i32
    return %c0_i32, %c0_i32_0 : i32, i32
  }
  func.func @transform_3(%arg0: i32) -> (i32, i32) {
    %c0_i32 = arith.constant 0 : i32
    %c0_i32_0 = arith.constant 0 : i32
    %c0_i32_1 = arith.constant 0 : i32
    return %c0_i32, %c0_i32_0 : i32, i32
  }
  func.func @transform_4(%arg0: i32) -> (i32, i32, i32, i32) {
    %c0_i32 = arith.constant 0 : i32
    %c0_i32_0 = arith.constant 0 : i32
    %c0_i32_1 = arith.constant 0 : i32
    %c0_i32_2 = arith.constant 0 : i32
    %c0_i32_3 = arith.constant 0 : i32
    return %c0_i32, %c0_i32_0, %c0_i32_1, %c0_i32_2 : i32, i32, i32, i32
  }
  func.func @transform_5(%arg0: i32) -> (i32, i32, i32, i32) {
    %c0_i32 = arith.constant 0 : i32
    %c0_i32_0 = arith.constant 0 : i32
    %c0_i32_1 = arith.constant 0 : i32
    %c0_i32_2 = arith.constant 0 : i32
    %c0_i32_3 = arith.constant 0 : i32
    return %c0_i32, %c0_i32_0, %c0_i32_1, %c0_i32_2 : i32, i32, i32, i32
  }
  func.func @transform_6(%arg0: i32) -> (i32, i32, i32, i32) {
    %c0_i32 = arith.constant 0 : i32
    %c0_i32_0 = arith.constant 0 : i32
    %c0_i32_1 = arith.constant 0 : i32
    %c0_i32_2 = arith.constant 0 : i32
    %c0_i32_3 = arith.constant 0 : i32
    return %c0_i32, %c0_i32_0, %c0_i32_1, %c0_i32_2 : i32, i32, i32, i32
  }
  func.func @transform_7(%arg0: i32) -> (i32, i32, i32) {
    %c0_i32 = arith.constant 0 : i32
    %c0_i32_0 = arith.constant 0 : i32
    %c0_i32_1 = arith.constant 0 : i32
    %c0_i32_2 = arith.constant 0 : i32
    return %c0_i32, %c0_i32_0, %c0_i32_1 : i32, i32, i32
  }
  func.func @transform_8(%arg0: i32) -> (i32, i32, i32) {
    %c0_i32 = arith.constant 0 : i32
    %c0_i32_0 = arith.constant 0 : i32
    %c0_i32_1 = arith.constant 0 : i32
    %c0_i32_2 = arith.constant 0 : i32
    return %c0_i32, %c0_i32_0, %c0_i32_1 : i32, i32, i32
  }
  func.func @transform_9(%arg0: i32) -> (i32, i32, i32) {
    %c0_i32 = arith.constant 0 : i32
    %c0_i32_0 = arith.constant 0 : i32
    %c0_i32_1 = arith.constant 0 : i32
    %c0_i32_2 = arith.constant 0 : i32
    return %c0_i32, %c0_i32_0, %c0_i32_1 : i32, i32, i32
  }
  func.func @transform_10(%arg0: i32) -> (i32, i32, i32) {
    %c0_i32 = arith.constant 0 : i32
    %c0_i32_0 = arith.constant 0 : i32
    %c0_i32_1 = arith.constant 0 : i32
    %c0_i32_2 = arith.constant 0 : i32
    return %c0_i32, %c0_i32_0, %c0_i32_1 : i32, i32, i32
  }
  func.func @transform_11(%arg0: i32) -> (i32, i32, i32) {
    %c0_i32 = arith.constant 0 : i32
    %c0_i32_0 = arith.constant 0 : i32
    %c0_i32_1 = arith.constant 0 : i32
    %c0_i32_2 = arith.constant 0 : i32
    return %c0_i32, %c0_i32_0, %c0_i32_1 : i32, i32, i32
  }
  func.func @transform_12(%arg0: i32) -> (i32, i32, i32) {
    %c0_i32 = arith.constant 0 : i32
    %c0_i32_0 = arith.constant 0 : i32
    %c0_i32_1 = arith.constant 0 : i32
    %c0_i32_2 = arith.constant 0 : i32
    return %c0_i32, %c0_i32_0, %c0_i32_1 : i32, i32, i32
  }
  func.func @transform_13(%arg0: i32) -> (i32, i32, i32) {
    %c0_i32 = arith.constant 0 : i32
    %c0_i32_0 = arith.constant 0 : i32
    %c0_i32_1 = arith.constant 0 : i32
    %c0_i32_2 = arith.constant 0 : i32
    return %c0_i32, %c0_i32_0, %c0_i32_1 : i32, i32, i32
  }
  func.func @transform_14(%arg0: i32) -> (i32, i32, i32) {
    %c0_i32 = arith.constant 0 : i32
    %c0_i32_0 = arith.constant 0 : i32
    %c0_i32_1 = arith.constant 0 : i32
    %c0_i32_2 = arith.constant 0 : i32
    return %c0_i32, %c0_i32_0, %c0_i32_1 : i32, i32, i32
  }
  func.func @transform_15(%arg0: i32) -> (i32, i32, i32) {
    %c0_i32 = arith.constant 0 : i32
    %c0_i32_0 = arith.constant 0 : i32
    %c0_i32_1 = arith.constant 0 : i32
    %c0_i32_2 = arith.constant 0 : i32
    return %c0_i32, %c0_i32_0, %c0_i32_1 : i32, i32, i32
  }
  func.func @transform_16(%arg0: i32) -> (i32, i32) {
    %c0_i32 = arith.constant 0 : i32
    %c0_i32_0 = arith.constant 0 : i32
    %c0_i32_1 = arith.constant 0 : i32
    return %c0_i32, %c0_i32_0 : i32, i32
  }
  func.func @transform_17(%arg0: i32) -> (i32, i32) {
    %c0_i32 = arith.constant 0 : i32
    %c0_i32_0 = arith.constant 0 : i32
    %c0_i32_1 = arith.constant 0 : i32
    return %c0_i32, %c0_i32_0 : i32, i32
  }
  func.func @transform_18(%arg0: i32) -> (i32, i32) {
    %c0_i32 = arith.constant 0 : i32
    %c0_i32_0 = arith.constant 0 : i32
    %c0_i32_1 = arith.constant 0 : i32
    return %c0_i32, %c0_i32_0 : i32, i32
  }
  func.func @transform_19(%arg0: i32) -> (i32, i32) {
    %c0_i32 = arith.constant 0 : i32
    %c0_i32_0 = arith.constant 0 : i32
    %c0_i32_1 = arith.constant 0 : i32
    return %c0_i32, %c0_i32_0 : i32, i32
  }
  func.func @transform_20(%arg0: i32) -> (i32, i32, i32) {
    %c0_i32 = arith.constant 0 : i32
    %c0_i32_0 = arith.constant 0 : i32
    %c0_i32_1 = arith.constant 0 : i32
    return %arg0, %c0_i32, %c0_i32_0 : i32, i32, i32
  }
}

</mosaic_0001>

<llo_original>
// kernel: tpu_custom_call.1
$region0: #{tpu_custom_call.1}
  #allocation0 [shape = 'u32[]', space=smem, size = 0x4, offset = 0x4, fixed_abs, tag = 'smem constant byte address 0x4 - core index']
  #allocation1 [shape = 'u32[144,128]{1,0:T(1,128)}', space=vmem, size = 0x12000, scoped, tag = 'internal scratch']
  %s0 = inlined_call_operand.vmem [shape: f32[2,8,32], index: 0, kind: input, shape index: {}]
  %s1 = inlined_call_operand.vmem [shape: f32[2,1,8], index: 1, kind: input, shape index: {}]
  %s2 = inlined_call_operand.vmem [shape: f32[1,32], index: 2, kind: input, shape index: {}]
  %s3 = inlined_call_operand.vmem [shape: f32[1,32], index: 3, kind: input, shape index: {}]
  %s4 = inlined_call_operand.vmem [shape: bf16[2,6,32,16], index: 4, kind: input, shape index: {}]
  %s5 = inlined_call_operand.vmem [shape: f32[2,6,1,16], index: 5, kind: input, shape index: {}]
  %s6 = inlined_call_operand.vmem [shape: bf16[2,2,16,32], index: 6, kind: input, shape index: {}]
  %s7 = inlined_call_operand.vmem [shape: f32[2,1,32], index: 7, kind: input, shape index: {}]
  %s8 = inlined_call_operand.vmem [shape: f32[2,1,32], index: 8, kind: input, shape index: {}]
  %s9 = inlined_call_operand.vmem [shape: f32[2,1,32], index: 9, kind: input, shape index: {}]
  %s10 = inlined_call_operand.vmem [shape: bf16[2,32,64], index: 10, kind: input, shape index: {}]
  %s11 = inlined_call_operand.vmem [shape: f32[2,1,64], index: 11, kind: input, shape index: {}]
  %s12 = inlined_call_operand.vmem [shape: bf16[2,64,32], index: 12, kind: input, shape index: {}]
  %s13 = inlined_call_operand.vmem [shape: f32[2,1,32], index: 13, kind: input, shape index: {}]
  %s14 = inlined_call_operand.vmem [shape: f32[2,1,32], index: 14, kind: input, shape index: {}]
  %s15 = inlined_call_operand.vmem [shape: f32[2,1,32], index: 15, kind: input, shape index: {}]
  %s16 = inlined_call_operand.vmem [shape: bf16[32,32], index: 16, kind: input, shape index: {}]
  %s17 = inlined_call_operand.vmem [shape: f32[1,32], index: 17, kind: input, shape index: {}]
  %s18 = inlined_call_operand.vmem [shape: bf16[32,128], index: 18, kind: input, shape index: {}]
  %s19 = inlined_call_operand.vmem [shape: f32[1,128], index: 19, kind: input, shape index: {}]
  %s20 = inlined_call_operand.hbm [shape: f32[2,1,128], index: 20, kind: output, shape index: {}]
  %s21 = sld [smem:[#allocation0]]
  $region113: #{tpu_custom_call.1} parent=0
    _
  %s23 = ssub.s32 1, %s21
  %s24 = scalar_select 0, %s23, %s21
  $region1: #{tpu_custom_call.1} parent=0
    #allocation2 [shape = 'u8[1024]{0}', space=vmem, size = 0x400, scoped, tag = 'output window, operand 0']
    #allocation3 [shape = 's32[2]{0}', space=sflag, size = 0x8, scoped, tag = 'scoped memory for tpu_custom_call.1']
    %25 = vsyncpa [#allocation3], 0
    %s26 = scalar_lea.sflag [#allocation3], 1
    %27 = vsyncpa %s26, 0
    loop: start=0, step=1, limit=4
    $region2: #{tpu_custom_call.1} parent=1 // loop_pre_header
      _
    $region3: #{tpu_custom_call.1} parent=1 // loop_header
      %s29 = sphi 0, %s33
      %p30 = scmp.ge.s32.totalorder %s29, 4
      %s39 = sphi 0, %s41
      %s42 = sphi 0, %s39
      %s43 = sphi 0, %s42
      %s59 = sphi 0, %s43
      %s65 = sphi 0, %s67
      %s68 = sphi 0, %s65
      %s69 = sphi 0, %s68
      %s85 = sphi 0, %s69
      %s89 = sphi 0, %s89
      %s91 = sphi 0, %s89
      %s92 = sphi 0, %s91
      %s106 = sphi 0, %s92
      %s110 = sphi 0, %s110
      %s112 = sphi 0, %s110
      %s113 = sphi 0, %s112
      %s127 = sphi 0, %s113
      %s131 = sphi 0, %s131
      %s133 = sphi 0, %s131
      %s134 = sphi 0, %s133
      %s148 = sphi 0, %s134
      %s152 = sphi 0, %s152
      %s154 = sphi 0, %s152
      %s155 = sphi 0, %s154
      %s169 = sphi 0, %s155
      %s173 = sphi 0, %s173
      %s175 = sphi 0, %s173
      %s176 = sphi 0, %s175
      %s190 = sphi 0, %s176
      %s194 = sphi 0, %s194
      %s196 = sphi 0, %s194
      %s197 = sphi 0, %s196
      %s211 = sphi 0, %s197
      %s215 = sphi 0, %s215
      %s217 = sphi 0, %s215
      %s218 = sphi 0, %s217
      %s232 = sphi 0, %s218
      %s236 = sphi 0, %s236
      %s238 = sphi 0, %s236
      %s239 = sphi 0, %s238
      %s253 = sphi 0, %s239
      %s257 = sphi 0, %s257
      %s259 = sphi 0, %s257
      %s260 = sphi 0, %s259
      %s274 = sphi 0, %s260
      %s278 = sphi 0, %s278
      %s280 = sphi 0, %s278
      %s281 = sphi 0, %s280
      %s295 = sphi 0, %s281
      %s299 = sphi 0, %s299
      %s301 = sphi 0, %s299
      %s302 = sphi 0, %s301
      %s316 = sphi 0, %s302
      %s320 = sphi 0, %s320
      %s322 = sphi 0, %s320
      %s323 = sphi 0, %s322
      %s337 = sphi 0, %s323
      %s341 = sphi 0, %s341
      %s343 = sphi 0, %s341
      %s344 = sphi 0, %s343
      %s358 = sphi 0, %s344
      %s362 = sphi 0, %s362
      %s364 = sphi 0, %s362
      %s365 = sphi 0, %s364
      %s379 = sphi 0, %s365
      %s383 = sphi 0, %s383
      %s385 = sphi 0, %s383
      %s386 = sphi 0, %s385
      %s400 = sphi 0, %s386
      %s404 = sphi 0, %s404
      %s406 = sphi 0, %s404
      %s407 = sphi 0, %s406
      %s421 = sphi 0, %s407
      %s425 = sphi 0, %s425
      %s427 = sphi 0, %s425
      %s428 = sphi 0, %s427
      %s442 = sphi 0, %s428
      %s446 = sphi 0, %s446
      %s448 = sphi 0, %s446
      %s449 = sphi 0, %s448
      %s463 = sphi 0, %s449
      %s469 = sphi 0, %s471
      %s472 = sphi 0, %s469
      %s473 = sphi 0, %s472
      %s489 = sphi 0, %s473
    $region4: #{tpu_custom_call.1} parent=1 // loop_header_branch
      %32 = sbr.rel (%p30) target = $region8
    $region5: #{tpu_custom_call.1} parent=1 // loop_body
      %s34 = ssub.s32 %s29, 1
      %s35 = ssub.s32 %s29, 2
      %s36 = sadd.s32 %s29, 1
      %s37 = ssub.s32 %s29, %s36
      %p38 = scmp.eq.s32.totalorder %s37, 0
      %s40 = sadd.s32 %s39, 1
      %s41 = scalar_select %p38, %s39, %s40
      %p44 = pneg %p38
      %p45 = scmp.eq.s32.totalorder %s29, 1
      %p46 = por %p44, %p45
      %p47 = scmp.ne.s32.totalorder %s39, %s42
      %p48 = scmp.eq.s32.totalorder %s29, 0
      %p49 = por %p47, %p48
      %p50 = scmp.ne.s32.totalorder %s39, %s42
      %p51 = scmp.eq.s32.totalorder %s34, 1
      %p52 = por %p50, %p51
      %p53 = scmp.ne.s32.totalorder %s42, %s43
      %p54 = scmp.eq.s32.totalorder %s34, 0
      %p55 = por %p53, %p54
      %p56 = scmp.ne.s32.totalorder %s42, %s43
      %p57 = scmp.eq.s32.totalorder %s35, 1
      %p58 = por %p56, %p57
      %p60 = scmp.ne.s32.totalorder %s43, %s59
      %p61 = scmp.eq.s32.totalorder %s35, 0
      %p62 = por %p60, %p61
      %s63 = ssub.s32 %s29, %s36
      %p64 = scmp.eq.s32.totalorder %s63, 0
      %s66 = sadd.s32 %s65, 1
      %s67 = scalar_select %p64, %s65, %s66
      %p70 = pneg %p64
      %p71 = scmp.eq.s32.totalorder %s29, 1
      %p72 = por %p70, %p71
      %p73 = scmp.ne.s32.totalorder %s65, %s68
      %p74 = scmp.eq.s32.totalorder %s29, 0
      %p75 = por %p73, %p74
      %p76 = scmp.ne.s32.totalorder %s65, %s68
      %p77 = scmp.eq.s32.totalorder %s34, 1
      %p78 = por %p76, %p77
      %p79 = scmp.ne.s32.totalorder %s68, %s69
      %p80 = scmp.eq.s32.totalorder %s34, 0
      %p81 = por %p79, %p80
      %p82 = scmp.ne.s32.totalorder %s68, %s69
      %p83 = scmp.eq.s32.totalorder %s35, 1
      %p84 = por %p82, %p83
      %p86 = scmp.ne.s32.totalorder %s69, %s85
      %p87 = scmp.eq.s32.totalorder %s35, 0
      %p88 = por %p86, %p87
      %s90 = sadd.s32 %s89, 1
      %p93 = scmp.eq.s32.totalorder %s29, 1
      %p94 = scmp.ne.s32.totalorder %s89, %s91
      %p95 = scmp.eq.s32.totalorder %s29, 0
      %p96 = por %p94, %p95
      %p97 = scmp.ne.s32.totalorder %s89, %s91
      %p98 = scmp.eq.s32.totalorder %s34, 1
      %p99 = por %p97, %p98
      %p100 = scmp.ne.s32.totalorder %s91, %s92
      %p101 = scmp.eq.s32.totalorder %s34, 0
      %p102 = por %p100, %p101
      %p103 = scmp.ne.s32.totalorder %s91, %s92
      %p104 = scmp.eq.s32.totalorder %s35, 1
      %p105 = por %p103, %p104
      %p107 = scmp.ne.s32.totalorder %s92, %s106
      %p108 = scmp.eq.s32.totalorder %s35, 0
      %p109 = por %p107, %p108
      %s111 = sadd.s32 %s110, 1
      %p114 = scmp.eq.s32.totalorder %s29, 1
      %p115 = scmp.ne.s32.totalorder %s110, %s112
      %p116 = scmp.eq.s32.totalorder %s29, 0
      %p117 = por %p115, %p116
      %p118 = scmp.ne.s32.totalorder %s110, %s112
      %p119 = scmp.eq.s32.totalorder %s34, 1
      %p120 = por %p118, %p119
      %p121 = scmp.ne.s32.totalorder %s112, %s113
      %p122 = scmp.eq.s32.totalorder %s34, 0
      %p123 = por %p121, %p122
      %p124 = scmp.ne.s32.totalorder %s112, %s113
      %p125 = scmp.eq.s32.totalorder %s35, 1
      %p126 = por %p124, %p125
      %p128 = scmp.ne.s32.totalorder %s113, %s127
      %p129 = scmp.eq.s32.totalorder %s35, 0
      %p130 = por %p128, %p129
      %s132 = sadd.s32 %s131, 1
      %p135 = scmp.eq.s32.totalorder %s29, 1
      %p136 = scmp.ne.s32.totalorder %s131, %s133
      %p137 = scmp.eq.s32.totalorder %s29, 0
      %p138 = por %p136, %p137
      %p139 = scmp.ne.s32.totalorder %s131, %s133
      %p140 = scmp.eq.s32.totalorder %s34, 1
      %p141 = por %p139, %p140
      %p142 = scmp.ne.s32.totalorder %s133, %s134
      %p143 = scmp.eq.s32.totalorder %s34, 0
      %p144 = por %p142, %p143
      %p145 = scmp.ne.s32.totalorder %s133, %s134
      %p146 = scmp.eq.s32.totalorder %s35, 1
      %p147 = por %p145, %p146
      %p149 = scmp.ne.s32.totalorder %s134, %s148
      %p150 = scmp.eq.s32.totalorder %s35, 0
      %p151 = por %p149, %p150
      %s153 = sadd.s32 %s152, 1
      %p156 = scmp.eq.s32.totalorder %s29, 1
      %p157 = scmp.ne.s32.totalorder %s152, %s154
      %p158 = scmp.eq.s32.totalorder %s29, 0
      %p159 = por %p157, %p158
      %p160 = scmp.ne.s32.totalorder %s152, %s154
      %p161 = scmp.eq.s32.totalorder %s34, 1
      %p162 = por %p160, %p161
      %p163 = scmp.ne.s32.totalorder %s154, %s155
      %p164 = scmp.eq.s32.totalorder %s34, 0
      %p165 = por %p163, %p164
      %p166 = scmp.ne.s32.totalorder %s154, %s155
      %p167 = scmp.eq.s32.totalorder %s35, 1
      %p168 = por %p166, %p167
      %p170 = scmp.ne.s32.totalorder %s155, %s169
      %p171 = scmp.eq.s32.totalorder %s35, 0
      %p172 = por %p170, %p171
      %s174 = sadd.s32 %s173, 1
      %p177 = scmp.eq.s32.totalorder %s29, 1
      %p178 = scmp.ne.s32.totalorder %s173, %s175
      %p179 = scmp.eq.s32.totalorder %s29, 0
      %p180 = por %p178, %p179
      %p181 = scmp.ne.s32.totalorder %s173, %s175
      %p182 = scmp.eq.s32.totalorder %s34, 1
      %p183 = por %p181, %p182
      %p184 = scmp.ne.s32.totalorder %s175, %s176
      %p185 = scmp.eq.s32.totalorder %s34, 0
      %p186 = por %p184, %p185
      %p187 = scmp.ne.s32.totalorder %s175, %s176
      %p188 = scmp.eq.s32.totalorder %s35, 1
      %p189 = por %p187, %p188
      %p191 = scmp.ne.s32.totalorder %s176, %s190
      %p192 = scmp.eq.s32.totalorder %s35, 0
      %p193 = por %p191, %p192
      %s195 = sadd.s32 %s194, 1
      %p198 = scmp.eq.s32.totalorder %s29, 1
      %p199 = scmp.ne.s32.totalorder %s194, %s196
      %p200 = scmp.eq.s32.totalorder %s29, 0
      %p201 = por %p199, %p200
      %p202 = scmp.ne.s32.totalorder %s194, %s196
      %p203 = scmp.eq.s32.totalorder %s34, 1
      %p204 = por %p202, %p203
      %p205 = scmp.ne.s32.totalorder %s196, %s197
      %p206 = scmp.eq.s32.totalorder %s34, 0
      %p207 = por %p205, %p206
      %p208 = scmp.ne.s32.totalorder %s196, %s197
      %p209 = scmp.eq.s32.totalorder %s35, 1
      %p210 = por %p208, %p209
      %p212 = scmp.ne.s32.totalorder %s197, %s211
      %p213 = scmp.eq.s32.totalorder %s35, 0
      %p214 = por %p212, %p213
      %s216 = sadd.s32 %s215, 1
      %p219 = scmp.eq.s32.totalorder %s29, 1
      %p220 = scmp.ne.s32.totalorder %s215, %s217
      %p221 = scmp.eq.s32.totalorder %s29, 0
      %p222 = por %p220, %p221
      %p223 = scmp.ne.s32.totalorder %s215, %s217
      %p224 = scmp.eq.s32.totalorder %s34, 1
      %p225 = por %p223, %p224
      %p226 = scmp.ne.s32.totalorder %s217, %s218
      %p227 = scmp.eq.s32.totalorder %s34, 0
      %p228 = por %p226, %p227
      %p229 = scmp.ne.s32.totalorder %s217, %s218
      %p230 = scmp.eq.s32.totalorder %s35, 1
      %p231 = por %p229, %p230
      %p233 = scmp.ne.s32.totalorder %s218, %s232
      %p234 = scmp.eq.s32.totalorder %s35, 0
      %p235 = por %p233, %p234
      %s237 = sadd.s32 %s236, 1
      %p240 = scmp.eq.s32.totalorder %s29, 1
      %p241 = scmp.ne.s32.totalorder %s236, %s238
      %p242 = scmp.eq.s32.totalorder %s29, 0
      %p243 = por %p241, %p242
      %p244 = scmp.ne.s32.totalorder %s236, %s238
      %p245 = scmp.eq.s32.totalorder %s34, 1
      %p246 = por %p244, %p245
      %p247 = scmp.ne.s32.totalorder %s238, %s239
      %p248 = scmp.eq.s32.totalorder %s34, 0
      %p249 = por %p247, %p248
      %p250 = scmp.ne.s32.totalorder %s238, %s239
      %p251 = scmp.eq.s32.totalorder %s35, 1
      %p252 = por %p250, %p251
      %p254 = scmp.ne.s32.totalorder %s239, %s253
      %p255 = scmp.eq.s32.totalorder %s35, 0
      %p256 = por %p254, %p255
      %s258 = sadd.s32 %s257, 1
      %p261 = scmp.eq.s32.totalorder %s29, 1
      %p262 = scmp.ne.s32.totalorder %s257, %s259
      %p263 = scmp.eq.s32.totalorder %s29, 0
      %p264 = por %p262, %p263
      %p265 = scmp.ne.s32.totalorder %s257, %s259
      %p266 = scmp.eq.s32.totalorder %s34, 1
      %p267 = por %p265, %p266
      %p268 = scmp.ne.s32.totalorder %s259, %s260
      %p269 = scmp.eq.s32.totalorder %s34, 0
      %p270 = por %p268, %p269
      %p271 = scmp.ne.s32.totalorder %s259, %s260
      %p272 = scmp.eq.s32.totalorder %s35, 1
      %p273 = por %p271, %p272
      %p275 = scmp.ne.s32.totalorder %s260, %s274
      %p276 = scmp.eq.s32.totalorder %s35, 0
      %p277 = por %p275, %p276
      %s279 = sadd.s32 %s278, 1
      %p282 = scmp.eq.s32.totalorder %s29, 1
      %p283 = scmp.ne.s32.totalorder %s278, %s280
      %p284 = scmp.eq.s32.totalorder %s29, 0
      %p285 = por %p283, %p284
      %p286 = scmp.ne.s32.totalorder %s278, %s280
      %p287 = scmp.eq.s32.totalorder %s34, 1
      %p288 = por %p286, %p287
      %p289 = scmp.ne.s32.totalorder %s280, %s281
      %p290 = scmp.eq.s32.totalorder %s34, 0
      %p291 = por %p289, %p290
      %p292 = scmp.ne.s32.totalorder %s280, %s281
      %p293 = scmp.eq.s32.totalorder %s35, 1
      %p294 = por %p292, %p293
      %p296 = scmp.ne.s32.totalorder %s281, %s295
      %p297 = scmp.eq.s32.totalorder %s35, 0
      %p298 = por %p296, %p297
      %s300 = sadd.s32 %s299, 1
      %p303 = scmp.eq.s32.totalorder %s29, 1
      %p304 = scmp.ne.s32.totalorder %s299, %s301
      %p305 = scmp.eq.s32.totalorder %s29, 0
      %p306 = por %p304, %p305
      %p307 = scmp.ne.s32.totalorder %s299, %s301
      %p308 = scmp.eq.s32.totalorder %s34, 1
      %p309 = por %p307, %p308
      %p310 = scmp.ne.s32.totalorder %s301, %s302
      %p311 = scmp.eq.s32.totalorder %s34, 0
      %p312 = por %p310, %p311
      %p313 = scmp.ne.s32.totalorder %s301, %s302
      %p314 = scmp.eq.s32.totalorder %s35, 1
      %p315 = por %p313, %p314
      %p317 = scmp.ne.s32.totalorder %s302, %s316
      %p318 = scmp.eq.s32.totalorder %s35, 0
      %p319 = por %p317, %p318
      %s321 = sadd.s32 %s320, 1
      %p324 = scmp.eq.s32.totalorder %s29, 1
      %p325 = scmp.ne.s32.totalorder %s320, %s322
      %p326 = scmp.eq.s32.totalorder %s29, 0
      %p327 = por %p325, %p326
      %p328 = scmp.ne.s32.totalorder %s320, %s322
      %p329 = scmp.eq.s32.totalorder %s34, 1
      %p330 = por %p328, %p329
      %p331 = scmp.ne.s32.totalorder %s322, %s323
      %p332 = scmp.eq.s32.totalorder %s34, 0
      %p333 = por %p331, %p332
      %p334 = scmp.ne.s32.totalorder %s322, %s323
      %p335 = scmp.eq.s32.totalorder %s35, 1
      %p336 = por %p334, %p335
      %p338 = scmp.ne.s32.totalorder %s323, %s337
      %p339 = scmp.eq.s32.totalorder %s35, 0
      %p340 = por %p338, %p339
      %s342 = sadd.s32 %s341, 1
      %p345 = scmp.eq.s32.totalorder %s29, 1
      %p346 = scmp.ne.s32.totalorder %s341, %s343
      %p347 = scmp.eq.s32.totalorder %s29, 0
      %p348 = por %p346, %p347
      %p349 = scmp.ne.s32.totalorder %s341, %s343
      %p350 = scmp.eq.s32.totalorder %s34, 1
      %p351 = por %p349, %p350
      %p352 = scmp.ne.s32.totalorder %s343, %s344
      %p353 = scmp.eq.s32.totalorder %s34, 0
      %p354 = por %p352, %p353
      %p355 = scmp.ne.s32.totalorder %s343, %s344
      %p356 = scmp.eq.s32.totalorder %s35, 1
      %p357 = por %p355, %p356
      %p359 = scmp.ne.s32.totalorder %s344, %s358
      %p360 = scmp.eq.s32.totalorder %s35, 0
      %p361 = por %p359, %p360
      %s363 = sadd.s32 %s362, 1
      %p366 = scmp.eq.s32.totalorder %s29, 1
      %p367 = scmp.ne.s32.totalorder %s362, %s364
      %p368 = scmp.eq.s32.totalorder %s29, 0
      %p369 = por %p367, %p368
      %p370 = scmp.ne.s32.totalorder %s362, %s364
      %p371 = scmp.eq.s32.totalorder %s34, 1
      %p372 = por %p370, %p371
      %p373 = scmp.ne.s32.totalorder %s364, %s365
      %p374 = scmp.eq.s32.totalorder %s34, 0
      %p375 = por %p373, %p374
      %p376 = scmp.ne.s32.totalorder %s364, %s365
      %p377 = scmp.eq.s32.totalorder %s35, 1
      %p378 = por %p376, %p377
      %p380 = scmp.ne.s32.totalorder %s365, %s379
      %p381 = scmp.eq.s32.totalorder %s35, 0
      %p382 = por %p380, %p381
      %s384 = sadd.s32 %s383, 1
      %p387 = scmp.eq.s32.totalorder %s29, 1
      %p388 = scmp.ne.s32.totalorder %s383, %s385
      %p389 = scmp.eq.s32.totalorder %s29, 0
      %p390 = por %p388, %p389
      %p391 = scmp.ne.s32.totalorder %s383, %s385
      %p392 = scmp.eq.s32.totalorder %s34, 1
      %p393 = por %p391, %p392
      %p394 = scmp.ne.s32.totalorder %s385, %s386
      %p395 = scmp.eq.s32.totalorder %s34, 0
      %p396 = por %p394, %p395
      %p397 = scmp.ne.s32.totalorder %s385, %s386
      %p398 = scmp.eq.s32.totalorder %s35, 1
      %p399 = por %p397, %p398
      %p401 = scmp.ne.s32.totalorder %s386, %s400
      %p402 = scmp.eq.s32.totalorder %s35, 0
      %p403 = por %p401, %p402
      %s405 = sadd.s32 %s404, 1
      %p408 = scmp.eq.s32.totalorder %s29, 1
      %p409 = scmp.ne.s32.totalorder %s404, %s406
      %p410 = scmp.eq.s32.totalorder %s29, 0
      %p411 = por %p409, %p410
      %p412 = scmp.ne.s32.totalorder %s404, %s406
      %p413 = scmp.eq.s32.totalorder %s34, 1
      %p414 = por %p412, %p413
      %p415 = scmp.ne.s32.totalorder %s406, %s407
      %p416 = scmp.eq.s32.totalorder %s34, 0
      %p417 = por %p415, %p416
      %p418 = scmp.ne.s32.totalorder %s406, %s407
      %p419 = scmp.eq.s32.totalorder %s35, 1
      %p420 = por %p418, %p419
      %p422 = scmp.ne.s32.totalorder %s407, %s421
      %p423 = scmp.eq.s32.totalorder %s35, 0
      %p424 = por %p422, %p423
      %s426 = sadd.s32 %s425, 1
      %p429 = scmp.eq.s32.totalorder %s29, 1
      %p430 = scmp.ne.s32.totalorder %s425, %s427
      %p431 = scmp.eq.s32.totalorder %s29, 0
      %p432 = por %p430, %p431
      %p433 = scmp.ne.s32.totalorder %s425, %s427
      %p434 = scmp.eq.s32.totalorder %s34, 1
      %p435 = por %p433, %p434
      %p436 = scmp.ne.s32.totalorder %s427, %s428
      %p437 = scmp.eq.s32.totalorder %s34, 0
      %p438 = por %p436, %p437
      %p439 = scmp.ne.s32.totalorder %s427, %s428
      %p440 = scmp.eq.s32.totalorder %s35, 1
      %p441 = por %p439, %p440
      %p443 = scmp.ne.s32.totalorder %s428, %s442
      %p444 = scmp.eq.s32.totalorder %s35, 0
      %p445 = por %p443, %p444
      %s447 = sadd.s32 %s446, 1
      %p450 = scmp.eq.s32.totalorder %s29, 1
      %p451 = scmp.ne.s32.totalorder %s446, %s448
      %p452 = scmp.eq.s32.totalorder %s29, 0
      %p453 = por %p451, %p452
      %p454 = scmp.ne.s32.totalorder %s446, %s448
      %p455 = scmp.eq.s32.totalorder %s34, 1
      %p456 = por %p454, %p455
      %p457 = scmp.ne.s32.totalorder %s448, %s449
      %p458 = scmp.eq.s32.totalorder %s34, 0
      %p459 = por %p457, %p458
      %p460 = scmp.ne.s32.totalorder %s448, %s449
      %p461 = scmp.eq.s32.totalorder %s35, 1
      %p462 = por %p460, %p461
      %p464 = scmp.ne.s32.totalorder %s449, %s463
      %p465 = scmp.eq.s32.totalorder %s35, 0
      %p466 = por %p464, %p465
      %s467 = ssub.s32 %s29, %s36
      %p468 = scmp.eq.s32.totalorder %s467, 0
      %s470 = sadd.s32 %s469, 1
      %s471 = scalar_select %p468, %s469, %s470
      %p474 = pneg %p468
      %p475 = scmp.eq.s32.totalorder %s29, 1
      %p476 = por %p474, %p475
      %p477 = scmp.ne.s32.totalorder %s469, %s472
      %p478 = scmp.eq.s32.totalorder %s29, 0
      %p479 = por %p477, %p478
      %p480 = scmp.ne.s32.totalorder %s469, %s472
      %p481 = scmp.eq.s32.totalorder %s34, 1
      %p482 = por %p480, %p481
      %p483 = scmp.ne.s32.totalorder %s472, %s473
      %p484 = scmp.eq.s32.totalorder %s34, 0
      %p485 = por %p483, %p484
      %p486 = scmp.ne.s32.totalorder %s472, %s473
      %p487 = scmp.eq.s32.totalorder %s35, 1
      %p488 = por %p486, %p487
      %p490 = scmp.ne.s32.totalorder %s473, %s489
      %p491 = scmp.eq.s32.totalorder %s35, 0
      %p492 = por %p490, %p491
      %p493 = scmp.le.s32.totalorder 1, %s29
      %p494 = scmp.lt.s32.totalorder %s29, 3
      %p495 = pnand %p493, %p494
      %p496 = pneg %p495
      // Predicated region
      $region9: #{tpu_custom_call.1} parent=5 // pred_check
        _
      $region10: #{tpu_custom_call.1} parent=5 // pred_check_branch
        %498 = sbr.rel (%p495) target = $region12
      $region11: #{tpu_custom_call.1} parent=5 // pred_region
        %s499 = ssub.s32 %s29, 1
        // Predicated region
        $region13: #{tpu_custom_call.1} parent=11 // pred_check
          %p500 = pneg %p102
        $region14: #{tpu_custom_call.1} parent=11 // pred_check_branch
          %502 = sbr.rel (%p500) target = $region16
        $region15: #{tpu_custom_call.1} parent=11 // pred_region
          _
        $region16: #{tpu_custom_call.1} parent=11 // pred_fallthru
          _
        // Predicated region
        $region17: #{tpu_custom_call.1} parent=11 // pred_check
          %p503 = pneg %p123
        $region18: #{tpu_custom_call.1} parent=11 // pred_check_branch
          %505 = sbr.rel (%p503) target = $region20
        $region19: #{tpu_custom_call.1} parent=11 // pred_region
          _
        $region20: #{tpu_custom_call.1} parent=11 // pred_fallthru
          _
        // Predicated region
        $region21: #{tpu_custom_call.1} parent=11 // pred_check
          %p506 = pneg %p144
        $region22: #{tpu_custom_call.1} parent=11 // pred_check_branch
          %508 = sbr.rel (%p506) target = $region24
        $region23: #{tpu_custom_call.1} parent=11 // pred_region
          _
        $region24: #{tpu_custom_call.1} parent=11 // pred_fallthru
          _
        // Predicated region
        $region25: #{tpu_custom_call.1} parent=11 // pred_check
          %p509 = pneg %p165
        $region26: #{tpu_custom_call.1} parent=11 // pred_check_branch
          %511 = sbr.rel (%p509) target = $region28
        $region27: #{tpu_custom_call.1} parent=11 // pred_region
          _
        $region28: #{tpu_custom_call.1} parent=11 // pred_fallthru
          _
        // Predicated region
        $region29: #{tpu_custom_call.1} parent=11 // pred_check
          %p512 = pneg %p186
        $region30: #{tpu_custom_call.1} parent=11 // pred_check_branch
          %514 = sbr.rel (%p512) target = $region32
        $region31: #{tpu_custom_call.1} parent=11 // pred_region
          _
        $region32: #{tpu_custom_call.1} parent=11 // pred_fallthru
          _
        // Predicated region
        $region33: #{tpu_custom_call.1} parent=11 // pred_check
          %p515 = pneg %p207
        $region34: #{tpu_custom_call.1} parent=11 // pred_check_branch
          %517 = sbr.rel (%p515) target = $region36
        $region35: #{tpu_custom_call.1} parent=11 // pred_region
          _
        $region36: #{tpu_custom_call.1} parent=11 // pred_fallthru
          _
        // Predicated region
        $region37: #{tpu_custom_call.1} parent=11 // pred_check
          %p518 = pneg %p228
        $region38: #{tpu_custom_call.1} parent=11 // pred_check_branch
          %520 = sbr.rel (%p518) target = $region40
        $region39: #{tpu_custom_call.1} parent=11 // pred_region
          _
        $region40: #{tpu_custom_call.1} parent=11 // pred_fallthru
          _
        // Predicated region
        $region41: #{tpu_custom_call.1} parent=11 // pred_check
          %p521 = pneg %p249
        $region42: #{tpu_custom_call.1} parent=11 // pred_check_branch
          %523 = sbr.rel (%p521) target = $region44
        $region43: #{tpu_custom_call.1} parent=11 // pred_region
          _
        $region44: #{tpu_custom_call.1} parent=11 // pred_fallthru
          _
        // Predicated region
        $region45: #{tpu_custom_call.1} parent=11 // pred_check
          %p524 = pneg %p270
        $region46: #{tpu_custom_call.1} parent=11 // pred_check_branch
          %526 = sbr.rel (%p524) target = $region48
        $region47: #{tpu_custom_call.1} parent=11 // pred_region
          _
        $region48: #{tpu_custom_call.1} parent=11 // pred_fallthru
          _
        // Predicated region
        $region49: #{tpu_custom_call.1} parent=11 // pred_check
          %p527 = pneg %p291
        $region50: #{tpu_custom_call.1} parent=11 // pred_check_branch
          %529 = sbr.rel (%p527) target = $region52
        $region51: #{tpu_custom_call.1} parent=11 // pred_region
          _
        $region52: #{tpu_custom_call.1} parent=11 // pred_fallthru
          _
        // Predicated region
        $region53: #{tpu_custom_call.1} parent=11 // pred_check
          %p530 = pneg %p312
        $region54: #{tpu_custom_call.1} parent=11 // pred_check_branch
          %532 = sbr.rel (%p530) target = $region56
        $region55: #{tpu_custom_call.1} parent=11 // pred_region
          _
        $region56: #{tpu_custom_call.1} parent=11 // pred_fallthru
          _
        // Predicated region
        $region57: #{tpu_custom_call.1} parent=11 // pred_check
          %p533 = pneg %p333
        $region58: #{tpu_custom_call.1} parent=11 // pred_check_branch
          %535 = sbr.rel (%p533) target = $region60
        $region59: #{tpu_custom_call.1} parent=11 // pred_region
          _
        $region60: #{tpu_custom_call.1} parent=11 // pred_fallthru
          _
        // Predicated region
        $region61: #{tpu_custom_call.1} parent=11 // pred_check
          %p536 = pneg %p354
        $region62: #{tpu_custom_call.1} parent=11 // pred_check_branch
          %538 = sbr.rel (%p536) target = $region64
        $region63: #{tpu_custom_call.1} parent=11 // pred_region
          _
        $region64: #{tpu_custom_call.1} parent=11 // pred_fallthru
          _
        // Predicated region
        $region65: #{tpu_custom_call.1} parent=11 // pred_check
          %p539 = pneg %p375
        $region66: #{tpu_custom_call.1} parent=11 // pred_check_branch
          %541 = sbr.rel (%p539) target = $region68
        $region67: #{tpu_custom_call.1} parent=11 // pred_region
          _
        $region68: #{tpu_custom_call.1} parent=11 // pred_fallthru
          _
        // Predicated region
        $region69: #{tpu_custom_call.1} parent=11 // pred_check
          %p542 = pneg %p396
        $region70: #{tpu_custom_call.1} parent=11 // pred_check_branch
          %544 = sbr.rel (%p542) target = $region72
        $region71: #{tpu_custom_call.1} parent=11 // pred_region
          _
        $region72: #{tpu_custom_call.1} parent=11 // pred_fallthru
          _
        // Predicated region
        $region73: #{tpu_custom_call.1} parent=11 // pred_check
          %p545 = pneg %p417
        $region74: #{tpu_custom_call.1} parent=11 // pred_check_branch
          %547 = sbr.rel (%p545) target = $region76
        $region75: #{tpu_custom_call.1} parent=11 // pred_region
          _
        $region76: #{tpu_custom_call.1} parent=11 // pred_fallthru
          _
        // Predicated region
        $region77: #{tpu_custom_call.1} parent=11 // pred_check
          %p548 = pneg %p438
        $region78: #{tpu_custom_call.1} parent=11 // pred_check_branch
          %550 = sbr.rel (%p548) target = $region80
        $region79: #{tpu_custom_call.1} parent=11 // pred_region
          _
        $region80: #{tpu_custom_call.1} parent=11 // pred_fallthru
          _
        // Predicated region
        $region81: #{tpu_custom_call.1} parent=11 // pred_check
          %p551 = pneg %p459
        $region82: #{tpu_custom_call.1} parent=11 // pred_check_branch
          %553 = sbr.rel (%p551) target = $region84
        $region83: #{tpu_custom_call.1} parent=11 // pred_region
          _
        $region84: #{tpu_custom_call.1} parent=11 // pred_fallthru
          _
      $region12: #{tpu_custom_call.1} parent=5 // pred_fallthru
        _
      %p554 = scmp.lt.s32.totalorder %s29, 2
      // Predicated region
      $region85: #{tpu_custom_call.1} parent=5 // pred_check
        %p555 = pneg %p554
      $region86: #{tpu_custom_call.1} parent=5 // pred_check_branch
        %557 = sbr.rel (%p555) target = $region88
      $region87: #{tpu_custom_call.1} parent=5 // pred_region
        // Predicated region
        $region89: #{tpu_custom_call.1} parent=87 // pred_check
          %p558 = pneg %p49
        $region90: #{tpu_custom_call.1} parent=87 // pred_check_branch
          %560 = sbr.rel (%p558) target = $region92
        $region91: #{tpu_custom_call.1} parent=87 // pred_region
          %p561 = scmp.lt.s32.totalorder %s29, 1
          %s562 = scalar_select %p561, %s29, 1
          %s563 = smul.addr %s562, 8
          %s564 = scalar_lea.vmem %s0, %s563
        $region92: #{tpu_custom_call.1} parent=87 // pred_fallthru
          _
        // Predicated region
        $region93: #{tpu_custom_call.1} parent=87 // pred_check
          %p565 = pneg %p75
        $region94: #{tpu_custom_call.1} parent=87 // pred_check_branch
          %567 = sbr.rel (%p565) target = $region96
        $region95: #{tpu_custom_call.1} parent=87 // pred_region
          %p568 = scmp.lt.s32.totalorder %s29, 1
          %s569 = scalar_select %p568, %s29, 1
          %s570 = scalar_lea.vmem %s1, %s569
        $region96: #{tpu_custom_call.1} parent=87 // pred_fallthru
          _
      $region88: #{tpu_custom_call.1} parent=5 // pred_fallthru
        _
      %p571 = scmp.le.s32.totalorder 1, %s29
      %p572 = scmp.lt.s32.totalorder %s29, 3
      %p573 = pnand %p571, %p572
      %p574 = pneg %p573
      // Predicated region
      $region97: #{tpu_custom_call.1} parent=5 // pred_check
        _
      $region98: #{tpu_custom_call.1} parent=5 // pred_check_branch
        %576 = sbr.rel (%p573) target = $region100
      $region99: #{tpu_custom_call.1} parent=5 // pred_region
        %s577 = ssub.s32 %s29, 1
        %p578 = scmp.lt.s32.totalorder %s34, 1
        %s579 = scalar_select %p578, %s34, 1
        %s580 = smul.addr %s579, 8
        %s581 = scalar_lea.vmem %s0, %s580
        %p582 = pneg %p55
        %p583 = pneg %p52
        %p584 = scmp.lt.s32.totalorder %s34, 1
        %s585 = scalar_select %p584, %s34, 1
        %s586 = scalar_lea.vmem %s1, %s585
        %p587 = pneg %p81
        %p588 = pneg %p78
        %p589 = pneg %p102
        %p590 = pneg %p99
        %p591 = pneg %p123
        %p592 = pneg %p120
        %p593 = pneg %p144
        %p594 = pneg %p141
        %p595 = pneg %p165
        %p596 = pneg %p162
        %p597 = pneg %p186
        %p598 = pneg %p183
        %p599 = pneg %p207
        %p600 = pneg %p204
        %p601 = pneg %p228
        %p602 = pneg %p225
        %p603 = pneg %p249
        %p604 = pneg %p246
        %p605 = pneg %p270
        %p606 = pneg %p267
        %p607 = pneg %p291
        %p608 = pneg %p288
        %p609 = pneg %p312
        %p610 = pneg %p309
        %p611 = pneg %p333
        %p612 = pneg %p330
        %p613 = pneg %p354
        %p614 = pneg %p351
        %p615 = pneg %p375
        %p616 = pneg %p372
        %p617 = pneg %p396
        %p618 = pneg %p393
        %p619 = pneg %p417
        %p620 = pneg %p414
        %p621 = pneg %p438
        %p622 = pneg %p435
        %p623 = pneg %p459
        %p624 = pneg %p456
        %p625 = pneg %p485
        %p626 = pneg %p482
        %s627 = sand.u32 %s472, 1
        %s628 = scalar_lea.sflag [#allocation3], %s627
        %s629 = sand.u32 %s472, 1
        %s630 = scalar_lea.vmem [#allocation2], %s629
        %p631 = scmp.lt.s32.totalorder %s34, 1
        %s632 = scalar_select %p631, %s34, 1
        %s633 = smul.addr %s632, 8
        %s634 = scalar_lea.vmem %s0, %s633
        %p635 = scmp.lt.s32.totalorder %s34, 1
        %s636 = scalar_select %p635, %s34, 1
        %s637 = scalar_lea.vmem %s1, %s636
        %v639 = vld [vmem:[%s634] sm:$0xff]
        %v640 = vld [vmem:[%s2] sm:$0x1]
        %v641 = vld [vmem:[%s3] sm:$0x1]
        %vm642 = vcmask 261120
        %v643 = vsel %vm642, %v639, 0.0
        %644 = vadd.xlane.f32.xlu0 %v643
        %v645 = vpop.xlane.xlu0 %644
        %v646 = vrcp.pop 32.0
        %v647 = vmul.f32 %v645, %v646
        %v648 = vsub.f32 %v639, %v647
        %v649 = vmul.f32 %v648, %v648
        %v650 = vsel %vm642, %v649, 0.0
        %651 = vadd.xlane.f32.xlu0 %v650
        %v652 = vpop.xlane.xlu0 %651
        %v653 = vmul.f32 %v652, %v646
        %v654 = vadd.f32 %v653, 1e-12
        %v655 = vrsqrt.pop %v654
        %v656 = vmul.f32 %v648, %v655
        %v658 = vlaneseq
        %v659 = vshrl.u32 %v658, 7
        %v660 = vsub.s32 0, %v659
        %v661 = vrot.slane %v640, %v660
        %v663 = vmul.f32 %v656, %v661
        %v665 = vlaneseq
        %v666 = vshrl.u32 %v665, 7
        %v667 = vsub.s32 0, %v666
        %v668 = vrot.slane %v641, %v667
        %v670 = vadd.f32 %v663, %v668
        %v671 = vld [vmem:[%s637] sm:$0x1]
        %v672 = vpack.c.bf16 %v670, %v670
        %v673 = vld [vmem:[%s4] sm:$0xf]
        %v674 = vld [vmem:[%s4 + $0x4] sm:$0xf]
        %v675 = vld [vmem:[%s4 + $0x8] sm:$0xf]
        %v676 = vld [vmem:[%s4 + $0xc] sm:$0xf]
        %v677 = vld [vmem:[%s4 + $0x10] sm:$0xf]
        %v678 = vld [vmem:[%s4 + $0x14] sm:$0xf]
        %v679 = vld [vmem:[%s4 + $0x18] sm:$0xf]
        %v680 = vld [vmem:[%s4 + $0x1c] sm:$0xf]
        %v681 = vld [vmem:[%s4 + $0x20] sm:$0xf]
        %v682 = vld [vmem:[%s4 + $0x24] sm:$0xf]
        %v683 = vld [vmem:[%s4 + $0x28] sm:$0xf]
        %v684 = vld [vmem:[%s4 + $0x2c] sm:$0xf]
        %v685 = vld [vmem:[%s4 + $0x30] sm:$0xf]
        %v686 = vld [vmem:[%s4 + $0x34] sm:$0xf]
        %v687 = vld [vmem:[%s4 + $0x38] sm:$0xf]
        %v688 = vld [vmem:[%s4 + $0x3c] sm:$0xf]
        %v689 = vld [vmem:[%s4 + $0x40] sm:$0xf]
        %v690 = vld [vmem:[%s4 + $0x44] sm:$0xf]
        %v691 = vld [vmem:[%s4 + $0x48] sm:$0xf]
        %v692 = vld [vmem:[%s4 + $0x4c] sm:$0xf]
        %v693 = vld [vmem:[%s4 + $0x50] sm:$0xf]
        %v694 = vld [vmem:[%s4 + $0x54] sm:$0xf]
        %v695 = vld [vmem:[%s4 + $0x58] sm:$0xf]
        %v696 = vld [vmem:[%s4 + $0x5c] sm:$0xf]
        %v697 = vld [vmem:[%s5] sm:$0x1]
        %v698 = vld [vmem:[%s5 + $0x1] sm:$0x1]
        %v699 = vld [vmem:[%s5 + $0x2] sm:$0x1]
        %v700 = vld [vmem:[%s5 + $0x3] sm:$0x1]
        %v701 = vld [vmem:[%s5 + $0x4] sm:$0x1]
        %v702 = vld [vmem:[%s5 + $0x5] sm:$0x1]
        %v709 = vlaneseq
        %v710 = vshrl.u32 %v709, 7
        %v711 = vsub.s32 0, %v710
        %v712 = vrot.slane %v697, %v711
        %v713 = vlaneseq
        %v714 = vshrl.u32 %v713, 7
        %v715 = vsub.s32 0, %v714
        %v716 = vrot.slane %v698, %v715
        %v717 = vlaneseq
        %v718 = vshrl.u32 %v717, 7
        %v719 = vsub.s32 0, %v718
        %v720 = vrot.slane %v699, %v719
        %v721 = vlaneseq
        %v722 = vshrl.u32 %v721, 7
        %v723 = vsub.s32 0, %v722
        %v724 = vrot.slane %v700, %v723
        %v725 = vlaneseq
        %v726 = vshrl.u32 %v725, 7
        %v727 = vsub.s32 0, %v726
        %v728 = vrot.slane %v701, %v727
        %v729 = vlaneseq
        %v730 = vshrl.u32 %v729, 7
        %v731 = vsub.s32 0, %v730
        %v732 = vrot.slane %v702, %v731
        %v743 = vunpack.c.l.b16 %v673
        %v744 = vunpack.c.l.b16 %v674
        %v745 = vunpack.c.l.b16 %v675
        %v746 = vunpack.c.l.b16 %v676
        %v747 = vpack.c.b16 %v744, %v743
        %v748 = vpack.c.b16 %v746, %v745
        %v752 = vsel %vm642, %v672, 0
        %754 = vmatprep.subr.bf16.mxu0 0
        %755 = vmatpush1.bf16.msra.mxu0 0
        %756 = vmatprep.subr.bf16.mxu0 0
        %757 = vmatpush1.bf16.msra.mxu0 0
        %758 = vmatprep.subr.bf16.mxu0 0
        %759 = vmatpush1.bf16.msra.mxu0 0
        %760 = vmatprep.subr.bf16.mxu0 0
        %761 = vmatpush1.bf16.msra.mxu0 0
        %762 = vmatprep.subr.bf16.mxu0 0
        %763 = vmatpush1.bf16.msra.mxu0 0
        %764 = vmatprep.subr.bf16.mxu0 0
        %765 = vmatpush1.bf16.msra.mxu0 0
        %766 = vmatprep.subr.bf16.mxu0 0
        %767 = vmatpush1.bf16.msra.mxu0 %v748
        %768 = vmatprep.subr.bf16.mxu0 0
        %769 = vmatpush1.bf16.msra.mxu0 %v747
        %770 = vmatprep.subr.bf16.mxu0 0
        %771 = vmatpush2.bf16.msra.mxu0 0
        %772 = vmatprep.subr.bf16.mxu0 0
        %773 = vmatpush2.bf16.msra.mxu0 0
        %774 = vmatprep.subr.bf16.mxu0 0
        %775 = vmatpush2.bf16.msra.mxu0 0
        %776 = vmatprep.subr.bf16.mxu0 0
        %777 = vmatpush2.bf16.msra.mxu0 0
        %778 = vmatprep.subr.bf16.mxu0 0
        %779 = vmatpush2.bf16.msra.mxu0 0
        %780 = vmatprep.subr.bf16.mxu0 0
        %781 = vmatpush2.bf16.msra.mxu0 0
        %782 = vmatprep.subr.bf16.mxu0 0
        %783 = vmatpush2.bf16.msra.mxu0 0
        %784 = vmatprep.subr.bf16.mxu0 0
        %785 = vmatpush2.bf16.msra.mxu0 0
        %786 = vmatprep.mubr.bf16.mxu0 0
        %787 = vmatmul.mubr.bf16.gmra.mxu0 %v752
        %v788 = vpop.f32.mrf.mxu0
        %v789 = vadd.f32 %v712, %v788
        %v790 = vpop.f32.mrf.mxu0
        %v791 = vpop.f32.mrf.mxu0
        %v792 = vpop.f32.mrf.mxu0
        %793 = vdwg.mxu0
        %v798 = vunpack.c.l.b16 %v677
        %v799 = vunpack.c.l.b16 %v678
        %v800 = vunpack.c.l.b16 %v679
        %v801 = vunpack.c.l.b16 %v680
        %v802 = vpack.c.b16 %v799, %v798
        %v803 = vpack.c.b16 %v801, %v800
        %806 = vmatprep.subr.bf16.mxu0 0
        %807 = vmatpush1.bf16.msra.mxu0 0
        %808 = vmatprep.subr.bf16.mxu0 0
        %809 = vmatpush1.bf16.msra.mxu0 0
        %810 = vmatprep.subr.bf16.mxu0 0
        %811 = vmatpush1.bf16.msra.mxu0 0
        %812 = vmatprep.subr.bf16.mxu0 0
        %813 = vmatpush1.bf16.msra.mxu0 0
        %814 = vmatprep.subr.bf16.mxu0 0
        %815 = vmatpush1.bf16.msra.mxu0 0
        %816 = vmatprep.subr.bf16.mxu0 0
        %817 = vmatpush1.bf16.msra.mxu0 0
        %818 = vmatprep.subr.bf16.mxu0 0
        %819 = vmatpush1.bf16.msra.mxu0 %v803
        %820 = vmatprep.subr.bf16.mxu0 0
        %821 = vmatpush1.bf16.msra.mxu0 %v802
        %822 = vmatprep.subr.bf16.mxu0 0
        %823 = vmatpush2.bf16.msra.mxu0 0
        %824 = vmatprep.subr.bf16.mxu0 0
        %825 = vmatpush2.bf16.msra.mxu0 0
        %826 = vmatprep.subr.bf16.mxu0 0
        %827 = vmatpush2.bf16.msra.mxu0 0
        %828 = vmatprep.subr.bf16.mxu0 0
        %829 = vmatpush2.bf16.msra.mxu0 0
        %830 = vmatprep.subr.bf16.mxu0 0
        %831 = vmatpush2.bf16.msra.mxu0 0
        %832 = vmatprep.subr.bf16.mxu0 0
        %833 = vmatpush2.bf16.msra.mxu0 0
        %834 = vmatprep.subr.bf16.mxu0 0
        %835 = vmatpush2.bf16.msra.mxu0 0
        %836 = vmatprep.subr.bf16.mxu0 0
        %837 = vmatpush2.bf16.msra.mxu0 0
        %838 = vmatprep.mubr.bf16.mxu0 0
        %839 = vmatmul.mubr.bf16.gmra.mxu0 %v752
        %v840 = vpop.f32.mrf.mxu0
        %v841 = vadd.f32 %v716, %v840
        %v842 = vpop.f32.mrf.mxu0
        %v843 = vpop.f32.mrf.mxu0
        %v844 = vpop.f32.mrf.mxu0
        %845 = vdwg.mxu0
        %v850 = vunpack.c.l.b16 %v681
        %v851 = vunpack.c.l.b16 %v682
        %v852 = vunpack.c.l.b16 %v683
        %v853 = vunpack.c.l.b16 %v684
        %v854 = vpack.c.b16 %v851, %v850
        %v855 = vpack.c.b16 %v853, %v852
        %858 = vmatprep.subr.bf16.mxu0 0
        %859 = vmatpush1.bf16.msra.mxu0 0
        %860 = vmatprep.subr.bf16.mxu0 0
        %861 = vmatpush1.bf16.msra.mxu0 0
        %862 = vmatprep.subr.bf16.mxu0 0
        %863 = vmatpush1.bf16.msra.mxu0 0
        %864 = vmatprep.subr.bf16.mxu0 0
        %865 = vmatpush1.bf16.msra.mxu0 0
        %866 = vmatprep.subr.bf16.mxu0 0
        %867 = vmatpush1.bf16.msra.mxu0 0
        %868 = vmatprep.subr.bf16.mxu0 0
        %869 = vmatpush1.bf16.msra.mxu0 0
        %870 = vmatprep.subr.bf16.mxu0 0
        %871 = vmatpush1.bf16.msra.mxu0 %v855
        %872 = vmatprep.subr.bf16.mxu0 0
        %873 = vmatpush1.bf16.msra.mxu0 %v854
        %874 = vmatprep.subr.bf16.mxu0 0
        %875 = vmatpush2.bf16.msra.mxu0 0
        %876 = vmatprep.subr.bf16.mxu0 0
        %877 = vmatpush2.bf16.msra.mxu0 0
        %878 = vmatprep.subr.bf16.mxu0 0
        %879 = vmatpush2.bf16.msra.mxu0 0
        %880 = vmatprep.subr.bf16.mxu0 0
        %881 = vmatpush2.bf16.msra.mxu0 0
        %882 = vmatprep.subr.bf16.mxu0 0
        %883 = vmatpush2.bf16.msra.mxu0 0
        %884 = vmatprep.subr.bf16.mxu0 0
        %885 = vmatpush2.bf16.msra.mxu0 0
        %886 = vmatprep.subr.bf16.mxu0 0
        %887 = vmatpush2.bf16.msra.mxu0 0
        %888 = vmatprep.subr.bf16.mxu0 0
        %889 = vmatpush2.bf16.msra.mxu0 0
        %890 = vmatprep.mubr.bf16.mxu0 0
        %891 = vmatmul.mubr.bf16.gmra.mxu0 %v752
        %v892 = vpop.f32.mrf.mxu0
        %v893 = vadd.f32 %v720, %v892
        %v894 = vpop.f32.mrf.mxu0
        %v895 = vpop.f32.mrf.mxu0
        %v896 = vpop.f32.mrf.mxu0
        %897 = vdwg.mxu0
        %v902 = vunpack.c.l.b16 %v685
        %v903 = vunpack.c.l.b16 %v686
        %v904 = vunpack.c.l.b16 %v687
        %v905 = vunpack.c.l.b16 %v688
        %v906 = vpack.c.b16 %v903, %v902
        %v907 = vpack.c.b16 %v905, %v904
        %910 = vmatprep.subr.bf16.mxu0 0
        %911 = vmatpush1.bf16.msra.mxu0 0
        %912 = vmatprep.subr.bf16.mxu0 0
        %913 = vmatpush1.bf16.msra.mxu0 0
        %914 = vmatprep.subr.bf16.mxu0 0
        %915 = vmatpush1.bf16.msra.mxu0 0
        %916 = vmatprep.subr.bf16.mxu0 0
        %917 = vmatpush1.bf16.msra.mxu0 0
        %918 = vmatprep.subr.bf16.mxu0 0
        %919 = vmatpush1.bf16.msra.mxu0 0
        %920 = vmatprep.subr.bf16.mxu0 0
        %921 = vmatpush1.bf16.msra.mxu0 0
        %922 = vmatprep.subr.bf16.mxu0 0
        %923 = vmatpush1.bf16.msra.mxu0 %v907
        %924 = vmatprep.subr.bf16.mxu0 0
        %925 = vmatpush1.bf16.msra.mxu0 %v906
        %926 = vmatprep.subr.bf16.mxu0 0
        %927 = vmatpush2.bf16.msra.mxu0 0
        %928 = vmatprep.subr.bf16.mxu0 0
        %929 = vmatpush2.bf16.msra.mxu0 0
        %930 = vmatprep.subr.bf16.mxu0 0
        %931 = vmatpush2.bf16.msra.mxu0 0
        %932 = vmatprep.subr.bf16.mxu0 0
        %933 = vmatpush2.bf16.msra.mxu0 0
        %934 = vmatprep.subr.bf16.mxu0 0
        %935 = vmatpush2.bf16.msra.mxu0 0
        %936 = vmatprep.subr.bf16.mxu0 0
        %937 = vmatpush2.bf16.msra.mxu0 0
        %938 = vmatprep.subr.bf16.mxu0 0
        %939 = vmatpush2.bf16.msra.mxu0 0
        %940 = vmatprep.subr.bf16.mxu0 0
        %941 = vmatpush2.bf16.msra.mxu0 0
        %942 = vmatprep.mubr.bf16.mxu0 0
        %943 = vmatmul.mubr.bf16.gmra.mxu0 %v752
        %v944 = vpop.f32.mrf.mxu0
        %v945 = vadd.f32 %v724, %v944
        %v946 = vpop.f32.mrf.mxu0
        %v947 = vpop.f32.mrf.mxu0
        %v948 = vpop.f32.mrf.mxu0
        %949 = vdwg.mxu0
        %v954 = vunpack.c.l.b16 %v689
        %v955 = vunpack.c.l.b16 %v690
        %v956 = vunpack.c.l.b16 %v691
        %v957 = vunpack.c.l.b16 %v692
        %v958 = vpack.c.b16 %v955, %v954
        %v959 = vpack.c.b16 %v957, %v956
        %962 = vmatprep.subr.bf16.mxu0 0
        %963 = vmatpush1.bf16.msra.mxu0 0
        %964 = vmatprep.subr.bf16.mxu0 0
        %965 = vmatpush1.bf16.msra.mxu0 0
        %966 = vmatprep.subr.bf16.mxu0 0
        %967 = vmatpush1.bf16.msra.mxu0 0
        %968 = vmatprep.subr.bf16.mxu0 0
        %969 = vmatpush1.bf16.msra.mxu0 0
        %970 = vmatprep.subr.bf16.mxu0 0
        %971 = vmatpush1.bf16.msra.mxu0 0
        %972 = vmatprep.subr.bf16.mxu0 0
        %973 = vmatpush1.bf16.msra.mxu0 0
        %974 = vmatprep.subr.bf16.mxu0 0
        %975 = vmatpush1.bf16.msra.mxu0 %v959
        %976 = vmatprep.subr.bf16.mxu0 0
        %977 = vmatpush1.bf16.msra.mxu0 %v958
        %978 = vmatprep.subr.bf16.mxu0 0
        %979 = vmatpush2.bf16.msra.mxu0 0
        %980 = vmatprep.subr.bf16.mxu0 0
        %981 = vmatpush2.bf16.msra.mxu0 0
        %982 = vmatprep.subr.bf16.mxu0 0
        %983 = vmatpush2.bf16.msra.mxu0 0
        %984 = vmatprep.subr.bf16.mxu0 0
        %985 = vmatpush2.bf16.msra.mxu0 0
        %986 = vmatprep.subr.bf16.mxu0 0
        %987 = vmatpush2.bf16.msra.mxu0 0
        %988 = vmatprep.subr.bf16.mxu0 0
        %989 = vmatpush2.bf16.msra.mxu0 0
        %990 = vmatprep.subr.bf16.mxu0 0
        %991 = vmatpush2.bf16.msra.mxu0 0
        %992 = vmatprep.subr.bf16.mxu0 0
        %993 = vmatpush2.bf16.msra.mxu0 0
        %994 = vmatprep.mubr.bf16.mxu0 0
        %995 = vmatmul.mubr.bf16.gmra.mxu0 %v752
        %v996 = vpop.f32.mrf.mxu0
        %v997 = vadd.f32 %v728, %v996
        %v998 = vpop.f32.mrf.mxu0
        %v999 = vpop.f32.mrf.mxu0
        %v1000 = vpop.f32.mrf.mxu0
        %1001 = vdwg.mxu0
        %v1006 = vunpack.c.l.b16 %v693
        %v1007 = vunpack.c.l.b16 %v694
        %v1008 = vunpack.c.l.b16 %v695
        %v1009 = vunpack.c.l.b16 %v696
        %v1010 = vpack.c.b16 %v1007, %v1006
        %v1011 = vpack.c.b16 %v1009, %v1008
        %1014 = vmatprep.subr.bf16.mxu0 0
        %1015 = vmatpush1.bf16.msra.mxu0 0
        %1016 = vmatprep.subr.bf16.mxu0 0
        %1017 = vmatpush1.bf16.msra.mxu0 0
        %1018 = vmatprep.subr.bf16.mxu0 0
        %1019 = vmatpush1.bf16.msra.mxu0 0
        %1020 = vmatprep.subr.bf16.mxu0 0
        %1021 = vmatpush1.bf16.msra.mxu0 0
        %1022 = vmatprep.subr.bf16.mxu0 0
        %1023 = vmatpush1.bf16.msra.mxu0 0
        %1024 = vmatprep.subr.bf16.mxu0 0
        %1025 = vmatpush1.bf16.msra.mxu0 0
        %1026 = vmatprep.subr.bf16.mxu0 0
        %1027 = vmatpush1.bf16.msra.mxu0 %v1011
        %1028 = vmatprep.subr.bf16.mxu0 0
        %1029 = vmatpush1.bf16.msra.mxu0 %v1010
        %1030 = vmatprep.subr.bf16.mxu0 0
        %1031 = vmatpush2.bf16.msra.mxu0 0
        %1032 = vmatprep.subr.bf16.mxu0 0
        %1033 = vmatpush2.bf16.msra.mxu0 0
        %1034 = vmatprep.subr.bf16.mxu0 0
        %1035 = vmatpush2.bf16.msra.mxu0 0
        %1036 = vmatprep.subr.bf16.mxu0 0
        %1037 = vmatpush2.bf16.msra.mxu0 0
        %1038 = vmatprep.subr.bf16.mxu0 0
        %1039 = vmatpush2.bf16.msra.mxu0 0
        %1040 = vmatprep.subr.bf16.mxu0 0
        %1041 = vmatpush2.bf16.msra.mxu0 0
        %1042 = vmatprep.subr.bf16.mxu0 0
        %1043 = vmatpush2.bf16.msra.mxu0 0
        %1044 = vmatprep.subr.bf16.mxu0 0
        %1045 = vmatpush2.bf16.msra.mxu0 0
        %1046 = vmatprep.mubr.bf16.mxu0 0
        %1047 = vmatmul.mubr.bf16.gmra.mxu0 %v752
        %v1048 = vpop.f32.mrf.mxu0
        %v1049 = vadd.f32 %v732, %v1048
        %v1050 = vpop.f32.mrf.mxu0
        %v1051 = vpop.f32.mrf.mxu0
        %v1052 = vpop.f32.mrf.mxu0
        %1053 = vdwg.mxu0
        %v1054 = vpack.c.bf16 %v789, %v789
        %v1055 = vpack.c.bf16 %v841, %v841
        %v1056 = vpack.c.bf16 %v893, %v893
        %v1057 = vpack.c.bf16 %v945, %v945
        %v1059 = vlaneseq
        %v1060 = vshrl.u32 %v1059, 7
        %v1061 = vsub.s32 0, %v1060
        %v1062 = vrot.slane %v671, %v1061
        %vm1064 = vcmask 130048
        %v1066 = vsel %vm1064, %v1054, 0
        %v1069 = vsel %vm1064, %v1056, 0
        %1071 = vmatprep.subr.bf16.mxu0 0
        %1072 = vmatpush1.bf16.xpose.msra.mxu0 0
        %1073 = vmatprep.subr.bf16.mxu0 0
        %1074 = vmatpush1.bf16.xpose.msra.mxu0 0
        %1075 = vmatprep.subr.bf16.mxu0 0
        %1076 = vmatpush1.bf16.xpose.msra.mxu0 0
        %1077 = vmatprep.subr.bf16.mxu0 0
        %1078 = vmatpush1.bf16.xpose.msra.mxu0 0
        %1079 = vmatprep.subr.bf16.mxu0 0
        %1080 = vmatpush1.bf16.xpose.msra.mxu0 0
        %1081 = vmatprep.subr.bf16.mxu0 0
        %1082 = vmatpush1.bf16.xpose.msra.mxu0 0
        %1083 = vmatprep.subr.bf16.mxu0 0
        %1084 = vmatpush1.bf16.xpose.msra.mxu0 0
        %1085 = vmatprep.subr.bf16.mxu0 0
        %1086 = vmatpush1.bf16.xpose.msra.mxu0 %v1069
        %1087 = vmatprep.subr.bf16.mxu0 0
        %1088 = vmatpush2.bf16.xpose.msra.mxu0 0
        %1089 = vmatprep.subr.bf16.mxu0 0
        %1090 = vmatpush2.bf16.xpose.msra.mxu0 0
        %1091 = vmatprep.subr.bf16.mxu0 0
        %1092 = vmatpush2.bf16.xpose.msra.mxu0 0
        %1093 = vmatprep.subr.bf16.mxu0 0
        %1094 = vmatpush2.bf16.xpose.msra.mxu0 0
        %1095 = vmatprep.subr.bf16.mxu0 0
        %1096 = vmatpush2.bf16.xpose.msra.mxu0 0
        %1097 = vmatprep.subr.bf16.mxu0 0
        %1098 = vmatpush2.bf16.xpose.msra.mxu0 0
        %1099 = vmatprep.subr.bf16.mxu0 0
        %1100 = vmatpush2.bf16.xpose.msra.mxu0 0
        %1101 = vmatprep.subr.bf16.mxu0 0
        %1102 = vmatpush2.bf16.xpose.msra.mxu0 0
        %1103 = vmatprep.mubr.bf16.mxu0 0
        %1104 = vmatmul.mubr.bf16.gmra.mxu0 %v1066
        %v1105 = vpop.f32.mrf.mxu0
        %v1106 = vadd.f32 %v1062, %v1105
        %v1107 = vpop.f32.mrf.mxu0
        %v1108 = vpop.f32.mrf.mxu0
        %v1109 = vpop.f32.mrf.mxu0
        %1110 = vdwg.mxu0
        %v1112 = vsel %vm1064, %v1055, 0
        %v1115 = vsel %vm1064, %v1057, 0
        %1117 = vmatprep.subr.bf16.mxu0 0
        %1118 = vmatpush1.bf16.xpose.msra.mxu0 0
        %1119 = vmatprep.subr.bf16.mxu0 0
        %1120 = vmatpush1.bf16.xpose.msra.mxu0 0
        %1121 = vmatprep.subr.bf16.mxu0 0
        %1122 = vmatpush1.bf16.xpose.msra.mxu0 0
        %1123 = vmatprep.subr.bf16.mxu0 0
        %1124 = vmatpush1.bf16.xpose.msra.mxu0 0
        %1125 = vmatprep.subr.bf16.mxu0 0
        %1126 = vmatpush1.bf16.xpose.msra.mxu0 0
        %1127 = vmatprep.subr.bf16.mxu0 0
        %1128 = vmatpush1.bf16.xpose.msra.mxu0 0
        %1129 = vmatprep.subr.bf16.mxu0 0
        %1130 = vmatpush1.bf16.xpose.msra.mxu0 0
        %1131 = vmatprep.subr.bf16.mxu0 0
        %1132 = vmatpush1.bf16.xpose.msra.mxu0 %v1115
        %1133 = vmatprep.subr.bf16.mxu0 0
        %1134 = vmatpush2.bf16.xpose.msra.mxu0 0
        %1135 = vmatprep.subr.bf16.mxu0 0
        %1136 = vmatpush2.bf16.xpose.msra.mxu0 0
        %1137 = vmatprep.subr.bf16.mxu0 0
        %1138 = vmatpush2.bf16.xpose.msra.mxu0 0
        %1139 = vmatprep.subr.bf16.mxu0 0
        %1140 = vmatpush2.bf16.xpose.msra.mxu0 0
        %1141 = vmatprep.subr.bf16.mxu0 0
        %1142 = vmatpush2.bf16.xpose.msra.mxu0 0
        %1143 = vmatprep.subr.bf16.mxu0 0
        %1144 = vmatpush2.bf16.xpose.msra.mxu0 0
        %1145 = vmatprep.subr.bf16.mxu0 0
        %1146 = vmatpush2.bf16.xpose.msra.mxu0 0
        %1147 = vmatprep.subr.bf16.mxu0 0
        %1148 = vmatpush2.bf16.xpose.msra.mxu0 0
        %1149 = vmatprep.mubr.bf16.mxu0 0
        %1150 = vmatmul.mubr.bf16.gmra.mxu0 %v1112
        %v1151 = vpop.f32.mrf.mxu0
        %v1152 = vadd.f32 %v1062, %v1151
        %v1153 = vpop.f32.mrf.mxu0
        %v1154 = vpop.f32.mrf.mxu0
        %v1155 = vpop.f32.mrf.mxu0
        %1156 = vdwg.mxu0
        %vm1157 = vcmask 64512
        %v1158 = vsel %vm1157, %v1106, -inf
        %1159 = vmax.xlane.f32.xlu0 %v1158
        %v1160 = vpop.xlane.xlu0 %1159
        %v1161 = vsel %vm1157, %v1152, -inf
        %1162 = vmax.xlane.f32.xlu0 %v1161
        %v1163 = vpop.xlane.xlu0 %1162
        %v1164 = vsub.f32 %v1106, %v1160
        %v1165 = vsub.f32 %v1152, %v1163
        %v1166 = vmul.f32 %v1164, 1.442695
        %v1167 = vpow.pop %v1166
        %v1168 = vmul.f32 %v1165, 1.442695
        %v1169 = vpow.pop %v1168
        %v1170 = vsel %vm1157, %v1167, 0.0
        %1171 = vadd.xlane.f32.xlu0 %v1170
        %v1172 = vpop.xlane.xlu0 %1171
        %v1173 = vsel %vm1157, %v1169, 0.0
        %1174 = vadd.xlane.f32.xlu0 %v1173
        %v1175 = vpop.xlane.xlu0 %1174
        %v1176 = vrcp.pop %v1172
        %v1177 = vrcp.pop %v1175
        %v1178 = vmul.f32 %v1167, %v1176
        %v1179 = vmul.f32 %v1169, %v1177
        %v1180 = vpack.c.bf16 %v1178, %v1178
        %v1181 = vpack.c.bf16 %v1179, %v1179
        %v1182 = vpack.c.bf16 %v997, %v997
        %v1183 = vpack.c.bf16 %v1049, %v1049
        %v1185 = vsel %vm1157, %v1180, 0
        %vm1187 = vcmask 1043456
        %v1189 = vsel %vm1187, %v1182, 0
        %1191 = vmatprep.subr.bf16.mxu0 0
        %1192 = vmatpush1.bf16.msra.mxu0 0
        %1193 = vmatprep.subr.bf16.mxu0 0
        %1194 = vmatpush1.bf16.msra.mxu0 0
        %1195 = vmatprep.subr.bf16.mxu0 0
        %1196 = vmatpush1.bf16.msra.mxu0 0
        %1197 = vmatprep.subr.bf16.mxu0 0
        %1198 = vmatpush1.bf16.msra.mxu0 0
        %1199 = vmatprep.subr.bf16.mxu0 0
        %1200 = vmatpush1.bf16.msra.mxu0 0
        %1201 = vmatprep.subr.bf16.mxu0 0
        %1202 = vmatpush1.bf16.msra.mxu0 0
        %1203 = vmatprep.subr.bf16.mxu0 0
        %1204 = vmatpush1.bf16.msra.mxu0 0
        %1205 = vmatprep.subr.bf16.mxu0 0
        %1206 = vmatpush1.bf16.msra.mxu0 %v1189
        %1207 = vmatprep.subr.bf16.mxu0 0
        %1208 = vmatpush2.bf16.msra.mxu0 0
        %1209 = vmatprep.subr.bf16.mxu0 0
        %1210 = vmatpush2.bf16.msra.mxu0 0
        %1211 = vmatprep.subr.bf16.mxu0 0
        %1212 = vmatpush2.bf16.msra.mxu0 0
        %1213 = vmatprep.subr.bf16.mxu0 0
        %1214 = vmatpush2.bf16.msra.mxu0 0
        %1215 = vmatprep.subr.bf16.mxu0 0
        %1216 = vmatpush2.bf16.msra.mxu0 0
        %1217 = vmatprep.subr.bf16.mxu0 0
        %1218 = vmatpush2.bf16.msra.mxu0 0
        %1219 = vmatprep.subr.bf16.mxu0 0
        %1220 = vmatpush2.bf16.msra.mxu0 0
        %1221 = vmatprep.subr.bf16.mxu0 0
        %1222 = vmatpush2.bf16.msra.mxu0 0
        %1223 = vmatprep.mubr.bf16.mxu0 0
        %1224 = vmatmul.mubr.bf16.gmra.mxu0 %v1185
        %v1225 = vpop.f32.mrf.mxu0
        %v1226 = vadd.f32 0.0, %v1225
        %v1227 = vpop.f32.mrf.mxu0
        %v1228 = vpop.f32.mrf.mxu0
        %v1229 = vpop.f32.mrf.mxu0
        %1230 = vdwg.mxu0
        %v1232 = vsel %vm1157, %v1181, 0
        %v1235 = vsel %vm1187, %v1183, 0
        %1237 = vmatprep.subr.bf16.mxu0 0
        %1238 = vmatpush1.bf16.msra.mxu0 0
        %1239 = vmatprep.subr.bf16.mxu0 0
        %1240 = vmatpush1.bf16.msra.mxu0 0
        %1241 = vmatprep.subr.bf16.mxu0 0
        %1242 = vmatpush1.bf16.msra.mxu0 0
        %1243 = vmatprep.subr.bf16.mxu0 0
        %1244 = vmatpush1.bf16.msra.mxu0 0
        %1245 = vmatprep.subr.bf16.mxu0 0
        %1246 = vmatpush1.bf16.msra.mxu0 0
        %1247 = vmatprep.subr.bf16.mxu0 0
        %1248 = vmatpush1.bf16.msra.mxu0 0
        %1249 = vmatprep.subr.bf16.mxu0 0
        %1250 = vmatpush1.bf16.msra.mxu0 0
        %1251 = vmatprep.subr.bf16.mxu0 0
        %1252 = vmatpush1.bf16.msra.mxu0 %v1235
        %1253 = vmatprep.subr.bf16.mxu0 0
        %1254 = vmatpush2.bf16.msra.mxu0 0
        %1255 = vmatprep.subr.bf16.mxu0 0
        %1256 = vmatpush2.bf16.msra.mxu0 0
        %1257 = vmatprep.subr.bf16.mxu0 0
        %1258 = vmatpush2.bf16.msra.mxu0 0
        %1259 = vmatprep.subr.bf16.mxu0 0
        %1260 = vmatpush2.bf16.msra.mxu0 0
        %1261 = vmatprep.subr.bf16.mxu0 0
        %1262 = vmatpush2.bf16.msra.mxu0 0
        %1263 = vmatprep.subr.bf16.mxu0 0
        %1264 = vmatpush2.bf16.msra.mxu0 0
        %1265 = vmatprep.subr.bf16.mxu0 0
        %1266 = vmatpush2.bf16.msra.mxu0 0
        %1267 = vmatprep.subr.bf16.mxu0 0
        %1268 = vmatpush2.bf16.msra.mxu0 0
        %1269 = vmatprep.mubr.bf16.mxu0 0
        %1270 = vmatmul.mubr.bf16.gmra.mxu0 %v1232
        %v1271 = vpop.f32.mrf.mxu0
        %v1272 = vadd.f32 0.0, %v1271
        %v1273 = vpop.f32.mrf.mxu0
        %v1274 = vpop.f32.mrf.mxu0
        %v1275 = vpop.f32.mrf.mxu0
        %1276 = vdwg.mxu0
        %v1277 = vpack.c.bf16 %v1226, %v1226
        %v1278 = vpack.c.bf16 %v1272, %v1272
        %v1279 = vld [vmem:[%s6] sm:$0xf]
        %v1280 = vld [vmem:[%s6 + $0x4] sm:$0xf]
        %v1281 = vld [vmem:[%s6 + $0x8] sm:$0xf]
        %v1282 = vld [vmem:[%s6 + $0xc] sm:$0xf]
        %v1285 = vunpack.c.l.b16 %v1279
        %v1286 = vunpack.c.l.b16 %v1280
        %v1287 = vpack.c.b16 %v1286, %v1285
        %v1290 = vsel %vm1064, %v1277, 0
        %1292 = vmatprep.subr.bf16.mxu0 0
        %1293 = vmatpush1.bf16.msra.mxu0 0
        %1294 = vmatprep.subr.bf16.mxu0 0
        %1295 = vmatpush1.bf16.msra.mxu0 0
        %1296 = vmatprep.subr.bf16.mxu0 0
        %1297 = vmatpush1.bf16.msra.mxu0 0
        %1298 = vmatprep.subr.bf16.mxu0 0
        %1299 = vmatpush1.bf16.msra.mxu0 0
        %1300 = vmatprep.subr.bf16.mxu0 0
        %1301 = vmatpush1.bf16.msra.mxu0 0
        %1302 = vmatprep.subr.bf16.mxu0 0
        %1303 = vmatpush1.bf16.msra.mxu0 0
        %1304 = vmatprep.subr.bf16.mxu0 0
        %1305 = vmatpush1.bf16.msra.mxu0 0
        %1306 = vmatprep.subr.bf16.mxu0 0
        %1307 = vmatpush1.bf16.msra.mxu0 %v1287
        %1308 = vmatprep.subr.bf16.mxu0 0
        %1309 = vmatpush2.bf16.msra.mxu0 0
        %1310 = vmatprep.subr.bf16.mxu0 0
        %1311 = vmatpush2.bf16.msra.mxu0 0
        %1312 = vmatprep.subr.bf16.mxu0 0
        %1313 = vmatpush2.bf16.msra.mxu0 0
        %1314 = vmatprep.subr.bf16.mxu0 0
        %1315 = vmatpush2.bf16.msra.mxu0 0
        %1316 = vmatprep.subr.bf16.mxu0 0
        %1317 = vmatpush2.bf16.msra.mxu0 0
        %1318 = vmatprep.subr.bf16.mxu0 0
        %1319 = vmatpush2.bf16.msra.mxu0 0
        %1320 = vmatprep.subr.bf16.mxu0 0
        %1321 = vmatpush2.bf16.msra.mxu0 0
        %1322 = vmatprep.subr.bf16.mxu0 0
        %1323 = vmatpush2.bf16.msra.mxu0 0
        %1324 = vmatprep.mubr.bf16.mxu0 0
        %1325 = vmatmul.mubr.bf16.gmra.mxu0 %v1290
        %v1326 = vpop.f32.mrf.mxu0
        %v1327 = vadd.f32 0.0, %v1326
        %v1328 = vpop.f32.mrf.mxu0
        %v1329 = vpop.f32.mrf.mxu0
        %v1330 = vpop.f32.mrf.mxu0
        %1331 = vdwg.mxu0
        %v1334 = vunpack.c.l.b16 %v1281
        %v1335 = vunpack.c.l.b16 %v1282
        %v1336 = vpack.c.b16 %v1335, %v1334
        %v1339 = vsel %vm1064, %v1278, 0
        %1341 = vmatprep.subr.bf16.mxu0 0
        %1342 = vmatpush1.bf16.msra.mxu0 0
        %1343 = vmatprep.subr.bf16.mxu0 0
        %1344 = vmatpush1.bf16.msra.mxu0 0
        %1345 = vmatprep.subr.bf16.mxu0 0
        %1346 = vmatpush1.bf16.msra.mxu0 0
        %1347 = vmatprep.subr.bf16.mxu0 0
        %1348 = vmatpush1.bf16.msra.mxu0 0
        %1349 = vmatprep.subr.bf16.mxu0 0
        %1350 = vmatpush1.bf16.msra.mxu0 0
        %1351 = vmatprep.subr.bf16.mxu0 0
        %1352 = vmatpush1.bf16.msra.mxu0 0
        %1353 = vmatprep.subr.bf16.mxu0 0
        %1354 = vmatpush1.bf16.msra.mxu0 0
        %1355 = vmatprep.subr.bf16.mxu0 0
        %1356 = vmatpush1.bf16.msra.mxu0 %v1336
        %1357 = vmatprep.subr.bf16.mxu0 0
        %1358 = vmatpush2.bf16.msra.mxu0 0
        %1359 = vmatprep.subr.bf16.mxu0 0
        %1360 = vmatpush2.bf16.msra.mxu0 0
        %1361 = vmatprep.subr.bf16.mxu0 0
        %1362 = vmatpush2.bf16.msra.mxu0 0
        %1363 = vmatprep.subr.bf16.mxu0 0
        %1364 = vmatpush2.bf16.msra.mxu0 0
        %1365 = vmatprep.subr.bf16.mxu0 0
        %1366 = vmatpush2.bf16.msra.mxu0 0
        %1367 = vmatprep.subr.bf16.mxu0 0
        %1368 = vmatpush2.bf16.msra.mxu0 0
        %1369 = vmatprep.subr.bf16.mxu0 0
        %1370 = vmatpush2.bf16.msra.mxu0 0
        %1371 = vmatprep.subr.bf16.mxu0 0
        %1372 = vmatpush2.bf16.msra.mxu0 0
        %1373 = vmatprep.mubr.bf16.mxu0 0
        %1374 = vmatmul.mubr.bf16.gmra.mxu0 %v1339
        %v1375 = vpop.f32.mrf.mxu0
        %v1376 = vadd.f32 0.0, %v1375
        %v1377 = vpop.f32.mrf.mxu0
        %v1378 = vpop.f32.mrf.mxu0
        %v1379 = vpop.f32.mrf.mxu0
        %1380 = vdwg.mxu0
        %v1381 = vsel %vm642, %v1327, 0.0
        %v1382 = vsel %vm642, %v1376, 0.0
        %v1383 = vadd.f32 %v1381, %v1382
        %v1384 = vld [vmem:[%s7] sm:$0x1]
        %v1386 = vlaneseq
        %v1387 = vshrl.u32 %v1386, 7
        %v1388 = vsub.s32 0, %v1387
        %v1389 = vrot.slane %v1384, %v1388
        %v1391 = vadd.f32 %v1383, %v1389
        %v1392 = vadd.f32 %v670, %v1391
        %v1393 = vld [vmem:[%s8] sm:$0x1]
        %v1394 = vld [vmem:[%s9] sm:$0x1]
        %v1395 = vsel %vm642, %v1392, 0.0
        %1396 = vadd.xlane.f32.xlu0 %v1395
        %v1397 = vpop.xlane.xlu0 %1396
        %v1398 = vmul.f32 %v1397, %v646
        %v1399 = vsub.f32 %v1392, %v1398
        %v1400 = vmul.f32 %v1399, %v1399
        %v1401 = vsel %vm642, %v1400, 0.0
        %1402 = vadd.xlane.f32.xlu0 %v1401
        %v1403 = vpop.xlane.xlu0 %1402
        %v1404 = vmul.f32 %v1403, %v646
        %v1405 = vadd.f32 %v1404, 1e-12
        %v1406 = vrsqrt.pop %v1405
        %v1407 = vmul.f32 %v1399, %v1406
        %v1409 = vlaneseq
        %v1410 = vshrl.u32 %v1409, 7
        %v1411 = vsub.s32 0, %v1410
        %v1412 = vrot.slane %v1393, %v1411
        %v1414 = vmul.f32 %v1407, %v1412
        %v1416 = vlaneseq
        %v1417 = vshrl.u32 %v1416, 7
        %v1418 = vsub.s32 0, %v1417
        %v1419 = vrot.slane %v1394, %v1418
        %v1421 = vadd.f32 %v1414, %v1419
        %v1422 = vpack.c.bf16 %v1421, %v1421
        %v1423 = vld [vmem:[%s10] sm:$0xf]
        %v1424 = vld [vmem:[%s10 + $0x4] sm:$0xf]
        %v1425 = vld [vmem:[%s10 + $0x8] sm:$0xf]
        %v1426 = vld [vmem:[%s10 + $0xc] sm:$0xf]
        %v1427 = vld [vmem:[%s11] sm:$0x1]
        %v1429 = vlaneseq
        %v1430 = vshrl.u32 %v1429, 7
        %v1431 = vsub.s32 0, %v1430
        %v1432 = vrot.slane %v1427, %v1431
        %v1438 = vunpack.c.l.b16 %v1423
        %v1439 = vunpack.c.l.b16 %v1424
        %v1440 = vunpack.c.l.b16 %v1425
        %v1441 = vunpack.c.l.b16 %v1426
        %v1442 = vpack.c.b16 %v1439, %v1438
        %v1443 = vpack.c.b16 %v1441, %v1440
        %v1447 = vsel %vm642, %v1422, 0
        %1449 = vmatprep.subr.bf16.mxu0 0
        %1450 = vmatpush1.bf16.msra.mxu0 0
        %1451 = vmatprep.subr.bf16.mxu0 0
        %1452 = vmatpush1.bf16.msra.mxu0 0
        %1453 = vmatprep.subr.bf16.mxu0 0
        %1454 = vmatpush1.bf16.msra.mxu0 0
        %1455 = vmatprep.subr.bf16.mxu0 0
        %1456 = vmatpush1.bf16.msra.mxu0 0
        %1457 = vmatprep.subr.bf16.mxu0 0
        %1458 = vmatpush1.bf16.msra.mxu0 0
        %1459 = vmatprep.subr.bf16.mxu0 0
        %1460 = vmatpush1.bf16.msra.mxu0 0
        %1461 = vmatprep.subr.bf16.mxu0 0
        %1462 = vmatpush1.bf16.msra.mxu0 %v1443
        %1463 = vmatprep.subr.bf16.mxu0 0
        %1464 = vmatpush1.bf16.msra.mxu0 %v1442
        %1465 = vmatprep.subr.bf16.mxu0 0
        %1466 = vmatpush2.bf16.msra.mxu0 0
        %1467 = vmatprep.subr.bf16.mxu0 0
        %1468 = vmatpush2.bf16.msra.mxu0 0
        %1469 = vmatprep.subr.bf16.mxu0 0
        %1470 = vmatpush2.bf16.msra.mxu0 0
        %1471 = vmatprep.subr.bf16.mxu0 0
        %1472 = vmatpush2.bf16.msra.mxu0 0
        %1473 = vmatprep.subr.bf16.mxu0 0
        %1474 = vmatpush2.bf16.msra.mxu0 0
        %1475 = vmatprep.subr.bf16.mxu0 0
        %1476 = vmatpush2.bf16.msra.mxu0 0
        %1477 = vmatprep.subr.bf16.mxu0 0
        %1478 = vmatpush2.bf16.msra.mxu0 0
        %1479 = vmatprep.subr.bf16.mxu0 0
        %1480 = vmatpush2.bf16.msra.mxu0 0
        %1481 = vmatprep.mubr.bf16.mxu0 0
        %1482 = vmatmul.mubr.bf16.gmra.mxu0 %v1447
        %v1483 = vpop.f32.mrf.mxu0
        %v1484 = vadd.f32 %v1432, %v1483
        %v1485 = vpop.f32.mrf.mxu0
        %v1486 = vpop.f32.mrf.mxu0
        %v1487 = vpop.f32.mrf.mxu0
        %1488 = vdwg.mxu0
        %v1489 = vmul.f32 %v1484, %v1484
        %v1490 = vmul.f32 %v1484, %v1489
        %v1491 = vmul.f32 %v1490, 0.044715
        %v1492 = vadd.f32 %v1484, %v1491
        %v1493 = vmul.f32 %v1492, 0.7978846
        %v1494 = vtanh.pop %v1493
        %v1495 = vadd.f32 %v1494, 1.0
        %v1496 = vmul.f32 %v1495, 0.5
        %v1497 = vmul.f32 %v1484, %v1496
        %v1498 = vpack.c.bf16 %v1497, %v1497
        %v1499 = vld [vmem:[%s12] sm:$0xf]
        %v1500 = vld [vmem:[%s12 + $0x4] sm:$0xf]
        %v1501 = vld [vmem:[%s12 + $0x8] sm:$0xf]
        %v1502 = vld [vmem:[%s12 + $0xc] sm:$0xf]
        %v1503 = vld [vmem:[%s12 + $0x10] sm:$0xf]
        %v1504 = vld [vmem:[%s12 + $0x14] sm:$0xf]
        %v1505 = vld [vmem:[%s12 + $0x18] sm:$0xf]
        %v1506 = vld [vmem:[%s12 + $0x1c] sm:$0xf]
        %v1507 = vld [vmem:[%s13] sm:$0x1]
        %v1509 = vlaneseq
        %v1510 = vshrl.u32 %v1509, 7
        %v1511 = vsub.s32 0, %v1510
        %v1512 = vrot.slane %v1507, %v1511
        %v1522 = vunpack.c.l.b16 %v1499
        %v1523 = vunpack.c.l.b16 %v1500
        %v1524 = vunpack.c.l.b16 %v1501
        %v1525 = vunpack.c.l.b16 %v1502
        %v1526 = vunpack.c.l.b16 %v1503
        %v1527 = vunpack.c.l.b16 %v1504
        %v1528 = vunpack.c.l.b16 %v1505
        %v1529 = vunpack.c.l.b16 %v1506
        %v1530 = vpack.c.b16 %v1523, %v1522
        %v1531 = vpack.c.b16 %v1525, %v1524
        %v1532 = vpack.c.b16 %v1527, %v1526
        %v1533 = vpack.c.b16 %v1529, %v1528
        %vm1538 = vcmask 523264
        %v1540 = vsel %vm1538, %v1498, 0
        %1542 = vmatprep.subr.bf16.mxu0 0
        %1543 = vmatpush1.bf16.msra.mxu0 0
        %1544 = vmatprep.subr.bf16.mxu0 0
        %1545 = vmatpush1.bf16.msra.mxu0 0
        %1546 = vmatprep.subr.bf16.mxu0 0
        %1547 = vmatpush1.bf16.msra.mxu0 0
        %1548 = vmatprep.subr.bf16.mxu0 0
        %1549 = vmatpush1.bf16.msra.mxu0 0
        %1550 = vmatprep.subr.bf16.mxu0 0
        %1551 = vmatpush1.bf16.msra.mxu0 %v1533
        %1552 = vmatprep.subr.bf16.mxu0 0
        %1553 = vmatpush1.bf16.msra.mxu0 %v1532
        %1554 = vmatprep.subr.bf16.mxu0 0
        %1555 = vmatpush1.bf16.msra.mxu0 %v1531
        %1556 = vmatprep.subr.bf16.mxu0 0
        %1557 = vmatpush1.bf16.msra.mxu0 %v1530
        %1558 = vmatprep.subr.bf16.mxu0 0
        %1559 = vmatpush2.bf16.msra.mxu0 0
        %1560 = vmatprep.subr.bf16.mxu0 0
        %1561 = vmatpush2.bf16.msra.mxu0 0
        %1562 = vmatprep.subr.bf16.mxu0 0
        %1563 = vmatpush2.bf16.msra.mxu0 0
        %1564 = vmatprep.subr.bf16.mxu0 0
        %1565 = vmatpush2.bf16.msra.mxu0 0
        %1566 = vmatprep.subr.bf16.mxu0 0
        %1567 = vmatpush2.bf16.msra.mxu0 0
        %1568 = vmatprep.subr.bf16.mxu0 0
        %1569 = vmatpush2.bf16.msra.mxu0 0
        %1570 = vmatprep.subr.bf16.mxu0 0
        %1571 = vmatpush2.bf16.msra.mxu0 0
        %1572 = vmatprep.subr.bf16.mxu0 0
        %1573 = vmatpush2.bf16.msra.mxu0 0
        %1574 = vmatprep.mubr.bf16.mxu0 0
        %1575 = vmatmul.mubr.bf16.gmra.mxu0 %v1540
        %v1576 = vpop.f32.mrf.mxu0
        %v1577 = vadd.f32 %v1512, %v1576
        %v1578 = vpop.f32.mrf.mxu0
        %v1579 = vpop.f32.mrf.mxu0
        %v1580 = vpop.f32.mrf.mxu0
        %1581 = vdwg.mxu0
        %v1582 = vadd.f32 %v1421, %v1577
        %v1583 = vld [vmem:[%s14] sm:$0x1]
        %v1584 = vld [vmem:[%s15] sm:$0x1]
        %v1585 = vsel %vm642, %v1582, 0.0
        %1586 = vadd.xlane.f32.xlu0 %v1585
        %v1587 = vpop.xlane.xlu0 %1586
        %v1588 = vmul.f32 %v1587, %v646
        %v1589 = vsub.f32 %v1582, %v1588
        %v1590 = vmul.f32 %v1589, %v1589
        %v1591 = vsel %vm642, %v1590, 0.0
        %1592 = vadd.xlane.f32.xlu0 %v1591
        %v1593 = vpop.xlane.xlu0 %1592
        %v1594 = vmul.f32 %v1593, %v646
        %v1595 = vadd.f32 %v1594, 1e-12
        %v1596 = vrsqrt.pop %v1595
        %v1597 = vmul.f32 %v1589, %v1596
        %v1599 = vlaneseq
        %v1600 = vshrl.u32 %v1599, 7
        %v1601 = vsub.s32 0, %v1600
        %v1602 = vrot.slane %v1583, %v1601
        %v1604 = vmul.f32 %v1597, %v1602
        %v1606 = vlaneseq
        %v1607 = vshrl.u32 %v1606, 7
        %v1608 = vsub.s32 0, %v1607
        %v1609 = vrot.slane %v1584, %v1608
        %v1611 = vadd.f32 %v1604, %v1609
        %v1612 = vpack.c.bf16 %v1611, %v1611
        %s1613 = scalar_lea.vmem %s4, 96
        %v1614 = vld [vmem:[%s1613] sm:$0xf]
        %v1615 = vld [vmem:[%s1613 + $0x4] sm:$0xf]
        %v1616 = vld [vmem:[%s1613 + $0x8] sm:$0xf]
        %v1617 = vld [vmem:[%s1613 + $0xc] sm:$0xf]
        %v1618 = vld [vmem:[%s1613 + $0x10] sm:$0xf]
        %v1619 = vld [vmem:[%s1613 + $0x14] sm:$0xf]
        %v1620 = vld [vmem:[%s1613 + $0x18] sm:$0xf]
        %v1621 = vld [vmem:[%s1613 + $0x1c] sm:$0xf]
        %v1622 = vld [vmem:[%s1613 + $0x20] sm:$0xf]
        %v1623 = vld [vmem:[%s1613 + $0x24] sm:$0xf]
        %v1624 = vld [vmem:[%s1613 + $0x28] sm:$0xf]
        %v1625 = vld [vmem:[%s1613 + $0x2c] sm:$0xf]
        %v1626 = vld [vmem:[%s1613 + $0x30] sm:$0xf]
        %v1627 = vld [vmem:[%s1613 + $0x34] sm:$0xf]
        %v1628 = vld [vmem:[%s1613 + $0x38] sm:$0xf]
        %v1629 = vld [vmem:[%s1613 + $0x3c] sm:$0xf]
        %v1630 = vld [vmem:[%s1613 + $0x40] sm:$0xf]
        %v1631 = vld [vmem:[%s1613 + $0x44] sm:$0xf]
        %v1632 = vld [vmem:[%s1613 + $0x48] sm:$0xf]
        %v1633 = vld [vmem:[%s1613 + $0x4c] sm:$0xf]
        %v1634 = vld [vmem:[%s1613 + $0x50] sm:$0xf]
        %v1635 = vld [vmem:[%s1613 + $0x54] sm:$0xf]
        %v1636 = vld [vmem:[%s1613 + $0x58] sm:$0xf]
        %v1637 = vld [vmem:[%s1613 + $0x5c] sm:$0xf]
        %s1638 = scalar_lea.vmem %s5, 6
        %v1639 = vld [vmem:[%s1638] sm:$0x1]
        %v1640 = vld [vmem:[%s1638 + $0x1] sm:$0x1]
        %v1641 = vld [vmem:[%s1638 + $0x2] sm:$0x1]
        %v1642 = vld [vmem:[%s1638 + $0x3] sm:$0x1]
        %v1643 = vld [vmem:[%s1638 + $0x4] sm:$0x1]
        %v1644 = vld [vmem:[%s1638 + $0x5] sm:$0x1]
        %v1651 = vlaneseq
        %v1652 = vshrl.u32 %v1651, 7
        %v1653 = vsub.s32 0, %v1652
        %v1654 = vrot.slane %v1639, %v1653
        %v1655 = vlaneseq
        %v1656 = vshrl.u32 %v1655, 7
        %v1657 = vsub.s32 0, %v1656
        %v1658 = vrot.slane %v1640, %v1657
        %v1659 = vlaneseq
        %v1660 = vshrl.u32 %v1659, 7
        %v1661 = vsub.s32 0, %v1660
        %v1662 = vrot.slane %v1641, %v1661
        %v1663 = vlaneseq
        %v1664 = vshrl.u32 %v1663, 7
        %v1665 = vsub.s32 0, %v1664
        %v1666 = vrot.slane %v1642, %v1665
        %v1667 = vlaneseq
        %v1668 = vshrl.u32 %v1667, 7
        %v1669 = vsub.s32 0, %v1668
        %v1670 = vrot.slane %v1643, %v1669
        %v1671 = vlaneseq
        %v1672 = vshrl.u32 %v1671, 7
        %v1673 = vsub.s32 0, %v1672
        %v1674 = vrot.slane %v1644, %v1673
        %v1685 = vunpack.c.l.b16 %v1614
        %v1686 = vunpack.c.l.b16 %v1615
        %v1687 = vunpack.c.l.b16 %v1616
        %v1688 = vunpack.c.l.b16 %v1617
        %v1689 = vpack.c.b16 %v1686, %v1685
        %v1690 = vpack.c.b16 %v1688, %v1687
        %v1694 = vsel %vm642, %v1612, 0
        %1696 = vmatprep.subr.bf16.mxu0 0
        %1697 = vmatpush1.bf16.msra.mxu0 0
        %1698 = vmatprep.subr.bf16.mxu0 0
        %1699 = vmatpush1.bf16.msra.mxu0 0
        %1700 = vmatprep.subr.bf16.mxu0 0
        %1701 = vmatpush1.bf16.msra.mxu0 0
        %1702 = vmatprep.subr.bf16.mxu0 0
        %1703 = vmatpush1.bf16.msra.mxu0 0
        %1704 = vmatprep.subr.bf16.mxu0 0
        %1705 = vmatpush1.bf16.msra.mxu0 0
        %1706 = vmatprep.subr.bf16.mxu0 0
        %1707 = vmatpush1.bf16.msra.mxu0 0
        %1708 = vmatprep.subr.bf16.mxu0 0
        %1709 = vmatpush1.bf16.msra.mxu0 %v1690
        %1710 = vmatprep.subr.bf16.mxu0 0
        %1711 = vmatpush1.bf16.msra.mxu0 %v1689
        %1712 = vmatprep.subr.bf16.mxu0 0
        %1713 = vmatpush2.bf16.msra.mxu0 0
        %1714 = vmatprep.subr.bf16.mxu0 0
        %1715 = vmatpush2.bf16.msra.mxu0 0
        %1716 = vmatprep.subr.bf16.mxu0 0
        %1717 = vmatpush2.bf16.msra.mxu0 0
        %1718 = vmatprep.subr.bf16.mxu0 0
        %1719 = vmatpush2.bf16.msra.mxu0 0
        %1720 = vmatprep.subr.bf16.mxu0 0
        %1721 = vmatpush2.bf16.msra.mxu0 0
        %1722 = vmatprep.subr.bf16.mxu0 0
        %1723 = vmatpush2.bf16.msra.mxu0 0
        %1724 = vmatprep.subr.bf16.mxu0 0
        %1725 = vmatpush2.bf16.msra.mxu0 0
        %1726 = vmatprep.subr.bf16.mxu0 0
        %1727 = vmatpush2.bf16.msra.mxu0 0
        %1728 = vmatprep.mubr.bf16.mxu0 0
        %1729 = vmatmul.mubr.bf16.gmra.mxu0 %v1694
        %v1730 = vpop.f32.mrf.mxu0
        %v1731 = vadd.f32 %v1654, %v1730
        %v1732 = vpop.f32.mrf.mxu0
        %v1733 = vpop.f32.mrf.mxu0
        %v1734 = vpop.f32.mrf.mxu0
        %1735 = vdwg.mxu0
        %v1740 = vunpack.c.l.b16 %v1618
        %v1741 = vunpack.c.l.b16 %v1619
        %v1742 = vunpack.c.l.b16 %v1620
        %v1743 = vunpack.c.l.b16 %v1621
        %v1744 = vpack.c.b16 %v1741, %v1740
        %v1745 = vpack.c.b16 %v1743, %v1742
        %1748 = vmatprep.subr.bf16.mxu0 0
        %1749 = vmatpush1.bf16.msra.mxu0 0
        %1750 = vmatprep.subr.bf16.mxu0 0
        %1751 = vmatpush1.bf16.msra.mxu0 0
        %1752 = vmatprep.subr.bf16.mxu0 0
        %1753 = vmatpush1.bf16.msra.mxu0 0
        %1754 = vmatprep.subr.bf16.mxu0 0
        %1755 = vmatpush1.bf16.msra.mxu0 0
        %1756 = vmatprep.subr.bf16.mxu0 0
        %1757 = vmatpush1.bf16.msra.mxu0 0
        %1758 = vmatprep.subr.bf16.mxu0 0
        %1759 = vmatpush1.bf16.msra.mxu0 0
        %1760 = vmatprep.subr.bf16.mxu0 0
        %1761 = vmatpush1.bf16.msra.mxu0 %v1745
        %1762 = vmatprep.subr.bf16.mxu0 0
        %1763 = vmatpush1.bf16.msra.mxu0 %v1744
        %1764 = vmatprep.subr.bf16.mxu0 0
        %1765 = vmatpush2.bf16.msra.mxu0 0
        %1766 = vmatprep.subr.bf16.mxu0 0
        %1767 = vmatpush2.bf16.msra.mxu0 0
        %1768 = vmatprep.subr.bf16.mxu0 0
        %1769 = vmatpush2.bf16.msra.mxu0 0
        %1770 = vmatprep.subr.bf16.mxu0 0
        %1771 = vmatpush2.bf16.msra.mxu0 0
        %1772 = vmatprep.subr.bf16.mxu0 0
        %1773 = vmatpush2.bf16.msra.mxu0 0
        %1774 = vmatprep.subr.bf16.mxu0 0
        %1775 = vmatpush2.bf16.msra.mxu0 0
        %1776 = vmatprep.subr.bf16.mxu0 0
        %1777 = vmatpush2.bf16.msra.mxu0 0
        %1778 = vmatprep.subr.bf16.mxu0 0
        %1779 = vmatpush2.bf16.msra.mxu0 0
        %1780 = vmatprep.mubr.bf16.mxu0 0
        %1781 = vmatmul.mubr.bf16.gmra.mxu0 %v1694
        %v1782 = vpop.f32.mrf.mxu0
        %v1783 = vadd.f32 %v1658, %v1782
        %v1784 = vpop.f32.mrf.mxu0
        %v1785 = vpop.f32.mrf.mxu0
        %v1786 = vpop.f32.mrf.mxu0
        %1787 = vdwg.mxu0
        %v1792 = vunpack.c.l.b16 %v1622
        %v1793 = vunpack.c.l.b16 %v1623
        %v1794 = vunpack.c.l.b16 %v1624
        %v1795 = vunpack.c.l.b16 %v1625
        %v1796 = vpack.c.b16 %v1793, %v1792
        %v1797 = vpack.c.b16 %v1795, %v1794
        %1800 = vmatprep.subr.bf16.mxu0 0
        %1801 = vmatpush1.bf16.msra.mxu0 0
        %1802 = vmatprep.subr.bf16.mxu0 0
        %1803 = vmatpush1.bf16.msra.mxu0 0
        %1804 = vmatprep.subr.bf16.mxu0 0
        %1805 = vmatpush1.bf16.msra.mxu0 0
        %1806 = vmatprep.subr.bf16.mxu0 0
        %1807 = vmatpush1.bf16.msra.mxu0 0
        %1808 = vmatprep.subr.bf16.mxu0 0
        %1809 = vmatpush1.bf16.msra.mxu0 0
        %1810 = vmatprep.subr.bf16.mxu0 0
        %1811 = vmatpush1.bf16.msra.mxu0 0
        %1812 = vmatprep.subr.bf16.mxu0 0
        %1813 = vmatpush1.bf16.msra.mxu0 %v1797
        %1814 = vmatprep.subr.bf16.mxu0 0
        %1815 = vmatpush1.bf16.msra.mxu0 %v1796
        %1816 = vmatprep.subr.bf16.mxu0 0
        %1817 = vmatpush2.bf16.msra.mxu0 0
        %1818 = vmatprep.subr.bf16.mxu0 0
        %1819 = vmatpush2.bf16.msra.mxu0 0
        %1820 = vmatprep.subr.bf16.mxu0 0
        %1821 = vmatpush2.bf16.msra.mxu0 0
        %1822 = vmatprep.subr.bf16.mxu0 0
        %1823 = vmatpush2.bf16.msra.mxu0 0
        %1824 = vmatprep.subr.bf16.mxu0 0
        %1825 = vmatpush2.bf16.msra.mxu0 0
        %1826 = vmatprep.subr.bf16.mxu0 0
        %1827 = vmatpush2.bf16.msra.mxu0 0
        %1828 = vmatprep.subr.bf16.mxu0 0
        %1829 = vmatpush2.bf16.msra.mxu0 0
        %1830 = vmatprep.subr.bf16.mxu0 0
        %1831 = vmatpush2.bf16.msra.mxu0 0
        %1832 = vmatprep.mubr.bf16.mxu0 0
        %1833 = vmatmul.mubr.bf16.gmra.mxu0 %v1694
        %v1834 = vpop.f32.mrf.mxu0
        %v1835 = vadd.f32 %v1662, %v1834
        %v1836 = vpop.f32.mrf.mxu0
        %v1837 = vpop.f32.mrf.mxu0
        %v1838 = vpop.f32.mrf.mxu0
        %1839 = vdwg.mxu0
        %v1844 = vunpack.c.l.b16 %v1626
        %v1845 = vunpack.c.l.b16 %v1627
        %v1846 = vunpack.c.l.b16 %v1628
        %v1847 = vunpack.c.l.b16 %v1629
        %v1848 = vpack.c.b16 %v1845, %v1844
        %v1849 = vpack.c.b16 %v1847, %v1846
        %1852 = vmatprep.subr.bf16.mxu0 0
        %1853 = vmatpush1.bf16.msra.mxu0 0
        %1854 = vmatprep.subr.bf16.mxu0 0
        %1855 = vmatpush1.bf16.msra.mxu0 0
        %1856 = vmatprep.subr.bf16.mxu0 0
        %1857 = vmatpush1.bf16.msra.mxu0 0
        %1858 = vmatprep.subr.bf16.mxu0 0
        %1859 = vmatpush1.bf16.msra.mxu0 0
        %1860 = vmatprep.subr.bf16.mxu0 0
        %1861 = vmatpush1.bf16.msra.mxu0 0
        %1862 = vmatprep.subr.bf16.mxu0 0
        %1863 = vmatpush1.bf16.msra.mxu0 0
        %1864 = vmatprep.subr.bf16.mxu0 0
        %1865 = vmatpush1.bf16.msra.mxu0 %v1849
        %1866 = vmatprep.subr.bf16.mxu0 0
        %1867 = vmatpush1.bf16.msra.mxu0 %v1848
        %1868 = vmatprep.subr.bf16.mxu0 0
        %1869 = vmatpush2.bf16.msra.mxu0 0
        %1870 = vmatprep.subr.bf16.mxu0 0
        %1871 = vmatpush2.bf16.msra.mxu0 0
        %1872 = vmatprep.subr.bf16.mxu0 0
        %1873 = vmatpush2.bf16.msra.mxu0 0
        %1874 = vmatprep.subr.bf16.mxu0 0
        %1875 = vmatpush2.bf16.msra.mxu0 0
        %1876 = vmatprep.subr.bf16.mxu0 0
        %1877 = vmatpush2.bf16.msra.mxu0 0
        %1878 = vmatprep.subr.bf16.mxu0 0
        %1879 = vmatpush2.bf16.msra.mxu0 0
        %1880 = vmatprep.subr.bf16.mxu0 0
        %1881 = vmatpush2.bf16.msra.mxu0 0
        %1882 = vmatprep.subr.bf16.mxu0 0
        %1883 = vmatpush2.bf16.msra.mxu0 0
        %1884 = vmatprep.mubr.bf16.mxu0 0
        %1885 = vmatmul.mubr.bf16.gmra.mxu0 %v1694
        %v1886 = vpop.f32.mrf.mxu0
        %v1887 = vadd.f32 %v1666, %v1886
        %v1888 = vpop.f32.mrf.mxu0
        %v1889 = vpop.f32.mrf.mxu0
        %v1890 = vpop.f32.mrf.mxu0
        %1891 = vdwg.mxu0
        %v1896 = vunpack.c.l.b16 %v1630
        %v1897 = vunpack.c.l.b16 %v1631
        %v1898 = vunpack.c.l.b16 %v1632
        %v1899 = vunpack.c.l.b16 %v1633
        %v1900 = vpack.c.b16 %v1897, %v1896
        %v1901 = vpack.c.b16 %v1899, %v1898
        %1904 = vmatprep.subr.bf16.mxu0 0
        %1905 = vmatpush1.bf16.msra.mxu0 0
        %1906 = vmatprep.subr.bf16.mxu0 0
        %1907 = vmatpush1.bf16.msra.mxu0 0
        %1908 = vmatprep.subr.bf16.mxu0 0
        %1909 = vmatpush1.bf16.msra.mxu0 0
        %1910 = vmatprep.subr.bf16.mxu0 0
        %1911 = vmatpush1.bf16.msra.mxu0 0
        %1912 = vmatprep.subr.bf16.mxu0 0
        %1913 = vmatpush1.bf16.msra.mxu0 0
        %1914 = vmatprep.subr.bf16.mxu0 0
        %1915 = vmatpush1.bf16.msra.mxu0 0
        %1916 = vmatprep.subr.bf16.mxu0 0
        %1917 = vmatpush1.bf16.msra.mxu0 %v1901
        %1918 = vmatprep.subr.bf16.mxu0 0
        %1919 = vmatpush1.bf16.msra.mxu0 %v1900
        %1920 = vmatprep.subr.bf16.mxu0 0
        %1921 = vmatpush2.bf16.msra.mxu0 0
        %1922 = vmatprep.subr.bf16.mxu0 0
        %1923 = vmatpush2.bf16.msra.mxu0 0
        %1924 = vmatprep.subr.bf16.mxu0 0
        %1925 = vmatpush2.bf16.msra.mxu0 0
        %1926 = vmatprep.subr.bf16.mxu0 0
        %1927 = vmatpush2.bf16.msra.mxu0 0
        %1928 = vmatprep.subr.bf16.mxu0 0
        %1929 = vmatpush2.bf16.msra.mxu0 0
        %1930 = vmatprep.subr.bf16.mxu0 0
        %1931 = vmatpush2.bf16.msra.mxu0 0
        %1932 = vmatprep.subr.bf16.mxu0 0
        %1933 = vmatpush2.bf16.msra.mxu0 0
        %1934 = vmatprep.subr.bf16.mxu0 0
        %1935 = vmatpush2.bf16.msra.mxu0 0
        %1936 = vmatprep.mubr.bf16.mxu0 0
        %1937 = vmatmul.mubr.bf16.gmra.mxu0 %v1694
        %v1938 = vpop.f32.mrf.mxu0
        %v1939 = vadd.f32 %v1670, %v1938
        %v1940 = vpop.f32.mrf.mxu0
        %v1941 = vpop.f32.mrf.mxu0
        %v1942 = vpop.f32.mrf.mxu0
        %1943 = vdwg.mxu0
        %v1948 = vunpack.c.l.b16 %v1634
        %v1949 = vunpack.c.l.b16 %v1635
        %v1950 = vunpack.c.l.b16 %v1636
        %v1951 = vunpack.c.l.b16 %v1637
        %v1952 = vpack.c.b16 %v1949, %v1948
        %v1953 = vpack.c.b16 %v1951, %v1950
        %1956 = vmatprep.subr.bf16.mxu0 0
        %1957 = vmatpush1.bf16.msra.mxu0 0
        %1958 = vmatprep.subr.bf16.mxu0 0
        %1959 = vmatpush1.bf16.msra.mxu0 0
        %1960 = vmatprep.subr.bf16.mxu0 0
        %1961 = vmatpush1.bf16.msra.mxu0 0
        %1962 = vmatprep.subr.bf16.mxu0 0
        %1963 = vmatpush1.bf16.msra.mxu0 0
        %1964 = vmatprep.subr.bf16.mxu0 0
        %1965 = vmatpush1.bf16.msra.mxu0 0
        %1966 = vmatprep.subr.bf16.mxu0 0
        %1967 = vmatpush1.bf16.msra.mxu0 0
        %1968 = vmatprep.subr.bf16.mxu0 0
        %1969 = vmatpush1.bf16.msra.mxu0 %v1953
        %1970 = vmatprep.subr.bf16.mxu0 0
        %1971 = vmatpush1.bf16.msra.mxu0 %v1952
        %1972 = vmatprep.subr.bf16.mxu0 0
        %1973 = vmatpush2.bf16.msra.mxu0 0
        %1974 = vmatprep.subr.bf16.mxu0 0
        %1975 = vmatpush2.bf16.msra.mxu0 0
        %1976 = vmatprep.subr.bf16.mxu0 0
        %1977 = vmatpush2.bf16.msra.mxu0 0
        %1978 = vmatprep.subr.bf16.mxu0 0
        %1979 = vmatpush2.bf16.msra.mxu0 0
        %1980 = vmatprep.subr.bf16.mxu0 0
        %1981 = vmatpush2.bf16.msra.mxu0 0
        %1982 = vmatprep.subr.bf16.mxu0 0
        %1983 = vmatpush2.bf16.msra.mxu0 0
        %1984 = vmatprep.subr.bf16.mxu0 0
        %1985 = vmatpush2.bf16.msra.mxu0 0
        %1986 = vmatprep.subr.bf16.mxu0 0
        %1987 = vmatpush2.bf16.msra.mxu0 0
        %1988 = vmatprep.mubr.bf16.mxu0 0
        %1989 = vmatmul.mubr.bf16.gmra.mxu0 %v1694
        %v1990 = vpop.f32.mrf.mxu0
        %v1991 = vadd.f32 %v1674, %v1990
        %v1992 = vpop.f32.mrf.mxu0
        %v1993 = vpop.f32.mrf.mxu0
        %v1994 = vpop.f32.mrf.mxu0
        %1995 = vdwg.mxu0
        %v1996 = vpack.c.bf16 %v1731, %v1731
        %v1997 = vpack.c.bf16 %v1783, %v1783
        %v1998 = vpack.c.bf16 %v1835, %v1835
        %v1999 = vpack.c.bf16 %v1887, %v1887
        %v2001 = vsel %vm1064, %v1996, 0
        %v2004 = vsel %vm1064, %v1998, 0
        %2006 = vmatprep.subr.bf16.mxu0 0
        %2007 = vmatpush1.bf16.xpose.msra.mxu0 0
        %2008 = vmatprep.subr.bf16.mxu0 0
        %2009 = vmatpush1.bf16.xpose.msra.mxu0 0
        %2010 = vmatprep.subr.bf16.mxu0 0
        %2011 = vmatpush1.bf16.xpose.msra.mxu0 0
        %2012 = vmatprep.subr.bf16.mxu0 0
        %2013 = vmatpush1.bf16.xpose.msra.mxu0 0
        %2014 = vmatprep.subr.bf16.mxu0 0
        %2015 = vmatpush1.bf16.xpose.msra.mxu0 0
        %2016 = vmatprep.subr.bf16.mxu0 0
        %2017 = vmatpush1.bf16.xpose.msra.mxu0 0
        %2018 = vmatprep.subr.bf16.mxu0 0
        %2019 = vmatpush1.bf16.xpose.msra.mxu0 0
        %2020 = vmatprep.subr.bf16.mxu0 0
        %2021 = vmatpush1.bf16.xpose.msra.mxu0 %v2004
        %2022 = vmatprep.subr.bf16.mxu0 0
        %2023 = vmatpush2.bf16.xpose.msra.mxu0 0
        %2024 = vmatprep.subr.bf16.mxu0 0
        %2025 = vmatpush2.bf16.xpose.msra.mxu0 0
        %2026 = vmatprep.subr.bf16.mxu0 0
        %2027 = vmatpush2.bf16.xpose.msra.mxu0 0
        %2028 = vmatprep.subr.bf16.mxu0 0
        %2029 = vmatpush2.bf16.xpose.msra.mxu0 0
        %2030 = vmatprep.subr.bf16.mxu0 0
        %2031 = vmatpush2.bf16.xpose.msra.mxu0 0
        %2032 = vmatprep.subr.bf16.mxu0 0
        %2033 = vmatpush2.bf16.xpose.msra.mxu0 0
        %2034 = vmatprep.subr.bf16.mxu0 0
        %2035 = vmatpush2.bf16.xpose.msra.mxu0 0
        %2036 = vmatprep.subr.bf16.mxu0 0
        %2037 = vmatpush2.bf16.xpose.msra.mxu0 0
        %2038 = vmatprep.mubr.bf16.mxu0 0
        %2039 = vmatmul.mubr.bf16.gmra.mxu0 %v2001
        %v2040 = vpop.f32.mrf.mxu0
        %v2041 = vadd.f32 %v1062, %v2040
        %v2042 = vpop.f32.mrf.mxu0
        %v2043 = vpop.f32.mrf.mxu0
        %v2044 = vpop.f32.mrf.mxu0
        %2045 = vdwg.mxu0
        %v2047 = vsel %vm1064, %v1997, 0
        %v2050 = vsel %vm1064, %v1999, 0
        %2052 = vmatprep.subr.bf16.mxu0 0
        %2053 = vmatpush1.bf16.xpose.msra.mxu0 0
        %2054 = vmatprep.subr.bf16.mxu0 0
        %2055 = vmatpush1.bf16.xpose.msra.mxu0 0
        %2056 = vmatprep.subr.bf16.mxu0 0
        %2057 = vmatpush1.bf16.xpose.msra.mxu0 0
        %2058 = vmatprep.subr.bf16.mxu0 0
        %2059 = vmatpush1.bf16.xpose.msra.mxu0 0
        %2060 = vmatprep.subr.bf16.mxu0 0
        %2061 = vmatpush1.bf16.xpose.msra.mxu0 0
        %2062 = vmatprep.subr.bf16.mxu0 0
        %2063 = vmatpush1.bf16.xpose.msra.mxu0 0
        %2064 = vmatprep.subr.bf16.mxu0 0
        %2065 = vmatpush1.bf16.xpose.msra.mxu0 0
        %2066 = vmatprep.subr.bf16.mxu0 0
        %2067 = vmatpush1.bf16.xpose.msra.mxu0 %v2050
        %2068 = vmatprep.subr.bf16.mxu0 0
        %2069 = vmatpush2.bf16.xpose.msra.mxu0 0
        %2070 = vmatprep.subr.bf16.mxu0 0
        %2071 = vmatpush2.bf16.xpose.msra.mxu0 0
        %2072 = vmatprep.subr.bf16.mxu0 0
        %2073 = vmatpush2.bf16.xpose.msra.mxu0 0
        %2074 = vmatprep.subr.bf16.mxu0 0
        %2075 = vmatpush2.bf16.xpose.msra.mxu0 0
        %2076 = vmatprep.subr.bf16.mxu0 0
        %2077 = vmatpush2.bf16.xpose.msra.mxu0 0
        %2078 = vmatprep.subr.bf16.mxu0 0
        %2079 = vmatpush2.bf16.xpose.msra.mxu0 0
        %2080 = vmatprep.subr.bf16.mxu0 0
        %2081 = vmatpush2.bf16.xpose.msra.mxu0 0
        %2082 = vmatprep.subr.bf16.mxu0 0
        %2083 = vmatpush2.bf16.xpose.msra.mxu0 0
        %2084 = vmatprep.mubr.bf16.mxu0 0
        %2085 = vmatmul.mubr.bf16.gmra.mxu0 %v2047
        %v2086 = vpop.f32.mrf.mxu0
        %v2087 = vadd.f32 %v1062, %v2086
        %v2088 = vpop.f32.mrf.mxu0
        %v2089 = vpop.f32.mrf.mxu0
        %v2090 = vpop.f32.mrf.mxu0
        %2091 = vdwg.mxu0
        %v2092 = vsel %vm1157, %v2041, -inf
        %2093 = vmax.xlane.f32.xlu0 %v2092
        %v2094 = vpop.xlane.xlu0 %2093
        %v2095 = vsel %vm1157, %v2087, -inf
        %2096 = vmax.xlane.f32.xlu0 %v2095
        %v2097 = vpop.xlane.xlu0 %2096
        %v2098 = vsub.f32 %v2041, %v2094
        %v2099 = vsub.f32 %v2087, %v2097
        %v2100 = vmul.f32 %v2098, 1.442695
        %v2101 = vpow.pop %v2100
        %v2102 = vmul.f32 %v2099, 1.442695
        %v2103 = vpow.pop %v2102
        %v2104 = vsel %vm1157, %v2101, 0.0
        %2105 = vadd.xlane.f32.xlu0 %v2104
        %v2106 = vpop.xlane.xlu0 %2105
        %v2107 = vsel %vm1157, %v2103, 0.0
        %2108 = vadd.xlane.f32.xlu0 %v2107
        %v2109 = vpop.xlane.xlu0 %2108
        %v2110 = vrcp.pop %v2106
        %v2111 = vrcp.pop %v2109
        %v2112 = vmul.f32 %v2101, %v2110
        %v2113 = vmul.f32 %v2103, %v2111
        %v2114 = vpack.c.bf16 %v2112, %v2112
        %v2115 = vpack.c.bf16 %v2113, %v2113
        %v2116 = vpack.c.bf16 %v1939, %v1939
        %v2117 = vpack.c.bf16 %v1991, %v1991
        %v2119 = vsel %vm1157, %v2114, 0
        %v2122 = vsel %vm1187, %v2116, 0
        %2124 = vmatprep.subr.bf16.mxu0 0
        %2125 = vmatpush1.bf16.msra.mxu0 0
        %2126 = vmatprep.subr.bf16.mxu0 0
        %2127 = vmatpush1.bf16.msra.mxu0 0
        %2128 = vmatprep.subr.bf16.mxu0 0
        %2129 = vmatpush1.bf16.msra.mxu0 0
        %2130 = vmatprep.subr.bf16.mxu0 0
        %2131 = vmatpush1.bf16.msra.mxu0 0
        %2132 = vmatprep.subr.bf16.mxu0 0
        %2133 = vmatpush1.bf16.msra.mxu0 0
        %2134 = vmatprep.subr.bf16.mxu0 0
        %2135 = vmatpush1.bf16.msra.mxu0 0
        %2136 = vmatprep.subr.bf16.mxu0 0
        %2137 = vmatpush1.bf16.msra.mxu0 0
        %2138 = vmatprep.subr.bf16.mxu0 0
        %2139 = vmatpush1.bf16.msra.mxu0 %v2122
        %2140 = vmatprep.subr.bf16.mxu0 0
        %2141 = vmatpush2.bf16.msra.mxu0 0
        %2142 = vmatprep.subr.bf16.mxu0 0
        %2143 = vmatpush2.bf16.msra.mxu0 0
        %2144 = vmatprep.subr.bf16.mxu0 0
        %2145 = vmatpush2.bf16.msra.mxu0 0
        %2146 = vmatprep.subr.bf16.mxu0 0
        %2147 = vmatpush2.bf16.msra.mxu0 0
        %2148 = vmatprep.subr.bf16.mxu0 0
        %2149 = vmatpush2.bf16.msra.mxu0 0
        %2150 = vmatprep.subr.bf16.mxu0 0
        %2151 = vmatpush2.bf16.msra.mxu0 0
        %2152 = vmatprep.subr.bf16.mxu0 0
        %2153 = vmatpush2.bf16.msra.mxu0 0
        %2154 = vmatprep.subr.bf16.mxu0 0
        %2155 = vmatpush2.bf16.msra.mxu0 0
        %2156 = vmatprep.mubr.bf16.mxu0 0
        %2157 = vmatmul.mubr.bf16.gmra.mxu0 %v2119
        %v2158 = vpop.f32.mrf.mxu0
        %v2159 = vadd.f32 0.0, %v2158
        %v2160 = vpop.f32.mrf.mxu0
        %v2161 = vpop.f32.mrf.mxu0
        %v2162 = vpop.f32.mrf.mxu0
        %2163 = vdwg.mxu0
        %v2165 = vsel %vm1157, %v2115, 0
        %v2168 = vsel %vm1187, %v2117, 0
        %2170 = vmatprep.subr.bf16.mxu0 0
        %2171 = vmatpush1.bf16.msra.mxu0 0
        %2172 = vmatprep.subr.bf16.mxu0 0
        %2173 = vmatpush1.bf16.msra.mxu0 0
        %2174 = vmatprep.subr.bf16.mxu0 0
        %2175 = vmatpush1.bf16.msra.mxu0 0
        %2176 = vmatprep.subr.bf16.mxu0 0
        %2177 = vmatpush1.bf16.msra.mxu0 0
        %2178 = vmatprep.subr.bf16.mxu0 0
        %2179 = vmatpush1.bf16.msra.mxu0 0
        %2180 = vmatprep.subr.bf16.mxu0 0
        %2181 = vmatpush1.bf16.msra.mxu0 0
        %2182 = vmatprep.subr.bf16.mxu0 0
        %2183 = vmatpush1.bf16.msra.mxu0 0
        %2184 = vmatprep.subr.bf16.mxu0 0
        %2185 = vmatpush1.bf16.msra.mxu0 %v2168
        %2186 = vmatprep.subr.bf16.mxu0 0
        %2187 = vmatpush2.bf16.msra.mxu0 0
        %2188 = vmatprep.subr.bf16.mxu0 0
        %2189 = vmatpush2.bf16.msra.mxu0 0
        %2190 = vmatprep.subr.bf16.mxu0 0
        %2191 = vmatpush2.bf16.msra.mxu0 0
        %2192 = vmatprep.subr.bf16.mxu0 0
        %2193 = vmatpush2.bf16.msra.mxu0 0
        %2194 = vmatprep.subr.bf16.mxu0 0
        %2195 = vmatpush2.bf16.msra.mxu0 0
        %2196 = vmatprep.subr.bf16.mxu0 0
        %2197 = vmatpush2.bf16.msra.mxu0 0
        %2198 = vmatprep.subr.bf16.mxu0 0
        %2199 = vmatpush2.bf16.msra.mxu0 0
        %2200 = vmatprep.subr.bf16.mxu0 0
        %2201 = vmatpush2.bf16.msra.mxu0 0
        %2202 = vmatprep.mubr.bf16.mxu0 0
        %2203 = vmatmul.mubr.bf16.gmra.mxu0 %v2165
        %v2204 = vpop.f32.mrf.mxu0
        %v2205 = vadd.f32 0.0, %v2204
        %v2206 = vpop.f32.mrf.mxu0
        %v2207 = vpop.f32.mrf.mxu0
        %v2208 = vpop.f32.mrf.mxu0
        %2209 = vdwg.mxu0
        %v2210 = vpack.c.bf16 %v2159, %v2159
        %v2211 = vpack.c.bf16 %v2205, %v2205
        %s2212 = scalar_lea.vmem %s6, 16
        %v2213 = vld [vmem:[%s2212] sm:$0xf]
        %v2214 = vld [vmem:[%s2212 + $0x4] sm:$0xf]
        %v2215 = vld [vmem:[%s2212 + $0x8] sm:$0xf]
        %v2216 = vld [vmem:[%s2212 + $0xc] sm:$0xf]
        %v2219 = vunpack.c.l.b16 %v2213
        %v2220 = vunpack.c.l.b16 %v2214
        %v2221 = vpack.c.b16 %v2220, %v2219
        %v2224 = vsel %vm1064, %v2210, 0
        %2226 = vmatprep.subr.bf16.mxu0 0
        %2227 = vmatpush1.bf16.msra.mxu0 0
        %2228 = vmatprep.subr.bf16.mxu0 0
        %2229 = vmatpush1.bf16.msra.mxu0 0
        %2230 = vmatprep.subr.bf16.mxu0 0
        %2231 = vmatpush1.bf16.msra.mxu0 0
        %2232 = vmatprep.subr.bf16.mxu0 0
        %2233 = vmatpush1.bf16.msra.mxu0 0
        %2234 = vmatprep.subr.bf16.mxu0 0
        %2235 = vmatpush1.bf16.msra.mxu0 0
        %2236 = vmatprep.subr.bf16.mxu0 0
        %2237 = vmatpush1.bf16.msra.mxu0 0
        %2238 = vmatprep.subr.bf16.mxu0 0
        %2239 = vmatpush1.bf16.msra.mxu0 0
        %2240 = vmatprep.subr.bf16.mxu0 0
        %2241 = vmatpush1.bf16.msra.mxu0 %v2221
        %2242 = vmatprep.subr.bf16.mxu0 0
        %2243 = vmatpush2.bf16.msra.mxu0 0
        %2244 = vmatprep.subr.bf16.mxu0 0
        %2245 = vmatpush2.bf16.msra.mxu0 0
        %2246 = vmatprep.subr.bf16.mxu0 0
        %2247 = vmatpush2.bf16.msra.mxu0 0
        %2248 = vmatprep.subr.bf16.mxu0 0
        %2249 = vmatpush2.bf16.msra.mxu0 0
        %2250 = vmatprep.subr.bf16.mxu0 0
        %2251 = vmatpush2.bf16.msra.mxu0 0
        %2252 = vmatprep.subr.bf16.mxu0 0
        %2253 = vmatpush2.bf16.msra.mxu0 0
        %2254 = vmatprep.subr.bf16.mxu0 0
        %2255 = vmatpush2.bf16.msra.mxu0 0
        %2256 = vmatprep.subr.bf16.mxu0 0
        %2257 = vmatpush2.bf16.msra.mxu0 0
        %2258 = vmatprep.mubr.bf16.mxu0 0
        %2259 = vmatmul.mubr.bf16.gmra.mxu0 %v2224
        %v2260 = vpop.f32.mrf.mxu0
        %v2261 = vadd.f32 0.0, %v2260
        %v2262 = vpop.f32.mrf.mxu0
        %v2263 = vpop.f32.mrf.mxu0
        %v2264 = vpop.f32.mrf.mxu0
        %2265 = vdwg.mxu0
        %v2268 = vunpack.c.l.b16 %v2215
        %v2269 = vunpack.c.l.b16 %v2216
        %v2270 = vpack.c.b16 %v2269, %v2268
        %v2273 = vsel %vm1064, %v2211, 0
        %2275 = vmatprep.subr.bf16.mxu0 0
        %2276 = vmatpush1.bf16.msra.mxu0 0
        %2277 = vmatprep.subr.bf16.mxu0 0
        %2278 = vmatpush1.bf16.msra.mxu0 0
        %2279 = vmatprep.subr.bf16.mxu0 0
        %2280 = vmatpush1.bf16.msra.mxu0 0
        %2281 = vmatprep.subr.bf16.mxu0 0
        %2282 = vmatpush1.bf16.msra.mxu0 0
        %2283 = vmatprep.subr.bf16.mxu0 0
        %2284 = vmatpush1.bf16.msra.mxu0 0
        %2285 = vmatprep.subr.bf16.mxu0 0
        %2286 = vmatpush1.bf16.msra.mxu0 0
        %2287 = vmatprep.subr.bf16.mxu0 0
        %2288 = vmatpush1.bf16.msra.mxu0 0
        %2289 = vmatprep.subr.bf16.mxu0 0
        %2290 = vmatpush1.bf16.msra.mxu0 %v2270
        %2291 = vmatprep.subr.bf16.mxu0 0
        %2292 = vmatpush2.bf16.msra.mxu0 0
        %2293 = vmatprep.subr.bf16.mxu0 0
        %2294 = vmatpush2.bf16.msra.mxu0 0
        %2295 = vmatprep.subr.bf16.mxu0 0
        %2296 = vmatpush2.bf16.msra.mxu0 0
        %2297 = vmatprep.subr.bf16.mxu0 0
        %2298 = vmatpush2.bf16.msra.mxu0 0
        %2299 = vmatprep.subr.bf16.mxu0 0
        %2300 = vmatpush2.bf16.msra.mxu0 0
        %2301 = vmatprep.subr.bf16.mxu0 0
        %2302 = vmatpush2.bf16.msra.mxu0 0
        %2303 = vmatprep.subr.bf16.mxu0 0
        %2304 = vmatpush2.bf16.msra.mxu0 0
        %2305 = vmatprep.subr.bf16.mxu0 0
        %2306 = vmatpush2.bf16.msra.mxu0 0
        %2307 = vmatprep.mubr.bf16.mxu0 0
        %2308 = vmatmul.mubr.bf16.gmra.mxu0 %v2273
        %v2309 = vpop.f32.mrf.mxu0
        %v2310 = vadd.f32 0.0, %v2309
        %v2311 = vpop.f32.mrf.mxu0
        %v2312 = vpop.f32.mrf.mxu0
        %v2313 = vpop.f32.mrf.mxu0
        %2314 = vdwg.mxu0
        %v2315 = vsel %vm642, %v2261, 0.0
        %v2316 = vsel %vm642, %v2310, 0.0
        %v2317 = vadd.f32 %v2315, %v2316
        %s2318 = scalar_lea.vmem %s7, 1
        %v2319 = vld [vmem:[%s2318] sm:$0x1]
        %v2321 = vlaneseq
        %v2322 = vshrl.u32 %v2321, 7
        %v2323 = vsub.s32 0, %v2322
        %v2324 = vrot.slane %v2319, %v2323
        %v2326 = vadd.f32 %v2317, %v2324
        %v2327 = vadd.f32 %v1611, %v2326
        %s2328 = scalar_lea.vmem %s8, 1
        %v2329 = vld [vmem:[%s2328] sm:$0x1]
        %s2330 = scalar_lea.vmem %s9, 1
        %v2331 = vld [vmem:[%s2330] sm:$0x1]
        %v2332 = vsel %vm642, %v2327, 0.0
        %2333 = vadd.xlane.f32.xlu0 %v2332
        %v2334 = vpop.xlane.xlu0 %2333
        %v2335 = vmul.f32 %v2334, %v646
        %v2336 = vsub.f32 %v2327, %v2335
        %v2337 = vmul.f32 %v2336, %v2336
        %v2338 = vsel %vm642, %v2337, 0.0
        %2339 = vadd.xlane.f32.xlu0 %v2338
        %v2340 = vpop.xlane.xlu0 %2339
        %v2341 = vmul.f32 %v2340, %v646
        %v2342 = vadd.f32 %v2341, 1e-12
        %v2343 = vrsqrt.pop %v2342
        %v2344 = vmul.f32 %v2336, %v2343
        %v2346 = vlaneseq
        %v2347 = vshrl.u32 %v2346, 7
        %v2348 = vsub.s32 0, %v2347
        %v2349 = vrot.slane %v2329, %v2348
        %v2351 = vmul.f32 %v2344, %v2349
        %v2353 = vlaneseq
        %v2354 = vshrl.u32 %v2353, 7
        %v2355 = vsub.s32 0, %v2354
        %v2356 = vrot.slane %v2331, %v2355
        %v2358 = vadd.f32 %v2351, %v2356
        %v2359 = vpack.c.bf16 %v2358, %v2358
        %s2360 = scalar_lea.vmem %s10, 16
        %v2361 = vld [vmem:[%s2360] sm:$0xf]
        %v2362 = vld [vmem:[%s2360 + $0x4] sm:$0xf]
        %v2363 = vld [vmem:[%s2360 + $0x8] sm:$0xf]
        %v2364 = vld [vmem:[%s2360 + $0xc] sm:$0xf]
        %s2365 = scalar_lea.vmem %s11, 1
        %v2366 = vld [vmem:[%s2365] sm:$0x1]
        %v2368 = vlaneseq
        %v2369 = vshrl.u32 %v2368, 7
        %v2370 = vsub.s32 0, %v2369
        %v2371 = vrot.slane %v2366, %v2370
        %v2377 = vunpack.c.l.b16 %v2361
        %v2378 = vunpack.c.l.b16 %v2362
        %v2379 = vunpack.c.l.b16 %v2363
        %v2380 = vunpack.c.l.b16 %v2364
        %v2381 = vpack.c.b16 %v2378, %v2377
        %v2382 = vpack.c.b16 %v2380, %v2379
        %v2386 = vsel %vm642, %v2359, 0
        %2388 = vmatprep.subr.bf16.mxu0 0
        %2389 = vmatpush1.bf16.msra.mxu0 0
        %2390 = vmatprep.subr.bf16.mxu0 0
        %2391 = vmatpush1.bf16.msra.mxu0 0
        %2392 = vmatprep.subr.bf16.mxu0 0
        %2393 = vmatpush1.bf16.msra.mxu0 0
        %2394 = vmatprep.subr.bf16.mxu0 0
        %2395 = vmatpush1.bf16.msra.mxu0 0
        %2396 = vmatprep.subr.bf16.mxu0 0
        %2397 = vmatpush1.bf16.msra.mxu0 0
        %2398 = vmatprep.subr.bf16.mxu0 0
        %2399 = vmatpush1.bf16.msra.mxu0 0
        %2400 = vmatprep.subr.bf16.mxu0 0
        %2401 = vmatpush1.bf16.msra.mxu0 %v2382
        %2402 = vmatprep.subr.bf16.mxu0 0
        %2403 = vmatpush1.bf16.msra.mxu0 %v2381
        %2404 = vmatprep.subr.bf16.mxu0 0
        %2405 = vmatpush2.bf16.msra.mxu0 0
        %2406 = vmatprep.subr.bf16.mxu0 0
        %2407 = vmatpush2.bf16.msra.mxu0 0
        %2408 = vmatprep.subr.bf16.mxu0 0
        %2409 = vmatpush2.bf16.msra.mxu0 0
        %2410 = vmatprep.subr.bf16.mxu0 0
        %2411 = vmatpush2.bf16.msra.mxu0 0
        %2412 = vmatprep.subr.bf16.mxu0 0
        %2413 = vmatpush2.bf16.msra.mxu0 0
        %2414 = vmatprep.subr.bf16.mxu0 0
        %2415 = vmatpush2.bf16.msra.mxu0 0
        %2416 = vmatprep.subr.bf16.mxu0 0
        %2417 = vmatpush2.bf16.msra.mxu0 0
        %2418 = vmatprep.subr.bf16.mxu0 0
        %2419 = vmatpush2.bf16.msra.mxu0 0
        %2420 = vmatprep.mubr.bf16.mxu0 0
        %2421 = vmatmul.mubr.bf16.gmra.mxu0 %v2386
        %v2422 = vpop.f32.mrf.mxu0
        %v2423 = vadd.f32 %v2371, %v2422
        %v2424 = vpop.f32.mrf.mxu0
        %v2425 = vpop.f32.mrf.mxu0
        %v2426 = vpop.f32.mrf.mxu0
        %2427 = vdwg.mxu0
        %v2428 = vmul.f32 %v2423, %v2423
        %v2429 = vmul.f32 %v2423, %v2428
        %v2430 = vmul.f32 %v2429, 0.044715
        %v2431 = vadd.f32 %v2423, %v2430
        %v2432 = vmul.f32 %v2431, 0.7978846
        %v2433 = vtanh.pop %v2432
        %v2434 = vadd.f32 %v2433, 1.0
        %v2435 = vmul.f32 %v2434, 0.5
        %v2436 = vmul.f32 %v2423, %v2435
        %v2437 = vpack.c.bf16 %v2436, %v2436
        %s2438 = scalar_lea.vmem %s12, 32
        %v2439 = vld [vmem:[%s2438] sm:$0xf]
        %v2440 = vld [vmem:[%s2438 + $0x4] sm:$0xf]
        %v2441 = vld [vmem:[%s2438 + $0x8] sm:$0xf]
        %v2442 = vld [vmem:[%s2438 + $0xc] sm:$0xf]
        %v2443 = vld [vmem:[%s2438 + $0x10] sm:$0xf]
        %v2444 = vld [vmem:[%s2438 + $0x14] sm:$0xf]
        %v2445 = vld [vmem:[%s2438 + $0x18] sm:$0xf]
        %v2446 = vld [vmem:[%s2438 + $0x1c] sm:$0xf]
        %s2447 = scalar_lea.vmem %s13, 1
        %v2448 = vld [vmem:[%s2447] sm:$0x1]
        %v2450 = vlaneseq
        %v2451 = vshrl.u32 %v2450, 7
        %v2452 = vsub.s32 0, %v2451
        %v2453 = vrot.slane %v2448, %v2452
        %v2463 = vunpack.c.l.b16 %v2439
        %v2464 = vunpack.c.l.b16 %v2440
        %v2465 = vunpack.c.l.b16 %v2441
        %v2466 = vunpack.c.l.b16 %v2442
        %v2467 = vunpack.c.l.b16 %v2443
        %v2468 = vunpack.c.l.b16 %v2444
        %v2469 = vunpack.c.l.b16 %v2445
        %v2470 = vunpack.c.l.b16 %v2446
        %v2471 = vpack.c.b16 %v2464, %v2463
        %v2472 = vpack.c.b16 %v2466, %v2465
        %v2473 = vpack.c.b16 %v2468, %v2467
        %v2474 = vpack.c.b16 %v2470, %v2469
        %v2480 = vsel %vm1538, %v2437, 0
        %2482 = vmatprep.subr.bf16.mxu0 0
        %2483 = vmatpush1.bf16.msra.mxu0 0
        %2484 = vmatprep.subr.bf16.mxu0 0
        %2485 = vmatpush1.bf16.msra.mxu0 0
        %2486 = vmatprep.subr.bf16.mxu0 0
        %2487 = vmatpush1.bf16.msra.mxu0 0
        %2488 = vmatprep.subr.bf16.mxu0 0
        %2489 = vmatpush1.bf16.msra.mxu0 0
        %2490 = vmatprep.subr.bf16.mxu0 0
        %2491 = vmatpush1.bf16.msra.mxu0 %v2474
        %2492 = vmatprep.subr.bf16.mxu0 0
        %2493 = vmatpush1.bf16.msra.mxu0 %v2473
        %2494 = vmatprep.subr.bf16.mxu0 0
        %2495 = vmatpush1.bf16.msra.mxu0 %v2472
        %2496 = vmatprep.subr.bf16.mxu0 0
        %2497 = vmatpush1.bf16.msra.mxu0 %v2471
        %2498 = vmatprep.subr.bf16.mxu0 0
        %2499 = vmatpush2.bf16.msra.mxu0 0
        %2500 = vmatprep.subr.bf16.mxu0 0
        %2501 = vmatpush2.bf16.msra.mxu0 0
        %2502 = vmatprep.subr.bf16.mxu0 0
        %2503 = vmatpush2.bf16.msra.mxu0 0
        %2504 = vmatprep.subr.bf16.mxu0 0
        %2505 = vmatpush2.bf16.msra.mxu0 0
        %2506 = vmatprep.subr.bf16.mxu0 0
        %2507 = vmatpush2.bf16.msra.mxu0 0
        %2508 = vmatprep.subr.bf16.mxu0 0
        %2509 = vmatpush2.bf16.msra.mxu0 0
        %2510 = vmatprep.subr.bf16.mxu0 0
        %2511 = vmatpush2.bf16.msra.mxu0 0
        %2512 = vmatprep.subr.bf16.mxu0 0
        %2513 = vmatpush2.bf16.msra.mxu0 0
        %2514 = vmatprep.mubr.bf16.mxu0 0
        %2515 = vmatmul.mubr.bf16.gmra.mxu0 %v2480
        %v2516 = vpop.f32.mrf.mxu0
        %v2517 = vadd.f32 %v2453, %v2516
        %v2518 = vpop.f32.mrf.mxu0
        %v2519 = vpop.f32.mrf.mxu0
        %v2520 = vpop.f32.mrf.mxu0
        %2521 = vdwg.mxu0
        %v2522 = vadd.f32 %v2358, %v2517
        %s2523 = scalar_lea.vmem %s14, 1
        %v2524 = vld [vmem:[%s2523] sm:$0x1]
        %s2525 = scalar_lea.vmem %s15, 1
        %v2526 = vld [vmem:[%s2525] sm:$0x1]
        %v2527 = vsel %vm642, %v2522, 0.0
        %2528 = vadd.xlane.f32.xlu0 %v2527
        %v2529 = vpop.xlane.xlu0 %2528
        %v2530 = vmul.f32 %v2529, %v646
        %v2531 = vsub.f32 %v2522, %v2530
        %v2532 = vmul.f32 %v2531, %v2531
        %v2533 = vsel %vm642, %v2532, 0.0
        %2534 = vadd.xlane.f32.xlu0 %v2533
        %v2535 = vpop.xlane.xlu0 %2534
        %v2536 = vmul.f32 %v2535, %v646
        %v2537 = vadd.f32 %v2536, 1e-12
        %v2538 = vrsqrt.pop %v2537
        %v2539 = vmul.f32 %v2531, %v2538
        %v2541 = vlaneseq
        %v2542 = vshrl.u32 %v2541, 7
        %v2543 = vsub.s32 0, %v2542
        %v2544 = vrot.slane %v2524, %v2543
        %v2546 = vmul.f32 %v2539, %v2544
        %v2548 = vlaneseq
        %v2549 = vshrl.u32 %v2548, 7
        %v2550 = vsub.s32 0, %v2549
        %v2551 = vrot.slane %v2526, %v2550
        %v2553 = vadd.f32 %v2546, %v2551
        %v2554 = vpack.c.bf16 %v2553, %v2553
        %v2555 = vld [vmem:[%s16] sm:$0xf]
        %v2556 = vld [vmem:[%s16 + $0x4] sm:$0xf]
        %v2557 = vld [vmem:[%s16 + $0x8] sm:$0xf]
        %v2558 = vld [vmem:[%s16 + $0xc] sm:$0xf]
        %v2559 = vld [vmem:[%s17] sm:$0x1]
        %v2564 = vunpack.c.l.b16 %v2555
        %v2565 = vunpack.c.l.b16 %v2556
        %v2566 = vunpack.c.l.b16 %v2557
        %v2567 = vunpack.c.l.b16 %v2558
        %v2568 = vpack.c.b16 %v2565, %v2564
        %v2569 = vpack.c.b16 %v2567, %v2566
        %v2573 = vsel %vm642, %v2554, 0
        %2575 = vmatprep.subr.bf16.mxu0 0
        %2576 = vmatpush1.bf16.msra.mxu0 0
        %2577 = vmatprep.subr.bf16.mxu0 0
        %2578 = vmatpush1.bf16.msra.mxu0 0
        %2579 = vmatprep.subr.bf16.mxu0 0
        %2580 = vmatpush1.bf16.msra.mxu0 0
        %2581 = vmatprep.subr.bf16.mxu0 0
        %2582 = vmatpush1.bf16.msra.mxu0 0
        %2583 = vmatprep.subr.bf16.mxu0 0
        %2584 = vmatpush1.bf16.msra.mxu0 0
        %2585 = vmatprep.subr.bf16.mxu0 0
        %2586 = vmatpush1.bf16.msra.mxu0 0
        %2587 = vmatprep.subr.bf16.mxu0 0
        %2588 = vmatpush1.bf16.msra.mxu0 %v2569
        %2589 = vmatprep.subr.bf16.mxu0 0
        %2590 = vmatpush1.bf16.msra.mxu0 %v2568
        %2591 = vmatprep.subr.bf16.mxu0 0
        %2592 = vmatpush2.bf16.msra.mxu0 0
        %2593 = vmatprep.subr.bf16.mxu0 0
        %2594 = vmatpush2.bf16.msra.mxu0 0
        %2595 = vmatprep.subr.bf16.mxu0 0
        %2596 = vmatpush2.bf16.msra.mxu0 0
        %2597 = vmatprep.subr.bf16.mxu0 0
        %2598 = vmatpush2.bf16.msra.mxu0 0
        %2599 = vmatprep.subr.bf16.mxu0 0
        %2600 = vmatpush2.bf16.msra.mxu0 0
        %2601 = vmatprep.subr.bf16.mxu0 0
        %2602 = vmatpush2.bf16.msra.mxu0 0
        %2603 = vmatprep.subr.bf16.mxu0 0
        %2604 = vmatpush2.bf16.msra.mxu0 0
        %2605 = vmatprep.subr.bf16.mxu0 0
        %2606 = vmatpush2.bf16.msra.mxu0 0
        %2607 = vmatprep.mubr.bf16.mxu0 0
        %2608 = vmatmul.mubr.bf16.gmra.mxu0 %v2573
        %v2609 = vpop.f32.mrf.mxu0
        %v2610 = vadd.f32 %v2559, %v2609
        %v2611 = vpop.f32.mrf.mxu0
        %v2612 = vpop.f32.mrf.mxu0
        %v2613 = vpop.f32.mrf.mxu0
        %2614 = vdwg.mxu0
        %v2615 = vtanh.pop %v2610
        %v2616 = vpack.c.bf16 %v2615, %v2615
        %v2617 = vld [vmem:[%s18] sm:$0xf]
        %v2618 = vld [vmem:[%s18 + $0x4] sm:$0xf]
        %v2619 = vld [vmem:[%s18 + $0x8] sm:$0xf]
        %v2620 = vld [vmem:[%s18 + $0xc] sm:$0xf]
        %v2621 = vld [vmem:[%s19] sm:$0x1]
        %v2626 = vunpack.c.l.b16 %v2617
        %v2627 = vunpack.c.l.b16 %v2618
        %v2628 = vunpack.c.l.b16 %v2619
        %v2629 = vunpack.c.l.b16 %v2620
        %v2630 = vpack.c.b16 %v2627, %v2626
        %v2631 = vpack.c.b16 %v2629, %v2628
        %v2635 = vsel %vm642, %v2616, 0
        %2637 = vmatprep.subr.bf16.mxu0 0
        %2638 = vmatpush1.bf16.msra.mxu0 0
        %2639 = vmatprep.subr.bf16.mxu0 0
        %2640 = vmatpush1.bf16.msra.mxu0 0
        %2641 = vmatprep.subr.bf16.mxu0 0
        %2642 = vmatpush1.bf16.msra.mxu0 0
        %2643 = vmatprep.subr.bf16.mxu0 0
        %2644 = vmatpush1.bf16.msra.mxu0 0
        %2645 = vmatprep.subr.bf16.mxu0 0
        %2646 = vmatpush1.bf16.msra.mxu0 0
        %2647 = vmatprep.subr.bf16.mxu0 0
        %2648 = vmatpush1.bf16.msra.mxu0 0
        %2649 = vmatprep.subr.bf16.mxu0 0
        %2650 = vmatpush1.bf16.msra.mxu0 %v2631
        %2651 = vmatprep.subr.bf16.mxu0 0
        %2652 = vmatpush1.bf16.msra.mxu0 %v2630
        %2653 = vmatprep.subr.bf16.mxu0 0
        %2654 = vmatpush2.bf16.msra.mxu0 0
        %2655 = vmatprep.subr.bf16.mxu0 0
        %2656 = vmatpush2.bf16.msra.mxu0 0
        %2657 = vmatprep.subr.bf16.mxu0 0
        %2658 = vmatpush2.bf16.msra.mxu0 0
        %2659 = vmatprep.subr.bf16.mxu0 0
        %2660 = vmatpush2.bf16.msra.mxu0 0
        %2661 = vmatprep.subr.bf16.mxu0 0
        %2662 = vmatpush2.bf16.msra.mxu0 0
        %2663 = vmatprep.subr.bf16.mxu0 0
        %2664 = vmatpush2.bf16.msra.mxu0 0
        %2665 = vmatprep.subr.bf16.mxu0 0
        %2666 = vmatpush2.bf16.msra.mxu0 0
        %2667 = vmatprep.subr.bf16.mxu0 0
        %2668 = vmatpush2.bf16.msra.mxu0 0
        %2669 = vmatprep.mubr.bf16.mxu0 0
        %2670 = vmatmul.mubr.bf16.gmra.mxu0 %v2635
        %v2671 = vpop.f32.mrf.mxu0
        %v2672 = vadd.f32 %v2621, %v2671
        %v2673 = vpop.f32.mrf.mxu0
        %v2674 = vpop.f32.mrf.mxu0
        %v2675 = vpop.f32.mrf.mxu0
        %2676 = vdwg.mxu0
        %2677 = vst [vmem:[%s630] sm:$0x1] %v2672
        %s2678 = sand.u32 %s472, 1
        %s2679 = scalar_lea.sflag [#allocation3], %s2678
        %s2680 = sand.u32 %s472, 1
        %s2681 = scalar_lea.vmem [#allocation2], %s2680
        // Predicated region
        $region101: #{tpu_custom_call.1} parent=99 // pred_check
          %p2682 = pneg %p482
        $region102: #{tpu_custom_call.1} parent=99 // pred_check_branch
          %2684 = sbr.rel (%p2682) target = $region104
        $region103: #{tpu_custom_call.1} parent=99 // pred_region
          %s2686 = ssub.s32 16, 16
          %2687 = vsyncadd %s2679, %s2686
          %s2688 = smul.addr %s34, 16
          %s2689 = scalar_lea.hbm %s20, %s2688
          %s2691 = sshll.u32 %s2681, 4
          %s2692 = int_to_ptr.vmem [resolvable:$true] %s2691
          %2694 = dma.vmem_to_hbm [thread:$0]  %s2692, 16, %s2689, %s2679
        $region104: #{tpu_custom_call.1} parent=99 // pred_fallthru
          _
      $region100: #{tpu_custom_call.1} parent=5 // pred_fallthru
        _
      %p2695 = scmp.le.s32.totalorder 2, %s29
      // Predicated region
      $region105: #{tpu_custom_call.1} parent=5 // pred_check
        %p2696 = pneg %p2695
      $region106: #{tpu_custom_call.1} parent=5 // pred_check_branch
        %2698 = sbr.rel (%p2696) target = $region108
      $region107: #{tpu_custom_call.1} parent=5 // pred_region
        %s2699 = ssub.s32 %s29, 2
        // Predicated region
        $region109: #{tpu_custom_call.1} parent=107 // pred_check
          %p2700 = pneg %p488
        $region110: #{tpu_custom_call.1} parent=107 // pred_check_branch
          %2702 = sbr.rel (%p2700) target = $region112
        $region111: #{tpu_custom_call.1} parent=107 // pred_region
          %s2703 = sand.u32 %s473, 1
          %s2704 = scalar_lea.sflag [#allocation3], %s2703
          %s2705 = sand.u32 %s473, 1
          %s2706 = scalar_lea.vmem [#allocation2], %s2705
          %2707 = dma.done %s2704, 16
        $region112: #{tpu_custom_call.1} parent=107 // pred_fallthru
          _
      $region108: #{tpu_custom_call.1} parent=5 // pred_fallthru
        _
    $region6: #{tpu_custom_call.1} parent=1 // loop_footer
      %s33 = sadd.s32 1, %s29
    $region7: #{tpu_custom_call.1} parent=1 // loop_footer_branch
      %28 = sbr.rel target = $region3
    $region8: #{tpu_custom_call.1} parent=1 // loop_exit
      _
    %2708 = vsyncpa [#allocation3], 1
    %s2709 = scalar_lea.sflag [#allocation3], 1
    %2710 = vsyncpa %s2709, 1

</llo_original>
